<compile_context>
chip_gen: v7x
topology: tpu7x:2x2x1
jax: 0.10.0
libtpu: 0.0.40
codegen_flags: <defaults>
</compile_context>

<pallas_src>
import functools

import jax
import jax.numpy as jnp
from jax import lax
from jax.experimental import pallas as pl
from jax.experimental.pallas import tpu as pltpu


def _round_up(x, m):
    return ((x + m - 1) // m) * m


def _conv3x3_from_pad(pad_ref, w_ref, b_ref, *, H, W, relu_input):
    """3x3 'same' conv reading a zero-halo'd (H+2, W+2, C) VMEM scratch.

    w_ref: (9*C, Cout) with row index (dy*3 + dx)*C + cin.
    Returns f32 (H*W, Cout).
    """
    C = pad_ref.shape[-1]
    Cout = w_ref.shape[-1]
    acc = jnp.zeros((H * W, Cout), jnp.float32)
    for dy in range(3):
        rows = pad_ref[dy:dy + H]                       # (H, W+2, C)
        if relu_input:
            rows = jnp.maximum(rows, 0.0)               # relu(0)=0 -> halo unaffected
        # per-dy im2col: concat the 3 dx-shifted windows along lanes -> K = 3*C
        cols = [rows[:, dx:dx + W, :].reshape(H * W, C) for dx in range(3)]
        patch = jnp.concatenate(cols, axis=1)           # (H*W, 3*C)
        wslab = w_ref[dy * 3 * C:(dy + 1) * 3 * C, :]   # (3*C, Cout), aligned slice
        acc = acc + jnp.dot(patch, wslab, preferred_element_type=jnp.float32)
    return acc + b_ref[0][None, :]


def _resblock_kernel(*refs, H, W, has_downsample):
    if has_downsample:
        (x_ref, w1_ref, b1_ref, w2_ref, b2_ref, wd_ref, bd_ref,
         o_ref, xpad_ref, rpad_ref) = refs
    else:
        (x_ref, w1_ref, b1_ref, w2_ref, b2_ref,
         o_ref, xpad_ref, rpad_ref) = refs
        wd_ref = bd_ref = None

    Cout_p = o_ref.shape[-1]

    # ---- zero-halo the input inside VMEM (no HBM-side spatial pad) ----
    xpad_ref[...] = jnp.zeros_like(xpad_ref)
    xpad_ref[1:H + 1, 1:W + 1, :] = x_ref[0].astype(jnp.float32)

    # ---- r = conv1(relu(x)) ----
    r = _conv3x3_from_pad(xpad_ref, w1_ref, b1_ref, H=H, W=W, relu_input=True)

    # ---- zero-halo relu(r) for conv2 ----
    rpad_ref[...] = jnp.zeros_like(rpad_ref)
    rpad_ref[1:H + 1, 1:W + 1, :] = jnp.maximum(r, 0.0).reshape(H, W, Cout_p)

    # ---- conv2(relu(r)) ----
    r2 = _conv3x3_from_pad(rpad_ref, w2_ref, b2_ref, H=H, W=W, relu_input=False)

    # ---- residual branch ----
    if has_downsample:
        res = _conv3x3_from_pad(xpad_ref, wd_ref, bd_ref, H=H, W=W,
                                relu_input=False)
    else:
        # indim == outdim -> identity skip (padded channels are zero on both sides)
        res = xpad_ref[1:H + 1, 1:W + 1, :].reshape(H * W, Cout_p)

    out = res + r2
    o_ref[0] = out.reshape(H, W, Cout_p).astype(o_ref.dtype)


class ResBlockPallas:
    """Mirrors model/modules.py::ResBlock.forward (PyTorch), fused in one kernel."""

    LANE = 128

    def __init__(self, indim, outdim=None, key=None):
        if outdim is None:
            outdim = indim
        self.indim, self.outdim = indim, outdim
        self.cin_p = _round_up(indim, self.LANE)
        self.cout_p = _round_up(outdim, self.LANE)
        key = key if key is not None else jax.random.PRNGKey(0)
        ks = jax.random.split(key, 6)

        def init_conv(kw, kb, cin, cout, cin_p, cout_p):
            # deterministic small-scale init; reference copy kept as (3,3,cin,cout) HWIO
            w = jax.random.normal(kw, (3, 3, cin, cout), jnp.float32) * 0.1
            b = jax.random.normal(kb, (cout,), jnp.float32) * 0.1
            wp = jnp.zeros((3, 3, cin_p, cout_p), jnp.float32)
            wp = wp.at[:, :, :cin, :cout].set(w)
            bp = jnp.zeros((1, cout_p), jnp.float32).at[0, :cout].set(b)
            # kernel layout: row index = (dy*3 + dx)*cin_p + cin
            return w, b, wp.reshape(9 * cin_p, cout_p), bp

        self.w1, self.b1, self.w1p, self.b1p = init_conv(
            ks[0], ks[1], indim, outdim, self.cin_p, self.cout_p)
        self.w2, self.b2, self.w2p, self.b2p = init_conv(
            ks[2], ks[3], outdim, outdim, self.cout_p, self.cout_p)
        if indim != outdim:
            self.wd, self.bd, self.wdp, self.bdp = init_conv(
                ks[4], ks[5], indim, outdim, self.cin_p, self.cout_p)
        else:
            self.wd = self.bd = self.wdp = self.bdp = None

    def __call__(self, x_nchw):
        # NCHW (PyTorch) -> NHWC (kernel layout, channels on the lane axis)
        x = jnp.transpose(x_nchw, (0, 2, 3, 1))
        N, H, W, Cin = x.shape
        cin_p, cout_p = self.cin_p, self.cout_p
        has_ds = self.wdp is not None

        # lane-dense channel padding (zeros); padded lanes are sliced off afterwards
        if cin_p != Cin:
            x = jnp.pad(x, ((0, 0), (0, 0), (0, 0), (0, cin_p - Cin)))

        args = [x, self.w1p, self.b1p, self.w2p, self.b2p]
        in_specs = [
            pl.BlockSpec((1, H, W, cin_p), lambda n: (n, 0, 0, 0)),
            pl.BlockSpec((9 * cin_p, cout_p), lambda n: (0, 0)),
            pl.BlockSpec((1, cout_p), lambda n: (0, 0)),
            pl.BlockSpec((9 * cout_p, cout_p), lambda n: (0, 0)),
            pl.BlockSpec((1, cout_p), lambda n: (0, 0)),
        ]
        if has_ds:
            args += [self.wdp, self.bdp]
            in_specs += [
                pl.BlockSpec((9 * cin_p, cout_p), lambda n: (0, 0)),
                pl.BlockSpec((1, cout_p), lambda n: (0, 0)),
            ]

        kernel = functools.partial(_resblock_kernel, H=H, W=W,
                                   has_downsample=has_ds)

        # explicit VMEM budget from the tile math (f32 everywhere)
        est_bytes = 4 * (
            2 * H * W * cin_p + 2 * H * W * cout_p                 # dbl-buffered in/out blocks
            + (H + 2) * (W + 2) * (cin_p + cout_p)                 # halo scratches
            + 9 * cin_p * cout_p + 9 * cout_p * cout_p             # weights
            + (9 * cin_p * cout_p if has_ds else 0)
            + 8 * H * W * cout_p                                   # live temporaries headroom
        )
        vmem_limit = int(min(max(2 * est_bytes, 16 * 1024 * 1024),
                             60 * 1024 * 1024))

        out = pl.pallas_call(
            kernel,
            out_shape=jax.ShapeDtypeStruct((N, H, W, cout_p), x.dtype),
            grid=(N,),
            in_specs=in_specs,
            out_specs=pl.BlockSpec((1, H, W, cout_p), lambda n: (n, 0, 0, 0)),
            scratch_shapes=[
                pltpu.VMEM((H + 2, W + 2, cin_p), jnp.float32),   # x with zero halo
                pltpu.VMEM((H + 2, W + 2, cout_p), jnp.float32),  # relu(r) with zero halo
            ],
            compiler_params=pltpu.CompilerParams(
                dimension_semantics=("parallel",),
                vmem_limit_bytes=vmem_limit),
        )(*args)

        # slice off padded output lanes, NHWC -> NCHW
        out = out[..., :self.outdim]
        return jnp.transpose(out, (0, 3, 1, 2))


# ---------------------------------------------------------------------------
# Pure-JAX reference (correctness check only)
# ---------------------------------------------------------------------------
def _ref_conv3x3(x_nhwc, w_hwio, b):
    y = lax.conv_general_dilated(
        x_nhwc, w_hwio, window_strides=(1, 1), padding="SAME",
        dimension_numbers=("NHWC", "HWIO", "NHWC"))
    return y + b[None, None, None, :]


def _ref_resblock(block, x_nchw):
    x = jnp.transpose(x_nchw, (0, 2, 3, 1))
    r = _ref_conv3x3(jnp.maximum(x, 0.0), block.w1, block.b1)
    r = _ref_conv3x3(jnp.maximum(r, 0.0), block.w2, block.b2)
    if block.wd is not None:
        x = _ref_conv3x3(x, block.wd, block.bd)
    return jnp.transpose(x + r, (0, 3, 1, 2))


if __name__ == "__main__":
    key = jax.random.PRNGKey(0)
    kx, kp1, kp2 = jax.random.split(key, 3)

    # Case 1: indim == outdim (downsample is None -> identity skip)
    x = jax.random.normal(kx, (2, 4, 16, 16), jnp.float32)  # NCHW, like PyTorch
    blk = ResBlockPallas(indim=4, outdim=4, key=kp1)
    y = jax.block_until_ready(blk(x))
    y_ref = _ref_resblock(blk, x)
    assert y.shape == (2, 4, 16, 16)
    assert jnp.allclose(y, y_ref, atol=1e-3, rtol=1e-3)

    # Case 2: indim != outdim (exercises the downsample conv branch)
    blk2 = ResBlockPallas(indim=4, outdim=8, key=kp2)
    y2 = jax.block_until_ready(blk2(x))
    y2_ref = _ref_resblock(blk2, x)
    assert y2.shape == (2, 8, 16, 16)
    assert jnp.allclose(y2, y2_ref, atol=1e-3, rtol=1e-3)

    print("KERNEL_OK")
</pallas_src>

<mosaic_0001>
module attributes {stable_mosaic.version = 11 : i64} {
  func.func @_resblock_kernel(%arg0: i32, %arg1: memref<1x16x16x128xf32, #tpu.memory_space<vmem>>, %arg2: memref<1152x128xf32, #tpu.memory_space<vmem>>, %arg3: memref<1x128xf32, #tpu.memory_space<vmem>>, %arg4: memref<1152x128xf32, #tpu.memory_space<vmem>>, %arg5: memref<1x128xf32, #tpu.memory_space<vmem>>, %arg6: memref<1x16x16x128xf32, #tpu.memory_space<vmem>>, %arg7: memref<18x18x128xf32, #tpu.memory_space<vmem>>, %arg8: memref<18x18x128xf32, #tpu.memory_space<vmem>>) attributes {dimension_semantics = [#tpu.dimension_semantics<parallel>], iteration_bounds = array<i64: 2>, scalar_prefetch = 0 : i64, scratch_operands = 2 : i64, tpu.core_type = #tpu.core_type<tc>, window_params = [{transform_indices = @transform_0, window_bounds = array<i64: 1, 16, 16, 128>}, {pipeline_mode = #tpu.pipeline_mode<synchronous>, transform_indices = @transform_1, window_bounds = array<i64: 1152, 128>}, {pipeline_mode = #tpu.pipeline_mode<synchronous>, transform_indices = @transform_2, window_bounds = array<i64: 1, 128>}, {pipeline_mode = #tpu.pipeline_mode<synchronous>, transform_indices = @transform_3, window_bounds = array<i64: 1152, 128>}, {pipeline_mode = #tpu.pipeline_mode<synchronous>, transform_indices = @transform_4, window_bounds = array<i64: 1, 128>}, {transform_indices = @transform_5, window_bounds = array<i64: 1, 16, 16, 128>}]} {
    %cst = arith.constant 0.000000e+00 : f32
    %0 = vector.broadcast %cst : f32 to vector<18x18x128xf32>
    %c0 = arith.constant 0 : index
    %c0_0 = arith.constant 0 : index
    %c0_1 = arith.constant 0 : index
    %1 = vector.load %arg7[%c0, %c0_0, %c0_1] : memref<18x18x128xf32, #tpu.memory_space<vmem>>, vector<18x18x128xf32>
    tpu.vector_store %arg7[%c0, %c0_0, %c0_1], %0 {strides = array<i32>} : memref<18x18x128xf32, #tpu.memory_space<vmem>>, vector<18x18x128xf32>,
    %c0_2 = arith.constant 0 : index
    %c0_3 = arith.constant 0 : index
    %c0_4 = arith.constant 0 : index
    %c0_5 = arith.constant 0 : index
    %2 = vector.load %arg1[%c0_2, %c0_3, %c0_4, %c0_5] : memref<1x16x16x128xf32, #tpu.memory_space<vmem>>, vector<1x16x16x128xf32>
    %3 = vector.shape_cast %2 : vector<1x16x16x128xf32> to vector<16x16x128xf32>
    %c1 = arith.constant 1 : index
    %c1_6 = arith.constant 1 : index
    %c0_7 = arith.constant 0 : index
    %4 = vector.load %arg7[%c1, %c1_6, %c0_7] : memref<18x18x128xf32, #tpu.memory_space<vmem>>, vector<16x16x128xf32>
    tpu.vector_store %arg7[%c1, %c1_6, %c0_7], %3 {strides = array<i32>} : memref<18x18x128xf32, #tpu.memory_space<vmem>>, vector<16x16x128xf32>,
    %cst_8 = arith.constant 0.000000e+00 : f32
    %5 = vector.broadcast %cst_8 : f32 to vector<256x128xf32>
    %c0_9 = arith.constant 0 : index
    %c0_10 = arith.constant 0 : index
    %c0_11 = arith.constant 0 : index
    %6 = vector.load %arg7[%c0_9, %c0_10, %c0_11] : memref<18x18x128xf32, #tpu.memory_space<vmem>>, vector<16x18x128xf32>
    %cst_12 = arith.constant 0.000000e+00 : f32
    %7 = vector.broadcast %cst_12 : f32 to vector<16x18x128xf32>
    %8 = arith.maximumf %6, %7 : vector<16x18x128xf32>
    %9 = vector.extract_strided_slice %8 {offsets = [0, 0, 0], sizes = [16, 16, 128], strides = [1, 1, 1]} : vector<16x18x128xf32> to vector<16x16x128xf32>
    %10 = vector.shape_cast %9 : vector<16x16x128xf32> to vector<256x128xf32>
    %11 = vector.extract_strided_slice %8 {offsets = [0, 1, 0], sizes = [16, 16, 128], strides = [1, 1, 1]} : vector<16x18x128xf32> to vector<16x16x128xf32>
    %12 = vector.shape_cast %11 : vector<16x16x128xf32> to vector<256x128xf32>
    %13 = vector.extract_strided_slice %8 {offsets = [0, 2, 0], sizes = [16, 16, 128], strides = [1, 1, 1]} : vector<16x18x128xf32> to vector<16x16x128xf32>
    %14 = vector.shape_cast %13 : vector<16x16x128xf32> to vector<256x128xf32>
    %15 = tpu.concatenate %10, %12, %14 in 1 : vector<256x128xf32>, vector<256x128xf32>, vector<256x128xf32> -> vector<256x384xf32>
    %c0_13 = arith.constant 0 : index
    %c0_14 = arith.constant 0 : index
    %16 = vector.load %arg2[%c0_13, %c0_14] : memref<1152x128xf32, #tpu.memory_space<vmem>>, vector<384x128xf32>
    %cst_15 = arith.constant dense<0.000000e+00> : vector<256x128xf32>
    %17 = tpu.matmul %15, %16, %cst_15 {dimension_numbers = #tpu.dot_dimension_numbers<[1], [0], [0], [1], [0, 0, 1, 1], [], []>} : vector<256x384xf32>, vector<384x128xf32>, vector<256x128xf32> -> vector<256x128xf32>
    %18 = arith.addf %5, %17 : vector<256x128xf32>
    %c1_16 = arith.constant 1 : index
    %c0_17 = arith.constant 0 : index
    %c0_18 = arith.constant 0 : index
    %19 = vector.load %arg7[%c1_16, %c0_17, %c0_18] : memref<18x18x128xf32, #tpu.memory_space<vmem>>, vector<16x18x128xf32>
    %cst_19 = arith.constant 0.000000e+00 : f32
    %20 = vector.broadcast %cst_19 : f32 to vector<16x18x128xf32>
    %21 = arith.maximumf %19, %20 : vector<16x18x128xf32>
    %22 = vector.extract_strided_slice %21 {offsets = [0, 0, 0], sizes = [16, 16, 128], strides = [1, 1, 1]} : vector<16x18x128xf32> to vector<16x16x128xf32>
    %23 = vector.shape_cast %22 : vector<16x16x128xf32> to vector<256x128xf32>
    %24 = vector.extract_strided_slice %21 {offsets = [0, 1, 0], sizes = [16, 16, 128], strides = [1, 1, 1]} : vector<16x18x128xf32> to vector<16x16x128xf32>
    %25 = vector.shape_cast %24 : vector<16x16x128xf32> to vector<256x128xf32>
    %26 = vector.extract_strided_slice %21 {offsets = [0, 2, 0], sizes = [16, 16, 128], strides = [1, 1, 1]} : vector<16x18x128xf32> to vector<16x16x128xf32>
    %27 = vector.shape_cast %26 : vector<16x16x128xf32> to vector<256x128xf32>
    %28 = tpu.concatenate %23, %25, %27 in 1 : vector<256x128xf32>, vector<256x128xf32>, vector<256x128xf32> -> vector<256x384xf32>
    %c384 = arith.constant 384 : index
    %c0_20 = arith.constant 0 : index
    %29 = vector.load %arg2[%c384, %c0_20] : memref<1152x128xf32, #tpu.memory_space<vmem>>, vector<384x128xf32>
    %cst_21 = arith.constant dense<0.000000e+00> : vector<256x128xf32>
    %30 = tpu.matmul %28, %29, %cst_21 {dimension_numbers = #tpu.dot_dimension_numbers<[1], [0], [0], [1], [0, 0, 1, 1], [], []>} : vector<256x384xf32>, vector<384x128xf32>, vector<256x128xf32> -> vector<256x128xf32>
    %31 = arith.addf %18, %30 : vector<256x128xf32>
    %c2 = arith.constant 2 : index
    %c0_22 = arith.constant 0 : index
    %c0_23 = arith.constant 0 : index
    %32 = vector.load %arg7[%c2, %c0_22, %c0_23] : memref<18x18x128xf32, #tpu.memory_space<vmem>>, vector<16x18x128xf32>
    %cst_24 = arith.constant 0.000000e+00 : f32
    %33 = vector.broadcast %cst_24 : f32 to vector<16x18x128xf32>
    %34 = arith.maximumf %32, %33 : vector<16x18x128xf32>
    %35 = vector.extract_strided_slice %34 {offsets = [0, 0, 0], sizes = [16, 16, 128], strides = [1, 1, 1]} : vector<16x18x128xf32> to vector<16x16x128xf32>
    %36 = vector.shape_cast %35 : vector<16x16x128xf32> to vector<256x128xf32>
    %37 = vector.extract_strided_slice %34 {offsets = [0, 1, 0], sizes = [16, 16, 128], strides = [1, 1, 1]} : vector<16x18x128xf32> to vector<16x16x128xf32>
    %38 = vector.shape_cast %37 : vector<16x16x128xf32> to vector<256x128xf32>
    %39 = vector.extract_strided_slice %34 {offsets = [0, 2, 0], sizes = [16, 16, 128], strides = [1, 1, 1]} : vector<16x18x128xf32> to vector<16x16x128xf32>
    %40 = vector.shape_cast %39 : vector<16x16x128xf32> to vector<256x128xf32>
    %41 = tpu.concatenate %36, %38, %40 in 1 : vector<256x128xf32>, vector<256x128xf32>, vector<256x128xf32> -> vector<256x384xf32>
    %c768 = arith.constant 768 : index
    %c0_25 = arith.constant 0 : index
    %42 = vector.load %arg2[%c768, %c0_25] : memref<1152x128xf32, #tpu.memory_space<vmem>>, vector<384x128xf32>
    %cst_26 = arith.constant dense<0.000000e+00> : vector<256x128xf32>
    %43 = tpu.matmul %41, %42, %cst_26 {dimension_numbers = #tpu.dot_dimension_numbers<[1], [0], [0], [1], [0, 0, 1, 1], [], []>} : vector<256x384xf32>, vector<384x128xf32>, vector<256x128xf32> -> vector<256x128xf32>
    %44 = arith.addf %31, %43 : vector<256x128xf32>
    %c0_27 = arith.constant 0 : index
    %c0_28 = arith.constant 0 : index
    %45 = vector.load %arg3[%c0_27, %c0_28] : memref<1x128xf32, #tpu.memory_space<vmem>>, vector<1x128xf32>
    %46 = vector.shape_cast %45 : vector<1x128xf32> to vector<128xf32>
    %47 = vector.shape_cast %46 : vector<128xf32> to vector<1x128xf32>
    %48 = vector.broadcast %47 : vector<1x128xf32> to vector<256x128xf32>
    %49 = arith.addf %44, %48 : vector<256x128xf32>
    %cst_29 = arith.constant 0.000000e+00 : f32
    %50 = vector.broadcast %cst_29 : f32 to vector<18x18x128xf32>
    %c0_30 = arith.constant 0 : index
    %c0_31 = arith.constant 0 : index
    %c0_32 = arith.constant 0 : index
    %51 = vector.load %arg8[%c0_30, %c0_31, %c0_32] : memref<18x18x128xf32, #tpu.memory_space<vmem>>, vector<18x18x128xf32>
    tpu.vector_store %arg8[%c0_30, %c0_31, %c0_32], %50 {strides = array<i32>} : memref<18x18x128xf32, #tpu.memory_space<vmem>>, vector<18x18x128xf32>,
    %cst_33 = arith.constant 0.000000e+00 : f32
    %52 = vector.broadcast %cst_33 : f32 to vector<256x128xf32>
    %53 = arith.maximumf %49, %52 : vector<256x128xf32>
    %54 = vector.shape_cast %53 : vector<256x128xf32> to vector<16x16x128xf32>
    %c1_34 = arith.constant 1 : index
    %c1_35 = arith.constant 1 : index
    %c0_36 = arith.constant 0 : index
    %55 = vector.load %arg8[%c1_34, %c1_35, %c0_36] : memref<18x18x128xf32, #tpu.memory_space<vmem>>, vector<16x16x128xf32>
    tpu.vector_store %arg8[%c1_34, %c1_35, %c0_36], %54 {strides = array<i32>} : memref<18x18x128xf32, #tpu.memory_space<vmem>>, vector<16x16x128xf32>,
    %cst_37 = arith.constant 0.000000e+00 : f32
    %56 = vector.broadcast %cst_37 : f32 to vector<256x128xf32>
    %c0_38 = arith.constant 0 : index
    %c0_39 = arith.constant 0 : index
    %c0_40 = arith.constant 0 : index
    %57 = vector.load %arg8[%c0_38, %c0_39, %c0_40] : memref<18x18x128xf32, #tpu.memory_space<vmem>>, vector<16x18x128xf32>
    %58 = vector.extract_strided_slice %57 {offsets = [0, 0, 0], sizes = [16, 16, 128], strides = [1, 1, 1]} : vector<16x18x128xf32> to vector<16x16x128xf32>
    %59 = vector.shape_cast %58 : vector<16x16x128xf32> to vector<256x128xf32>
    %60 = vector.extract_strided_slice %57 {offsets = [0, 1, 0], sizes = [16, 16, 128], strides = [1, 1, 1]} : vector<16x18x128xf32> to vector<16x16x128xf32>
    %61 = vector.shape_cast %60 : vector<16x16x128xf32> to vector<256x128xf32>
    %62 = vector.extract_strided_slice %57 {offsets = [0, 2, 0], sizes = [16, 16, 128], strides = [1, 1, 1]} : vector<16x18x128xf32> to vector<16x16x128xf32>
    %63 = vector.shape_cast %62 : vector<16x16x128xf32> to vector<256x128xf32>
    %64 = tpu.concatenate %59, %61, %63 in 1 : vector<256x128xf32>, vector<256x128xf32>, vector<256x128xf32> -> vector<256x384xf32>
    %c0_41 = arith.constant 0 : index
    %c0_42 = arith.constant 0 : index
    %65 = vector.load %arg4[%c0_41, %c0_42] : memref<1152x128xf32, #tpu.memory_space<vmem>>, vector<384x128xf32>
    %cst_43 = arith.constant dense<0.000000e+00> : vector<256x128xf32>
    %66 = tpu.matmul %64, %65, %cst_43 {dimension_numbers = #tpu.dot_dimension_numbers<[1], [0], [0], [1], [0, 0, 1, 1], [], []>} : vector<256x384xf32>, vector<384x128xf32>, vector<256x128xf32> -> vector<256x128xf32>
    %67 = arith.addf %56, %66 : vector<256x128xf32>
    %c1_44 = arith.constant 1 : index
    %c0_45 = arith.constant 0 : index
    %c0_46 = arith.constant 0 : index
    %68 = vector.load %arg8[%c1_44, %c0_45, %c0_46] : memref<18x18x128xf32, #tpu.memory_space<vmem>>, vector<16x18x128xf32>
    %69 = vector.extract_strided_slice %68 {offsets = [0, 0, 0], sizes = [16, 16, 128], strides = [1, 1, 1]} : vector<16x18x128xf32> to vector<16x16x128xf32>
    %70 = vector.shape_cast %69 : vector<16x16x128xf32> to vector<256x128xf32>
    %71 = vector.extract_strided_slice %68 {offsets = [0, 1, 0], sizes = [16, 16, 128], strides = [1, 1, 1]} : vector<16x18x128xf32> to vector<16x16x128xf32>
    %72 = vector.shape_cast %71 : vector<16x16x128xf32> to vector<256x128xf32>
    %73 = vector.extract_strided_slice %68 {offsets = [0, 2, 0], sizes = [16, 16, 128], strides = [1, 1, 1]} : vector<16x18x128xf32> to vector<16x16x128xf32>
    %74 = vector.shape_cast %73 : vector<16x16x128xf32> to vector<256x128xf32>
    %75 = tpu.concatenate %70, %72, %74 in 1 : vector<256x128xf32>, vector<256x128xf32>, vector<256x128xf32> -> vector<256x384xf32>
    %c384_47 = arith.constant 384 : index
    %c0_48 = arith.constant 0 : index
    %76 = vector.load %arg4[%c384_47, %c0_48] : memref<1152x128xf32, #tpu.memory_space<vmem>>, vector<384x128xf32>
    %cst_49 = arith.constant dense<0.000000e+00> : vector<256x128xf32>
    %77 = tpu.matmul %75, %76, %cst_49 {dimension_numbers = #tpu.dot_dimension_numbers<[1], [0], [0], [1], [0, 0, 1, 1], [], []>} : vector<256x384xf32>, vector<384x128xf32>, vector<256x128xf32> -> vector<256x128xf32>
    %78 = arith.addf %67, %77 : vector<256x128xf32>
    %c2_50 = arith.constant 2 : index
    %c0_51 = arith.constant 0 : index
    %c0_52 = arith.constant 0 : index
    %79 = vector.load %arg8[%c2_50, %c0_51, %c0_52] : memref<18x18x128xf32, #tpu.memory_space<vmem>>, vector<16x18x128xf32>
    %80 = vector.extract_strided_slice %79 {offsets = [0, 0, 0], sizes = [16, 16, 128], strides = [1, 1, 1]} : vector<16x18x128xf32> to vector<16x16x128xf32>
    %81 = vector.shape_cast %80 : vector<16x16x128xf32> to vector<256x128xf32>
    %82 = vector.extract_strided_slice %79 {offsets = [0, 1, 0], sizes = [16, 16, 128], strides = [1, 1, 1]} : vector<16x18x128xf32> to vector<16x16x128xf32>
    %83 = vector.shape_cast %82 : vector<16x16x128xf32> to vector<256x128xf32>
    %84 = vector.extract_strided_slice %79 {offsets = [0, 2, 0], sizes = [16, 16, 128], strides = [1, 1, 1]} : vector<16x18x128xf32> to vector<16x16x128xf32>
    %85 = vector.shape_cast %84 : vector<16x16x128xf32> to vector<256x128xf32>
    %86 = tpu.concatenate %81, %83, %85 in 1 : vector<256x128xf32>, vector<256x128xf32>, vector<256x128xf32> -> vector<256x384xf32>
    %c768_53 = arith.constant 768 : index
    %c0_54 = arith.constant 0 : index
    %87 = vector.load %arg4[%c768_53, %c0_54] : memref<1152x128xf32, #tpu.memory_space<vmem>>, vector<384x128xf32>
    %cst_55 = arith.constant dense<0.000000e+00> : vector<256x128xf32>
    %88 = tpu.matmul %86, %87, %cst_55 {dimension_numbers = #tpu.dot_dimension_numbers<[1], [0], [0], [1], [0, 0, 1, 1], [], []>} : vector<256x384xf32>, vector<384x128xf32>, vector<256x128xf32> -> vector<256x128xf32>
    %89 = arith.addf %78, %88 : vector<256x128xf32>
    %c0_56 = arith.constant 0 : index
    %c0_57 = arith.constant 0 : index
    %90 = vector.load %arg5[%c0_56, %c0_57] : memref<1x128xf32, #tpu.memory_space<vmem>>, vector<1x128xf32>
    %91 = vector.shape_cast %90 : vector<1x128xf32> to vector<128xf32>
    %92 = vector.shape_cast %91 : vector<128xf32> to vector<1x128xf32>
    %93 = vector.broadcast %92 : vector<1x128xf32> to vector<256x128xf32>
    %94 = arith.addf %89, %93 : vector<256x128xf32>
    %c1_58 = arith.constant 1 : index
    %c1_59 = arith.constant 1 : index
    %c0_60 = arith.constant 0 : index
    %95 = vector.load %arg7[%c1_58, %c1_59, %c0_60] : memref<18x18x128xf32, #tpu.memory_space<vmem>>, vector<16x16x128xf32>
    %96 = vector.shape_cast %95 : vector<16x16x128xf32> to vector<256x128xf32>
    %97 = arith.addf %96, %94 : vector<256x128xf32>
    %98 = vector.shape_cast %97 : vector<256x128xf32> to vector<16x16x128xf32>
    %c0_61 = arith.constant 0 : index
    %c0_62 = arith.constant 0 : index
    %c0_63 = arith.constant 0 : index
    %c0_64 = arith.constant 0 : index
    %99 = vector.load %arg6[%c0_61, %c0_62, %c0_63, %c0_64] : memref<1x16x16x128xf32, #tpu.memory_space<vmem>>, vector<1x16x16x128xf32>
    %100 = vector.shape_cast %99 : vector<1x16x16x128xf32> to vector<16x16x128xf32>
    %101 = vector.shape_cast %98 : vector<16x16x128xf32> to vector<1x16x16x128xf32>
    tpu.vector_store %arg6[%c0_61, %c0_62, %c0_63, %c0_64], %101 {strides = array<i32>} : memref<1x16x16x128xf32, #tpu.memory_space<vmem>>, vector<1x16x16x128xf32>,
    return
  }
  func.func @transform_0(%arg0: i32) -> (i32, i32, i32, i32) {
    %c0_i32 = arith.constant 0 : i32
    %c0_i32_0 = arith.constant 0 : i32
    %c0_i32_1 = arith.constant 0 : i32
    %c0_i32_2 = arith.constant 0 : i32
    return %arg0, %c0_i32, %c0_i32_0, %c0_i32_1 : i32, i32, i32, i32
  }
  func.func @transform_1(%arg0: i32) -> (i32, i32) {
    %c0_i32 = arith.constant 0 : i32
    %c0_i32_0 = arith.constant 0 : i32
    %c0_i32_1 = arith.constant 0 : i32
    return %c0_i32, %c0_i32_0 : i32, i32
  }
  func.func @transform_2(%arg0: i32) -> (i32, i32) {
    %c0_i32 = arith.constant 0 : i32
    %c0_i32_0 = arith.constant 0 : i32
    %c0_i32_1 = arith.constant 0 : i32
    return %c0_i32, %c0_i32_0 : i32, i32
  }
  func.func @transform_3(%arg0: i32) -> (i32, i32) {
    %c0_i32 = arith.constant 0 : i32
    %c0_i32_0 = arith.constant 0 : i32
    %c0_i32_1 = arith.constant 0 : i32
    return %c0_i32, %c0_i32_0 : i32, i32
  }
  func.func @transform_4(%arg0: i32) -> (i32, i32) {
    %c0_i32 = arith.constant 0 : i32
    %c0_i32_0 = arith.constant 0 : i32
    %c0_i32_1 = arith.constant 0 : i32
    return %c0_i32, %c0_i32_0 : i32, i32
  }
  func.func @transform_5(%arg0: i32) -> (i32, i32, i32, i32) {
    %c0_i32 = arith.constant 0 : i32
    %c0_i32_0 = arith.constant 0 : i32
    %c0_i32_1 = arith.constant 0 : i32
    %c0_i32_2 = arith.constant 0 : i32
    return %arg0, %c0_i32, %c0_i32_0, %c0_i32_1 : i32, i32, i32, i32
  }
}

</mosaic_0001>

<llo_original>
// kernel: tpu_custom_call.1
$region0: #{tpu_custom_call.1}
  #allocation0 [shape = 'u32[]', space=smem, size = 0x4, offset = 0x4, fixed_abs, tag = 'smem constant byte address 0x4 - core index']
  #allocation1 [shape = 'u32[144,128]{1,0:T(1,128)}', space=vmem, size = 0x12000, scoped, tag = 'internal scratch']
  #allocation2 [shape = 'f32[18,18,128]{2,1,0:T(8,128)}', space=vmem, size = 0x36000, scoped, tag = 'scratch operand']
  #allocation3 [shape = 'f32[18,18,128]{2,1,0:T(8,128)}', space=vmem, size = 0x36000, scoped, tag = 'scratch operand']
  %s0 = inlined_call_operand.hbm [shape: f32[2,16,16,128], index: 0, kind: input, shape index: {}]
  %s1 = inlined_call_operand.hbm [shape: f32[1152,128], index: 1, kind: input, shape index: {}]
  %s2 = inlined_call_operand.vmem [shape: f32[1,128], index: 2, kind: input, shape index: {}]
  %s3 = inlined_call_operand.hbm [shape: f32[1152,128], index: 3, kind: input, shape index: {}]
  %s4 = inlined_call_operand.vmem [shape: f32[1,128], index: 4, kind: input, shape index: {}]
  %s5 = inlined_call_operand.hbm [shape: f32[2,16,16,128], index: 5, kind: output, shape index: {}]
  %s6 = sld [smem:[#allocation0]]
  $region65: #{tpu_custom_call.1} parent=0
    _
  %s8 = ssub.s32 1, %s6
  %s9 = scalar_select 0, %s8, %s6
  $region1: #{tpu_custom_call.1} parent=0
    #allocation4 [shape = 'u8[262144]{0}', space=vmem, size = 0x40000, scoped, tag = 'input window, operand 0']
    #allocation5 [shape = 's32[2]{0}', space=sflag, size = 0x8, scoped, tag = 'scoped memory for tpu_custom_call.1']
    #allocation6 [shape = 's32[2]{0}', space=sflag, size = 0x8, scoped, tag = 'scoped memory for tpu_custom_call.1']
    #allocation7 [shape = 'u8[589824]{0}', space=vmem, size = 0x90000, scoped, tag = 'input window, operand 1, single buffered']
    #allocation8 [shape = 's32[1]{0}', space=sflag, size = 0x4, scoped, tag = 'scoped memory for tpu_custom_call.1']
    #allocation9 [shape = 'u8[589824]{0}', space=vmem, size = 0x90000, scoped, tag = 'input window, operand 3, single buffered']
    #allocation10 [shape = 'u8[262144]{0}', space=vmem, size = 0x40000, scoped, tag = 'output window, operand 0']
    %10 = vsyncpa [#allocation5], 0
    %s11 = scalar_lea.sflag [#allocation5], 1
    %12 = vsyncpa %s11, 0
    %13 = vsyncpa [#allocation8], 0
    %14 = vsyncpa [#allocation6], 0
    %s15 = scalar_lea.sflag [#allocation6], 1
    %16 = vsyncpa %s15, 0
    loop: start=0, step=1, limit=4
    $region2: #{tpu_custom_call.1} parent=1 // loop_pre_header
      _
    $region3: #{tpu_custom_call.1} parent=1 // loop_header
      %s18 = sphi 0, %s22
      %p19 = scmp.ge.s32.totalorder %s18, 4
      %s28 = sphi 0, %s30
      %s31 = sphi 0, %s28
      %s32 = sphi 0, %s31
      %s48 = sphi 0, %s32
      %s52 = sphi 0, %s52
      %s54 = sphi 0, %s52
      %s55 = sphi 0, %s54
      %s69 = sphi 0, %s55
      %s73 = sphi 0, %s73
      %s75 = sphi 0, %s73
      %s76 = sphi 0, %s75
      %s90 = sphi 0, %s76
      %s94 = sphi 0, %s94
      %s96 = sphi 0, %s94
      %s97 = sphi 0, %s96
      %s111 = sphi 0, %s97
      %s115 = sphi 0, %s115
      %s117 = sphi 0, %s115
      %s118 = sphi 0, %s117
      %s132 = sphi 0, %s118
      %s138 = sphi 0, %s140
      %s141 = sphi 0, %s138
      %s142 = sphi 0, %s141
      %s158 = sphi 0, %s142
    $region4: #{tpu_custom_call.1} parent=1 // loop_header_branch
      %21 = sbr.rel (%p19) target = $region8
    $region5: #{tpu_custom_call.1} parent=1 // loop_body
      %s23 = ssub.s32 %s18, 1
      %s24 = ssub.s32 %s18, 2
      %s25 = sadd.s32 %s18, 1
      %s26 = ssub.s32 %s18, %s25
      %p27 = scmp.eq.s32.totalorder %s26, 0
      %s29 = sadd.s32 %s28, 1
      %s30 = scalar_select %p27, %s28, %s29
      %p33 = pneg %p27
      %p34 = scmp.eq.s32.totalorder %s18, 1
      %p35 = por %p33, %p34
      %p36 = scmp.ne.s32.totalorder %s28, %s31
      %p37 = scmp.eq.s32.totalorder %s18, 0
      %p38 = por %p36, %p37
      %p39 = scmp.ne.s32.totalorder %s28, %s31
      %p40 = scmp.eq.s32.totalorder %s23, 1
      %p41 = por %p39, %p40
      %p42 = scmp.ne.s32.totalorder %s31, %s32
      %p43 = scmp.eq.s32.totalorder %s23, 0
      %p44 = por %p42, %p43
      %p45 = scmp.ne.s32.totalorder %s31, %s32
      %p46 = scmp.eq.s32.totalorder %s24, 1
      %p47 = por %p45, %p46
      %p49 = scmp.ne.s32.totalorder %s32, %s48
      %p50 = scmp.eq.s32.totalorder %s24, 0
      %p51 = por %p49, %p50
      %s53 = sadd.s32 %s52, 1
      %p56 = scmp.eq.s32.totalorder %s18, 1
      %p57 = scmp.ne.s32.totalorder %s52, %s54
      %p58 = scmp.eq.s32.totalorder %s18, 0
      %p59 = por %p57, %p58
      %p60 = scmp.ne.s32.totalorder %s52, %s54
      %p61 = scmp.eq.s32.totalorder %s23, 1
      %p62 = por %p60, %p61
      %p63 = scmp.ne.s32.totalorder %s54, %s55
      %p64 = scmp.eq.s32.totalorder %s23, 0
      %p65 = por %p63, %p64
      %p66 = scmp.ne.s32.totalorder %s54, %s55
      %p67 = scmp.eq.s32.totalorder %s24, 1
      %p68 = por %p66, %p67
      %p70 = scmp.ne.s32.totalorder %s55, %s69
      %p71 = scmp.eq.s32.totalorder %s24, 0
      %p72 = por %p70, %p71
      %s74 = sadd.s32 %s73, 1
      %p77 = scmp.eq.s32.totalorder %s18, 1
      %p78 = scmp.ne.s32.totalorder %s73, %s75
      %p79 = scmp.eq.s32.totalorder %s18, 0
      %p80 = por %p78, %p79
      %p81 = scmp.ne.s32.totalorder %s73, %s75
      %p82 = scmp.eq.s32.totalorder %s23, 1
      %p83 = por %p81, %p82
      %p84 = scmp.ne.s32.totalorder %s75, %s76
      %p85 = scmp.eq.s32.totalorder %s23, 0
      %p86 = por %p84, %p85
      %p87 = scmp.ne.s32.totalorder %s75, %s76
      %p88 = scmp.eq.s32.totalorder %s24, 1
      %p89 = por %p87, %p88
      %p91 = scmp.ne.s32.totalorder %s76, %s90
      %p92 = scmp.eq.s32.totalorder %s24, 0
      %p93 = por %p91, %p92
      %s95 = sadd.s32 %s94, 1
      %p98 = scmp.eq.s32.totalorder %s18, 1
      %p99 = scmp.ne.s32.totalorder %s94, %s96
      %p100 = scmp.eq.s32.totalorder %s18, 0
      %p101 = por %p99, %p100
      %p102 = scmp.ne.s32.totalorder %s94, %s96
      %p103 = scmp.eq.s32.totalorder %s23, 1
      %p104 = por %p102, %p103
      %p105 = scmp.ne.s32.totalorder %s96, %s97
      %p106 = scmp.eq.s32.totalorder %s23, 0
      %p107 = por %p105, %p106
      %p108 = scmp.ne.s32.totalorder %s96, %s97
      %p109 = scmp.eq.s32.totalorder %s24, 1
      %p110 = por %p108, %p109
      %p112 = scmp.ne.s32.totalorder %s97, %s111
      %p113 = scmp.eq.s32.totalorder %s24, 0
      %p114 = por %p112, %p113
      %s116 = sadd.s32 %s115, 1
      %p119 = scmp.eq.s32.totalorder %s18, 1
      %p120 = scmp.ne.s32.totalorder %s115, %s117
      %p121 = scmp.eq.s32.totalorder %s18, 0
      %p122 = por %p120, %p121
      %p123 = scmp.ne.s32.totalorder %s115, %s117
      %p124 = scmp.eq.s32.totalorder %s23, 1
      %p125 = por %p123, %p124
      %p126 = scmp.ne.s32.totalorder %s117, %s118
      %p127 = scmp.eq.s32.totalorder %s23, 0
      %p128 = por %p126, %p127
      %p129 = scmp.ne.s32.totalorder %s117, %s118
      %p130 = scmp.eq.s32.totalorder %s24, 1
      %p131 = por %p129, %p130
      %p133 = scmp.ne.s32.totalorder %s118, %s132
      %p134 = scmp.eq.s32.totalorder %s24, 0
      %p135 = por %p133, %p134
      %s136 = ssub.s32 %s18, %s25
      %p137 = scmp.eq.s32.totalorder %s136, 0
      %s139 = sadd.s32 %s138, 1
      %s140 = scalar_select %p137, %s138, %s139
      %p143 = pneg %p137
      %p144 = scmp.eq.s32.totalorder %s18, 1
      %p145 = por %p143, %p144
      %p146 = scmp.ne.s32.totalorder %s138, %s141
      %p147 = scmp.eq.s32.totalorder %s18, 0
      %p148 = por %p146, %p147
      %p149 = scmp.ne.s32.totalorder %s138, %s141
      %p150 = scmp.eq.s32.totalorder %s23, 1
      %p151 = por %p149, %p150
      %p152 = scmp.ne.s32.totalorder %s141, %s142
      %p153 = scmp.eq.s32.totalorder %s23, 0
      %p154 = por %p152, %p153
      %p155 = scmp.ne.s32.totalorder %s141, %s142
      %p156 = scmp.eq.s32.totalorder %s24, 1
      %p157 = por %p155, %p156
      %p159 = scmp.ne.s32.totalorder %s142, %s158
      %p160 = scmp.eq.s32.totalorder %s24, 0
      %p161 = por %p159, %p160
      %p162 = scmp.le.s32.totalorder 1, %s18
      %p163 = scmp.lt.s32.totalorder %s18, 3
      %p164 = pnand %p162, %p163
      %p165 = pneg %p164
      // Predicated region
      $region9: #{tpu_custom_call.1} parent=5 // pred_check
        _
      $region10: #{tpu_custom_call.1} parent=5 // pred_check_branch
        %167 = sbr.rel (%p164) target = $region12
      $region11: #{tpu_custom_call.1} parent=5 // pred_region
        %s168 = ssub.s32 %s18, 1
        // Predicated region
        $region13: #{tpu_custom_call.1} parent=11 // pred_check
          %p169 = pneg %p65
        $region14: #{tpu_custom_call.1} parent=11 // pred_check_branch
          %171 = sbr.rel (%p169) target = $region16
        $region15: #{tpu_custom_call.1} parent=11 // pred_region
          %s173 = ssub.s32 18432, 18432
          %174 = vsyncadd [#allocation8], %s173
          %s175 = sshll.u32 [#allocation7], 4
          %s176 = int_to_ptr.vmem [resolvable:$true] %s175
          %181 = dma.hbm_to_vmem [thread:$0]  %s1, 18432, %s176, [#allocation8], 128, 128, 8
        $region16: #{tpu_custom_call.1} parent=11 // pred_fallthru
          _
        // Predicated region
        $region17: #{tpu_custom_call.1} parent=11 // pred_check
          %p182 = pneg %p86
        $region18: #{tpu_custom_call.1} parent=11 // pred_check_branch
          %184 = sbr.rel (%p182) target = $region20
        $region19: #{tpu_custom_call.1} parent=11 // pred_region
          _
        $region20: #{tpu_custom_call.1} parent=11 // pred_fallthru
          _
        // Predicated region
        $region21: #{tpu_custom_call.1} parent=11 // pred_check
          %p185 = pneg %p107
        $region22: #{tpu_custom_call.1} parent=11 // pred_check_branch
          %187 = sbr.rel (%p185) target = $region24
        $region23: #{tpu_custom_call.1} parent=11 // pred_region
          %s189 = ssub.s32 18432, 18432
          %190 = vsyncadd [#allocation8], %s189
          %s191 = sshll.u32 [#allocation9], 4
          %s192 = int_to_ptr.vmem [resolvable:$true] %s191
          %197 = dma.hbm_to_vmem [thread:$0]  %s3, 18432, %s192, [#allocation8], 128, 128, 8
        $region24: #{tpu_custom_call.1} parent=11 // pred_fallthru
          _
        // Predicated region
        $region25: #{tpu_custom_call.1} parent=11 // pred_check
          %p198 = pneg %p128
        $region26: #{tpu_custom_call.1} parent=11 // pred_check_branch
          %200 = sbr.rel (%p198) target = $region28
        $region27: #{tpu_custom_call.1} parent=11 // pred_region
          _
        $region28: #{tpu_custom_call.1} parent=11 // pred_fallthru
          _
      $region12: #{tpu_custom_call.1} parent=5 // pred_fallthru
        _
      %p201 = scmp.lt.s32.totalorder %s18, 2
      // Predicated region
      $region29: #{tpu_custom_call.1} parent=5 // pred_check
        %p202 = pneg %p201
      $region30: #{tpu_custom_call.1} parent=5 // pred_check_branch
        %204 = sbr.rel (%p202) target = $region32
      $region31: #{tpu_custom_call.1} parent=5 // pred_region
        // Predicated region
        $region33: #{tpu_custom_call.1} parent=31 // pred_check
          %p205 = pneg %p38
        $region34: #{tpu_custom_call.1} parent=31 // pred_check_branch
          %207 = sbr.rel (%p205) target = $region36
        $region35: #{tpu_custom_call.1} parent=31 // pred_region
          %s208 = sand.u32 %s28, 1
          %s209 = scalar_lea.sflag [#allocation5], %s208
          %s210 = sand.u32 %s28, 1
          %s211 = smul.addr %s210, 256
          %s212 = scalar_lea.vmem [#allocation4], %s211
          %s214 = ssub.s32 4096, 4096
          %215 = vsyncadd %s209, %s214
          %s216 = smul.addr %s18, 32
          %s217 = smul.addr %s216, 128
          %s218 = scalar_lea.hbm %s0, %s217
          %s219 = sshll.u32 %s212, 4
          %s220 = int_to_ptr.vmem [resolvable:$true] %s219
          %225 = dma.hbm_to_vmem [thread:$0]  %s218, 4096, %s220, %s209, 128, 128, 8
        $region36: #{tpu_custom_call.1} parent=31 // pred_fallthru
          _
      $region32: #{tpu_custom_call.1} parent=5 // pred_fallthru
        _
      %p226 = scmp.le.s32.totalorder 1, %s18
      %p227 = scmp.lt.s32.totalorder %s18, 3
      %p228 = pnand %p226, %p227
      %p229 = pneg %p228
      // Predicated region
      $region37: #{tpu_custom_call.1} parent=5 // pred_check
        _
      $region38: #{tpu_custom_call.1} parent=5 // pred_check_branch
        %231 = sbr.rel (%p228) target = $region40
      $region39: #{tpu_custom_call.1} parent=5 // pred_region
        %s232 = ssub.s32 %s18, 1
        %s233 = sand.u32 %s31, 1
        %s234 = scalar_lea.sflag [#allocation5], %s233
        %s235 = sand.u32 %s31, 1
        %s236 = smul.addr %s235, 256
        %s237 = scalar_lea.vmem [#allocation4], %s236
        // Predicated region
        $region41: #{tpu_custom_call.1} parent=39 // pred_check
          %p238 = pneg %p44
        $region42: #{tpu_custom_call.1} parent=39 // pred_check_branch
          %240 = sbr.rel (%p238) target = $region44
        $region43: #{tpu_custom_call.1} parent=39 // pred_region
          %241 = dma.done %s234, 4096
        $region44: #{tpu_custom_call.1} parent=39 // pred_fallthru
          _
        // Predicated region
        $region45: #{tpu_custom_call.1} parent=39 // pred_check
          %p242 = pneg %p65
        $region46: #{tpu_custom_call.1} parent=39 // pred_check_branch
          %244 = sbr.rel (%p242) target = $region48
        $region47: #{tpu_custom_call.1} parent=39 // pred_region
          %245 = dma.done [#allocation8], 18432
        $region48: #{tpu_custom_call.1} parent=39 // pred_fallthru
          _
        // Predicated region
        $region49: #{tpu_custom_call.1} parent=39 // pred_check
          %p246 = pneg %p107
        $region50: #{tpu_custom_call.1} parent=39 // pred_check_branch
          %248 = sbr.rel (%p246) target = $region52
        $region51: #{tpu_custom_call.1} parent=39 // pred_region
          %249 = dma.done [#allocation8], 18432
        $region52: #{tpu_custom_call.1} parent=39 // pred_fallthru
          _
        %s250 = sand.u32 %s31, 1
        %s251 = scalar_lea.sflag [#allocation5], %s250
        %s252 = sand.u32 %s31, 1
        %s253 = smul.addr %s252, 256
        %s254 = scalar_lea.vmem [#allocation4], %s253
        %p255 = pneg %p44
        %p256 = pneg %p41
        %p257 = pneg %p65
        %p258 = pneg %p62
        %p259 = pneg %p86
        %p260 = pneg %p83
        %p261 = pneg %p107
        %p262 = pneg %p104
        %p263 = pneg %p128
        %p264 = pneg %p125
        %p265 = pneg %p154
        %p266 = pneg %p151
        %s267 = sand.u32 %s141, 1
        %s268 = scalar_lea.sflag [#allocation6], %s267
        %s269 = sand.u32 %s141, 1
        %s270 = smul.addr %s269, 256
        %s271 = scalar_lea.vmem [#allocation10], %s270
        %272 = vst [vmem:[#allocation2] sm:$0xff] 0.0
        %273 = vst [vmem:[#allocation2 + $0x8] sm:$0xff] 0.0
        %274 = vst [vmem:[#allocation2 + $0x10] sm:$0x3] 0.0
        %275 = vst [vmem:[#allocation2 + $0x18] sm:$0xff] 0.0
        %276 = vst [vmem:[#allocation2 + $0x20] sm:$0xff] 0.0
        %277 = vst [vmem:[#allocation2 + $0x28] sm:$0x3] 0.0
        %278 = vst [vmem:[#allocation2 + $0x30] sm:$0xff] 0.0
        %279 = vst [vmem:[#allocation2 + $0x38] sm:$0xff] 0.0
        %280 = vst [vmem:[#allocation2 + $0x40] sm:$0x3] 0.0
        %281 = vst [vmem:[#allocation2 + $0x48] sm:$0xff] 0.0
        %282 = vst [vmem:[#allocation2 + $0x50] sm:$0xff] 0.0
        %283 = vst [vmem:[#allocation2 + $0x58] sm:$0x3] 0.0
        %284 = vst [vmem:[#allocation2 + $0x60] sm:$0xff] 0.0
        %285 = vst [vmem:[#allocation2 + $0x68] sm:$0xff] 0.0
        %286 = vst [vmem:[#allocation2 + $0x70] sm:$0x3] 0.0
        %287 = vst [vmem:[#allocation2 + $0x78] sm:$0xff] 0.0
        %288 = vst [vmem:[#allocation2 + $0x80] sm:$0xff] 0.0
        %289 = vst [vmem:[#allocation2 + $0x88] sm:$0x3] 0.0
        %290 = vst [vmem:[#allocation2 + $0x90] sm:$0xff] 0.0
        %291 = vst [vmem:[#allocation2 + $0x98] sm:$0xff] 0.0
        %292 = vst [vmem:[#allocation2 + $0xa0] sm:$0x3] 0.0
        %293 = vst [vmem:[#allocation2 + $0xa8] sm:$0xff] 0.0
        %294 = vst [vmem:[#allocation2 + $0xb0] sm:$0xff] 0.0
        %295 = vst [vmem:[#allocation2 + $0xb8] sm:$0x3] 0.0
        %296 = vst [vmem:[#allocation2 + $0xc0] sm:$0xff] 0.0
        %297 = vst [vmem:[#allocation2 + $0xc8] sm:$0xff] 0.0
        %298 = vst [vmem:[#allocation2 + $0xd0] sm:$0x3] 0.0
        %299 = vst [vmem:[#allocation2 + $0xd8] sm:$0xff] 0.0
        %300 = vst [vmem:[#allocation2 + $0xe0] sm:$0xff] 0.0
        %301 = vst [vmem:[#allocation2 + $0xe8] sm:$0x3] 0.0
        %302 = vst [vmem:[#allocation2 + $0xf0] sm:$0xff] 0.0
        %303 = vst [vmem:[#allocation2 + $0xf8] sm:$0xff] 0.0
        %304 = vst [vmem:[#allocation2 + $0x100] sm:$0x3] 0.0
        %305 = vst [vmem:[#allocation2 + $0x108] sm:$0xff] 0.0
        %306 = vst [vmem:[#allocation2 + $0x110] sm:$0xff] 0.0
        %307 = vst [vmem:[#allocation2 + $0x118] sm:$0x3] 0.0
        %308 = vst [vmem:[#allocation2 + $0x120] sm:$0xff] 0.0
        %309 = vst [vmem:[#allocation2 + $0x128] sm:$0xff] 0.0
        %310 = vst [vmem:[#allocation2 + $0x130] sm:$0x3] 0.0
        %311 = vst [vmem:[#allocation2 + $0x138] sm:$0xff] 0.0
        %312 = vst [vmem:[#allocation2 + $0x140] sm:$0xff] 0.0
        %313 = vst [vmem:[#allocation2 + $0x148] sm:$0x3] 0.0
        %314 = vst [vmem:[#allocation2 + $0x150] sm:$0xff] 0.0
        %315 = vst [vmem:[#allocation2 + $0x158] sm:$0xff] 0.0
        %316 = vst [vmem:[#allocation2 + $0x160] sm:$0x3] 0.0
        %317 = vst [vmem:[#allocation2 + $0x168] sm:$0xff] 0.0
        %318 = vst [vmem:[#allocation2 + $0x170] sm:$0xff] 0.0
        %319 = vst [vmem:[#allocation2 + $0x178] sm:$0x3] 0.0
        %320 = vst [vmem:[#allocation2 + $0x180] sm:$0xff] 0.0
        %321 = vst [vmem:[#allocation2 + $0x188] sm:$0xff] 0.0
        %322 = vst [vmem:[#allocation2 + $0x190] sm:$0x3] 0.0
        %323 = vst [vmem:[#allocation2 + $0x198] sm:$0xff] 0.0
        %324 = vst [vmem:[#allocation2 + $0x1a0] sm:$0xff] 0.0
        %325 = vst [vmem:[#allocation2 + $0x1a8] sm:$0x3] 0.0
        %v326 = vld [vmem:[%s237] sm:$0xff]
        %v327 = vld [vmem:[%s237 + $0x8] sm:$0xff]
        %v328 = vld [vmem:[%s237 + $0x10] sm:$0xff]
        %v329 = vld [vmem:[%s237 + $0x18] sm:$0xff]
        %v330 = vld [vmem:[%s237 + $0x20] sm:$0xff]
        %v331 = vld [vmem:[%s237 + $0x28] sm:$0xff]
        %v332 = vld [vmem:[%s237 + $0x30] sm:$0xff]
        %v333 = vld [vmem:[%s237 + $0x38] sm:$0xff]
        %v334 = vld [vmem:[%s237 + $0x40] sm:$0xff]
        %v335 = vld [vmem:[%s237 + $0x48] sm:$0xff]
        %v336 = vld [vmem:[%s237 + $0x50] sm:$0xff]
        %v337 = vld [vmem:[%s237 + $0x58] sm:$0xff]
        %v338 = vld [vmem:[%s237 + $0x60] sm:$0xff]
        %v339 = vld [vmem:[%s237 + $0x68] sm:$0xff]
        %v340 = vld [vmem:[%s237 + $0x70] sm:$0xff]
        %v341 = vld [vmem:[%s237 + $0x78] sm:$0xff]
        %v342 = vld [vmem:[%s237 + $0x80] sm:$0xff]
        %v343 = vld [vmem:[%s237 + $0x88] sm:$0xff]
        %v344 = vld [vmem:[%s237 + $0x90] sm:$0xff]
        %v345 = vld [vmem:[%s237 + $0x98] sm:$0xff]
        %v346 = vld [vmem:[%s237 + $0xa0] sm:$0xff]
        %v347 = vld [vmem:[%s237 + $0xa8] sm:$0xff]
        %v348 = vld [vmem:[%s237 + $0xb0] sm:$0xff]
        %v349 = vld [vmem:[%s237 + $0xb8] sm:$0xff]
        %v350 = vld [vmem:[%s237 + $0xc0] sm:$0xff]
        %v351 = vld [vmem:[%s237 + $0xc8] sm:$0xff]
        %v352 = vld [vmem:[%s237 + $0xd0] sm:$0xff]
        %v353 = vld [vmem:[%s237 + $0xd8] sm:$0xff]
        %v354 = vld [vmem:[%s237 + $0xe0] sm:$0xff]
        %v355 = vld [vmem:[%s237 + $0xe8] sm:$0xff]
        %v356 = vld [vmem:[%s237 + $0xf0] sm:$0xff]
        %v357 = vld [vmem:[%s237 + $0xf8] sm:$0xff]
        %s358 = scalar_lea.vmem [#allocation2], 24
        %359 = vst [vmem:[%s358 + $0x1] sm:$0xff] %v326
        %360 = vst [vmem:[%s358 + $0x9] sm:$0xff] %v327
        %361 = vst [vmem:[%s358 + $0x19] sm:$0xff] %v328
        %362 = vst [vmem:[%s358 + $0x21] sm:$0xff] %v329
        %363 = vst [vmem:[%s358 + $0x31] sm:$0xff] %v330
        %364 = vst [vmem:[%s358 + $0x39] sm:$0xff] %v331
        %365 = vst [vmem:[%s358 + $0x49] sm:$0xff] %v332
        %366 = vst [vmem:[%s358 + $0x51] sm:$0xff] %v333
        %367 = vst [vmem:[%s358 + $0x61] sm:$0xff] %v334
        %368 = vst [vmem:[%s358 + $0x69] sm:$0xff] %v335
        %369 = vst [vmem:[%s358 + $0x79] sm:$0xff] %v336
        %370 = vst [vmem:[%s358 + $0x81] sm:$0xff] %v337
        %371 = vst [vmem:[%s358 + $0x91] sm:$0xff] %v338
        %372 = vst [vmem:[%s358 + $0x99] sm:$0xff] %v339
        %373 = vst [vmem:[%s358 + $0xa9] sm:$0xff] %v340
        %374 = vst [vmem:[%s358 + $0xb1] sm:$0xff] %v341
        %375 = vst [vmem:[%s358 + $0xc1] sm:$0xff] %v342
        %376 = vst [vmem:[%s358 + $0xc9] sm:$0xff] %v343
        %377 = vst [vmem:[%s358 + $0xd9] sm:$0xff] %v344
        %378 = vst [vmem:[%s358 + $0xe1] sm:$0xff] %v345
        %379 = vst [vmem:[%s358 + $0xf1] sm:$0xff] %v346
        %380 = vst [vmem:[%s358 + $0xf9] sm:$0xff] %v347
        %381 = vst [vmem:[%s358 + $0x109] sm:$0xff] %v348
        %382 = vst [vmem:[%s358 + $0x111] sm:$0xff] %v349
        %383 = vst [vmem:[%s358 + $0x121] sm:$0xff] %v350
        %384 = vst [vmem:[%s358 + $0x129] sm:$0xff] %v351
        %385 = vst [vmem:[%s358 + $0x139] sm:$0xff] %v352
        %386 = vst [vmem:[%s358 + $0x141] sm:$0xff] %v353
        %387 = vst [vmem:[%s358 + $0x151] sm:$0xff] %v354
        %388 = vst [vmem:[%s358 + $0x159] sm:$0xff] %v355
        %389 = vst [vmem:[%s358 + $0x169] sm:$0xff] %v356
        %390 = vst [vmem:[%s358 + $0x171] sm:$0xff] %v357
        %v391 = vld [vmem:[#allocation2] sm:$0xff]
        %v392 = vld [vmem:[#allocation2 + $0x8] sm:$0xff]
        %v393 = vld [vmem:[#allocation2 + $0x10] sm:$0x3]
        %v394 = vld [vmem:[#allocation2 + $0x18] sm:$0xff]
        %v395 = vld [vmem:[#allocation2 + $0x20] sm:$0xff]
        %v396 = vld [vmem:[#allocation2 + $0x28] sm:$0x3]
        %v397 = vld [vmem:[#allocation2 + $0x30] sm:$0xff]
        %v398 = vld [vmem:[#allocation2 + $0x38] sm:$0xff]
        %v399 = vld [vmem:[#allocation2 + $0x40] sm:$0x3]
        %v400 = vld [vmem:[#allocation2 + $0x48] sm:$0xff]
        %v401 = vld [vmem:[#allocation2 + $0x50] sm:$0xff]
        %v402 = vld [vmem:[#allocation2 + $0x58] sm:$0x3]
        %v403 = vld [vmem:[#allocation2 + $0x60] sm:$0xff]
        %v404 = vld [vmem:[#allocation2 + $0x68] sm:$0xff]
        %v405 = vld [vmem:[#allocation2 + $0x70] sm:$0x3]
        %v406 = vld [vmem:[#allocation2 + $0x78] sm:$0xff]
        %v407 = vld [vmem:[#allocation2 + $0x80] sm:$0xff]
        %v408 = vld [vmem:[#allocation2 + $0x88] sm:$0x3]
        %v409 = vld [vmem:[#allocation2 + $0x90] sm:$0xff]
        %v410 = vld [vmem:[#allocation2 + $0x98] sm:$0xff]
        %v411 = vld [vmem:[#allocation2 + $0xa0] sm:$0x3]
        %v412 = vld [vmem:[#allocation2 + $0xa8] sm:$0xff]
        %v413 = vld [vmem:[#allocation2 + $0xb0] sm:$0xff]
        %v414 = vld [vmem:[#allocation2 + $0xb8] sm:$0x3]
        %v415 = vld [vmem:[#allocation2 + $0xc0] sm:$0xff]
        %v416 = vld [vmem:[#allocation2 + $0xc8] sm:$0xff]
        %v417 = vld [vmem:[#allocation2 + $0xd0] sm:$0x3]
        %v418 = vld [vmem:[#allocation2 + $0xd8] sm:$0xff]
        %v419 = vld [vmem:[#allocation2 + $0xe0] sm:$0xff]
        %v420 = vld [vmem:[#allocation2 + $0xe8] sm:$0x3]
        %v421 = vld [vmem:[#allocation2 + $0xf0] sm:$0xff]
        %v422 = vld [vmem:[#allocation2 + $0xf8] sm:$0xff]
        %v423 = vld [vmem:[#allocation2 + $0x100] sm:$0x3]
        %v424 = vld [vmem:[#allocation2 + $0x108] sm:$0xff]
        %v425 = vld [vmem:[#allocation2 + $0x110] sm:$0xff]
        %v426 = vld [vmem:[#allocation2 + $0x118] sm:$0x3]
        %v427 = vld [vmem:[#allocation2 + $0x120] sm:$0xff]
        %v428 = vld [vmem:[#allocation2 + $0x128] sm:$0xff]
        %v429 = vld [vmem:[#allocation2 + $0x130] sm:$0x3]
        %v430 = vld [vmem:[#allocation2 + $0x138] sm:$0xff]
        %v431 = vld [vmem:[#allocation2 + $0x140] sm:$0xff]
        %v432 = vld [vmem:[#allocation2 + $0x148] sm:$0x3]
        %v433 = vld [vmem:[#allocation2 + $0x150] sm:$0xff]
        %v434 = vld [vmem:[#allocation2 + $0x158] sm:$0xff]
        %v435 = vld [vmem:[#allocation2 + $0x160] sm:$0x3]
        %v436 = vld [vmem:[#allocation2 + $0x168] sm:$0xff]
        %v437 = vld [vmem:[#allocation2 + $0x170] sm:$0xff]
        %v438 = vld [vmem:[#allocation2 + $0x178] sm:$0x3]
        %v439 = vmax.f32 %v391, 0.0
        %v440 = vmax.f32 %v392, 0.0
        %v441 = vmax.f32 %v393, 0.0
        %v442 = vmax.f32 %v394, 0.0
        %v443 = vmax.f32 %v395, 0.0
        %v444 = vmax.f32 %v396, 0.0
        %v445 = vmax.f32 %v397, 0.0
        %v446 = vmax.f32 %v398, 0.0
        %v447 = vmax.f32 %v399, 0.0
        %v448 = vmax.f32 %v400, 0.0
        %v449 = vmax.f32 %v401, 0.0
        %v450 = vmax.f32 %v402, 0.0
        %v451 = vmax.f32 %v403, 0.0
        %v452 = vmax.f32 %v404, 0.0
        %v453 = vmax.f32 %v405, 0.0
        %v454 = vmax.f32 %v406, 0.0
        %v455 = vmax.f32 %v407, 0.0
        %v456 = vmax.f32 %v408, 0.0
        %v457 = vmax.f32 %v409, 0.0
        %v458 = vmax.f32 %v410, 0.0
        %v459 = vmax.f32 %v411, 0.0
        %v460 = vmax.f32 %v412, 0.0
        %v461 = vmax.f32 %v413, 0.0
        %v462 = vmax.f32 %v414, 0.0
        %v463 = vmax.f32 %v415, 0.0
        %v464 = vmax.f32 %v416, 0.0
        %v465 = vmax.f32 %v417, 0.0
        %v466 = vmax.f32 %v418, 0.0
        %v467 = vmax.f32 %v419, 0.0
        %v468 = vmax.f32 %v420, 0.0
        %v469 = vmax.f32 %v421, 0.0
        %v470 = vmax.f32 %v422, 0.0
        %v471 = vmax.f32 %v423, 0.0
        %v472 = vmax.f32 %v424, 0.0
        %v473 = vmax.f32 %v425, 0.0
        %v474 = vmax.f32 %v426, 0.0
        %v475 = vmax.f32 %v427, 0.0
        %v476 = vmax.f32 %v428, 0.0
        %v477 = vmax.f32 %v429, 0.0
        %v478 = vmax.f32 %v430, 0.0
        %v479 = vmax.f32 %v431, 0.0
        %v480 = vmax.f32 %v432, 0.0
        %v481 = vmax.f32 %v433, 0.0
        %v482 = vmax.f32 %v434, 0.0
        %v483 = vmax.f32 %v435, 0.0
        %v484 = vmax.f32 %v436, 0.0
        %v485 = vmax.f32 %v437, 0.0
        %v486 = vmax.f32 %v438, 0.0
        %vm535 = vcmask 1046528
        %v536 = vrot.slane %v439, 1
        %v537 = vrot.slane %v440, 1
        %v538 = vsel %vm535, %v536, %v537
        %v539 = vrot.slane %v441, 1
        %v540 = vsel %vm535, %v537, %v539
        %v541 = vrot.slane %v442, 1
        %v542 = vrot.slane %v443, 1
        %v543 = vsel %vm535, %v541, %v542
        %v544 = vrot.slane %v444, 1
        %v545 = vsel %vm535, %v542, %v544
        %v546 = vrot.slane %v445, 1
        %v547 = vrot.slane %v446, 1
        %v548 = vsel %vm535, %v546, %v547
        %v549 = vrot.slane %v447, 1
        %v550 = vsel %vm535, %v547, %v549
        %v551 = vrot.slane %v448, 1
        %v552 = vrot.slane %v449, 1
        %v553 = vsel %vm535, %v551, %v552
        %v554 = vrot.slane %v450, 1
        %v555 = vsel %vm535, %v552, %v554
        %v556 = vrot.slane %v451, 1
        %v557 = vrot.slane %v452, 1
        %v558 = vsel %vm535, %v556, %v557
        %v559 = vrot.slane %v453, 1
        %v560 = vsel %vm535, %v557, %v559
        %v561 = vrot.slane %v454, 1
        %v562 = vrot.slane %v455, 1
        %v563 = vsel %vm535, %v561, %v562
        %v564 = vrot.slane %v456, 1
        %v565 = vsel %vm535, %v562, %v564
        %v566 = vrot.slane %v457, 1
        %v567 = vrot.slane %v458, 1
        %v568 = vsel %vm535, %v566, %v567
        %v569 = vrot.slane %v459, 1
        %v570 = vsel %vm535, %v567, %v569
        %v571 = vrot.slane %v460, 1
        %v572 = vrot.slane %v461, 1
        %v573 = vsel %vm535, %v571, %v572
        %v574 = vrot.slane %v462, 1
        %v575 = vsel %vm535, %v572, %v574
        %v576 = vrot.slane %v463, 1
        %v577 = vrot.slane %v464, 1
        %v578 = vsel %vm535, %v576, %v577
        %v579 = vrot.slane %v465, 1
        %v580 = vsel %vm535, %v577, %v579
        %v581 = vrot.slane %v466, 1
        %v582 = vrot.slane %v467, 1
        %v583 = vsel %vm535, %v581, %v582
        %v584 = vrot.slane %v468, 1
        %v585 = vsel %vm535, %v582, %v584
        %v586 = vrot.slane %v469, 1
        %v587 = vrot.slane %v470, 1
        %v588 = vsel %vm535, %v586, %v587
        %v589 = vrot.slane %v471, 1
        %v590 = vsel %vm535, %v587, %v589
        %v591 = vrot.slane %v472, 1
        %v592 = vrot.slane %v473, 1
        %v593 = vsel %vm535, %v591, %v592
        %v594 = vrot.slane %v474, 1
        %v595 = vsel %vm535, %v592, %v594
        %v596 = vrot.slane %v475, 1
        %v597 = vrot.slane %v476, 1
        %v598 = vsel %vm535, %v596, %v597
        %v599 = vrot.slane %v477, 1
        %v600 = vsel %vm535, %v597, %v599
        %v601 = vrot.slane %v478, 1
        %v602 = vrot.slane %v479, 1
        %v603 = vsel %vm535, %v601, %v602
        %v604 = vrot.slane %v480, 1
        %v605 = vsel %vm535, %v602, %v604
        %v606 = vrot.slane %v481, 1
        %v607 = vrot.slane %v482, 1
        %v608 = vsel %vm535, %v606, %v607
        %v609 = vrot.slane %v483, 1
        %v610 = vsel %vm535, %v607, %v609
        %v611 = vrot.slane %v484, 1
        %v612 = vrot.slane %v485, 1
        %v613 = vsel %vm535, %v611, %v612
        %v614 = vrot.slane %v486, 1
        %v615 = vsel %vm535, %v612, %v614
        %vm648 = vcmask 1045504
        %v649 = vrot.slane %v439, 2
        %v650 = vrot.slane %v440, 2
        %v651 = vsel %vm648, %v649, %v650
        %v652 = vrot.slane %v441, 2
        %v653 = vsel %vm648, %v650, %v652
        %v654 = vrot.slane %v442, 2
        %v655 = vrot.slane %v443, 2
        %v656 = vsel %vm648, %v654, %v655
        %v657 = vrot.slane %v444, 2
        %v658 = vsel %vm648, %v655, %v657
        %v659 = vrot.slane %v445, 2
        %v660 = vrot.slane %v446, 2
        %v661 = vsel %vm648, %v659, %v660
        %v662 = vrot.slane %v447, 2
        %v663 = vsel %vm648, %v660, %v662
        %v664 = vrot.slane %v448, 2
        %v665 = vrot.slane %v449, 2
        %v666 = vsel %vm648, %v664, %v665
        %v667 = vrot.slane %v450, 2
        %v668 = vsel %vm648, %v665, %v667
        %v669 = vrot.slane %v451, 2
        %v670 = vrot.slane %v452, 2
        %v671 = vsel %vm648, %v669, %v670
        %v672 = vrot.slane %v453, 2
        %v673 = vsel %vm648, %v670, %v672
        %v674 = vrot.slane %v454, 2
        %v675 = vrot.slane %v455, 2
        %v676 = vsel %vm648, %v674, %v675
        %v677 = vrot.slane %v456, 2
        %v678 = vsel %vm648, %v675, %v677
        %v679 = vrot.slane %v457, 2
        %v680 = vrot.slane %v458, 2
        %v681 = vsel %vm648, %v679, %v680
        %v682 = vrot.slane %v459, 2
        %v683 = vsel %vm648, %v680, %v682
        %v684 = vrot.slane %v460, 2
        %v685 = vrot.slane %v461, 2
        %v686 = vsel %vm648, %v684, %v685
        %v687 = vrot.slane %v462, 2
        %v688 = vsel %vm648, %v685, %v687
        %v689 = vrot.slane %v463, 2
        %v690 = vrot.slane %v464, 2
        %v691 = vsel %vm648, %v689, %v690
        %v692 = vrot.slane %v465, 2
        %v693 = vsel %vm648, %v690, %v692
        %v694 = vrot.slane %v466, 2
        %v695 = vrot.slane %v467, 2
        %v696 = vsel %vm648, %v694, %v695
        %v697 = vrot.slane %v468, 2
        %v698 = vsel %vm648, %v695, %v697
        %v699 = vrot.slane %v469, 2
        %v700 = vrot.slane %v470, 2
        %v701 = vsel %vm648, %v699, %v700
        %v702 = vrot.slane %v471, 2
        %v703 = vsel %vm648, %v700, %v702
        %v704 = vrot.slane %v472, 2
        %v705 = vrot.slane %v473, 2
        %v706 = vsel %vm648, %v704, %v705
        %v707 = vrot.slane %v474, 2
        %v708 = vsel %vm648, %v705, %v707
        %v709 = vrot.slane %v475, 2
        %v710 = vrot.slane %v476, 2
        %v711 = vsel %vm648, %v709, %v710
        %v712 = vrot.slane %v477, 2
        %v713 = vsel %vm648, %v710, %v712
        %v714 = vrot.slane %v478, 2
        %v715 = vrot.slane %v479, 2
        %v716 = vsel %vm648, %v714, %v715
        %v717 = vrot.slane %v480, 2
        %v718 = vsel %vm648, %v715, %v717
        %v719 = vrot.slane %v481, 2
        %v720 = vrot.slane %v482, 2
        %v721 = vsel %vm648, %v719, %v720
        %v722 = vrot.slane %v483, 2
        %v723 = vsel %vm648, %v720, %v722
        %v724 = vrot.slane %v484, 2
        %v725 = vrot.slane %v485, 2
        %v726 = vsel %vm648, %v724, %v725
        %v727 = vrot.slane %v486, 2
        %v728 = vsel %vm648, %v725, %v727
        %v761 = vld [vmem:[#allocation7] sm:$0xff]
        %v762 = vld [vmem:[#allocation7 + $0x8] sm:$0xff]
        %v763 = vld [vmem:[#allocation7 + $0x10] sm:$0xff]
        %v764 = vld [vmem:[#allocation7 + $0x18] sm:$0xff]
        %v765 = vld [vmem:[#allocation7 + $0x20] sm:$0xff]
        %v766 = vld [vmem:[#allocation7 + $0x28] sm:$0xff]
        %v767 = vld [vmem:[#allocation7 + $0x30] sm:$0xff]
        %v768 = vld [vmem:[#allocation7 + $0x38] sm:$0xff]
        %v769 = vld [vmem:[#allocation7 + $0x40] sm:$0xff]
        %v770 = vld [vmem:[#allocation7 + $0x48] sm:$0xff]
        %v771 = vld [vmem:[#allocation7 + $0x50] sm:$0xff]
        %v772 = vld [vmem:[#allocation7 + $0x58] sm:$0xff]
        %v773 = vld [vmem:[#allocation7 + $0x60] sm:$0xff]
        %v774 = vld [vmem:[#allocation7 + $0x68] sm:$0xff]
        %v775 = vld [vmem:[#allocation7 + $0x70] sm:$0xff]
        %v776 = vld [vmem:[#allocation7 + $0x78] sm:$0xff]
        %v777 = vld [vmem:[#allocation7 + $0x80] sm:$0xff]
        %v778 = vld [vmem:[#allocation7 + $0x88] sm:$0xff]
        %v779 = vld [vmem:[#allocation7 + $0x90] sm:$0xff]
        %v780 = vld [vmem:[#allocation7 + $0x98] sm:$0xff]
        %v781 = vld [vmem:[#allocation7 + $0xa0] sm:$0xff]
        %v782 = vld [vmem:[#allocation7 + $0xa8] sm:$0xff]
        %v783 = vld [vmem:[#allocation7 + $0xb0] sm:$0xff]
        %v784 = vld [vmem:[#allocation7 + $0xb8] sm:$0xff]
        %v785 = vld [vmem:[#allocation7 + $0xc0] sm:$0xff]
        %v786 = vld [vmem:[#allocation7 + $0xc8] sm:$0xff]
        %v787 = vld [vmem:[#allocation7 + $0xd0] sm:$0xff]
        %v788 = vld [vmem:[#allocation7 + $0xd8] sm:$0xff]
        %v789 = vld [vmem:[#allocation7 + $0xe0] sm:$0xff]
        %v790 = vld [vmem:[#allocation7 + $0xe8] sm:$0xff]
        %v791 = vld [vmem:[#allocation7 + $0xf0] sm:$0xff]
        %v792 = vld [vmem:[#allocation7 + $0xf8] sm:$0xff]
        %v793 = vld [vmem:[#allocation7 + $0x100] sm:$0xff]
        %v794 = vld [vmem:[#allocation7 + $0x108] sm:$0xff]
        %v795 = vld [vmem:[#allocation7 + $0x110] sm:$0xff]
        %v796 = vld [vmem:[#allocation7 + $0x118] sm:$0xff]
        %v797 = vld [vmem:[#allocation7 + $0x120] sm:$0xff]
        %v798 = vld [vmem:[#allocation7 + $0x128] sm:$0xff]
        %v799 = vld [vmem:[#allocation7 + $0x130] sm:$0xff]
        %v800 = vld [vmem:[#allocation7 + $0x138] sm:$0xff]
        %v801 = vld [vmem:[#allocation7 + $0x140] sm:$0xff]
        %v802 = vld [vmem:[#allocation7 + $0x148] sm:$0xff]
        %v803 = vld [vmem:[#allocation7 + $0x150] sm:$0xff]
        %v804 = vld [vmem:[#allocation7 + $0x158] sm:$0xff]
        %v805 = vld [vmem:[#allocation7 + $0x160] sm:$0xff]
        %v806 = vld [vmem:[#allocation7 + $0x168] sm:$0xff]
        %v807 = vld [vmem:[#allocation7 + $0x170] sm:$0xff]
        %v808 = vld [vmem:[#allocation7 + $0x178] sm:$0xff]
        %v809 = vld [vmem:[%s358] sm:$0xff]
        %v810 = vld [vmem:[%s358 + $0x8] sm:$0xff]
        %v811 = vld [vmem:[%s358 + $0x10] sm:$0x3]
        %v812 = vld [vmem:[%s358 + $0x18] sm:$0xff]
        %v813 = vld [vmem:[%s358 + $0x20] sm:$0xff]
        %v814 = vld [vmem:[%s358 + $0x28] sm:$0x3]
        %v815 = vld [vmem:[%s358 + $0x30] sm:$0xff]
        %v816 = vld [vmem:[%s358 + $0x38] sm:$0xff]
        %v817 = vld [vmem:[%s358 + $0x40] sm:$0x3]
        %v818 = vld [vmem:[%s358 + $0x48] sm:$0xff]
        %v819 = vld [vmem:[%s358 + $0x50] sm:$0xff]
        %v820 = vld [vmem:[%s358 + $0x58] sm:$0x3]
        %v821 = vld [vmem:[%s358 + $0x60] sm:$0xff]
        %v822 = vld [vmem:[%s358 + $0x68] sm:$0xff]
        %v823 = vld [vmem:[%s358 + $0x70] sm:$0x3]
        %v824 = vld [vmem:[%s358 + $0x78] sm:$0xff]
        %v825 = vld [vmem:[%s358 + $0x80] sm:$0xff]
        %v826 = vld [vmem:[%s358 + $0x88] sm:$0x3]
        %v827 = vld [vmem:[%s358 + $0x90] sm:$0xff]
        %v828 = vld [vmem:[%s358 + $0x98] sm:$0xff]
        %v829 = vld [vmem:[%s358 + $0xa0] sm:$0x3]
        %v830 = vld [vmem:[%s358 + $0xa8] sm:$0xff]
        %v831 = vld [vmem:[%s358 + $0xb0] sm:$0xff]
        %v832 = vld [vmem:[%s358 + $0xb8] sm:$0x3]
        %v833 = vld [vmem:[%s358 + $0xc0] sm:$0xff]
        %v834 = vld [vmem:[%s358 + $0xc8] sm:$0xff]
        %v835 = vld [vmem:[%s358 + $0xd0] sm:$0x3]
        %v836 = vld [vmem:[%s358 + $0xd8] sm:$0xff]
        %v837 = vld [vmem:[%s358 + $0xe0] sm:$0xff]
        %v838 = vld [vmem:[%s358 + $0xe8] sm:$0x3]
        %v839 = vld [vmem:[%s358 + $0xf0] sm:$0xff]
        %v840 = vld [vmem:[%s358 + $0xf8] sm:$0xff]
        %v841 = vld [vmem:[%s358 + $0x100] sm:$0x3]
        %v842 = vld [vmem:[%s358 + $0x108] sm:$0xff]
        %v843 = vld [vmem:[%s358 + $0x110] sm:$0xff]
        %v844 = vld [vmem:[%s358 + $0x118] sm:$0x3]
        %v845 = vld [vmem:[%s358 + $0x120] sm:$0xff]
        %v846 = vld [vmem:[%s358 + $0x128] sm:$0xff]
        %v847 = vld [vmem:[%s358 + $0x130] sm:$0x3]
        %v848 = vld [vmem:[%s358 + $0x138] sm:$0xff]
        %v849 = vld [vmem:[%s358 + $0x140] sm:$0xff]
        %v850 = vld [vmem:[%s358 + $0x148] sm:$0x3]
        %v851 = vld [vmem:[%s358 + $0x150] sm:$0xff]
        %v852 = vld [vmem:[%s358 + $0x158] sm:$0xff]
        %v853 = vld [vmem:[%s358 + $0x160] sm:$0x3]
        %v854 = vld [vmem:[%s358 + $0x168] sm:$0xff]
        %v855 = vld [vmem:[%s358 + $0x170] sm:$0xff]
        %v856 = vld [vmem:[%s358 + $0x178] sm:$0x3]
        %v857 = vmax.f32 %v809, 0.0
        %v858 = vmax.f32 %v810, 0.0
        %v859 = vmax.f32 %v811, 0.0
        %v860 = vmax.f32 %v812, 0.0
        %v861 = vmax.f32 %v813, 0.0
        %v862 = vmax.f32 %v814, 0.0
        %v863 = vmax.f32 %v815, 0.0
        %v864 = vmax.f32 %v816, 0.0
        %v865 = vmax.f32 %v817, 0.0
        %v866 = vmax.f32 %v818, 0.0
        %v867 = vmax.f32 %v819, 0.0
        %v868 = vmax.f32 %v820, 0.0
        %v869 = vmax.f32 %v821, 0.0
        %v870 = vmax.f32 %v822, 0.0
        %v871 = vmax.f32 %v823, 0.0
        %v872 = vmax.f32 %v824, 0.0
        %v873 = vmax.f32 %v825, 0.0
        %v874 = vmax.f32 %v826, 0.0
        %v875 = vmax.f32 %v827, 0.0
        %v876 = vmax.f32 %v828, 0.0
        %v877 = vmax.f32 %v829, 0.0
        %v878 = vmax.f32 %v830, 0.0
        %v879 = vmax.f32 %v831, 0.0
        %v880 = vmax.f32 %v832, 0.0
        %v881 = vmax.f32 %v833, 0.0
        %v882 = vmax.f32 %v834, 0.0
        %v883 = vmax.f32 %v835, 0.0
        %v884 = vmax.f32 %v836, 0.0
        %v885 = vmax.f32 %v837, 0.0
        %v886 = vmax.f32 %v838, 0.0
        %v887 = vmax.f32 %v839, 0.0
        %v888 = vmax.f32 %v840, 0.0
        %v889 = vmax.f32 %v841, 0.0
        %v890 = vmax.f32 %v842, 0.0
        %v891 = vmax.f32 %v843, 0.0
        %v892 = vmax.f32 %v844, 0.0
        %v893 = vmax.f32 %v845, 0.0
        %v894 = vmax.f32 %v846, 0.0
        %v895 = vmax.f32 %v847, 0.0
        %v896 = vmax.f32 %v848, 0.0
        %v897 = vmax.f32 %v849, 0.0
        %v898 = vmax.f32 %v850, 0.0
        %v899 = vmax.f32 %v851, 0.0
        %v900 = vmax.f32 %v852, 0.0
        %v901 = vmax.f32 %v853, 0.0
        %v902 = vmax.f32 %v854, 0.0
        %v903 = vmax.f32 %v855, 0.0
        %v904 = vmax.f32 %v856, 0.0
        %v953 = vrot.slane %v857, 1
        %v954 = vrot.slane %v858, 1
        %v955 = vsel %vm535, %v953, %v954
        %v956 = vrot.slane %v859, 1
        %v957 = vsel %vm535, %v954, %v956
        %v958 = vrot.slane %v860, 1
        %v959 = vrot.slane %v861, 1
        %v960 = vsel %vm535, %v958, %v959
        %v961 = vrot.slane %v862, 1
        %v962 = vsel %vm535, %v959, %v961
        %v963 = vrot.slane %v863, 1
        %v964 = vrot.slane %v864, 1
        %v965 = vsel %vm535, %v963, %v964
        %v966 = vrot.slane %v865, 1
        %v967 = vsel %vm535, %v964, %v966
        %v968 = vrot.slane %v866, 1
        %v969 = vrot.slane %v867, 1
        %v970 = vsel %vm535, %v968, %v969
        %v971 = vrot.slane %v868, 1
        %v972 = vsel %vm535, %v969, %v971
        %v973 = vrot.slane %v869, 1
        %v974 = vrot.slane %v870, 1
        %v975 = vsel %vm535, %v973, %v974
        %v976 = vrot.slane %v871, 1
        %v977 = vsel %vm535, %v974, %v976
        %v978 = vrot.slane %v872, 1
        %v979 = vrot.slane %v873, 1
        %v980 = vsel %vm535, %v978, %v979
        %v981 = vrot.slane %v874, 1
        %v982 = vsel %vm535, %v979, %v981
        %v983 = vrot.slane %v875, 1
        %v984 = vrot.slane %v876, 1
        %v985 = vsel %vm535, %v983, %v984
        %v986 = vrot.slane %v877, 1
        %v987 = vsel %vm535, %v984, %v986
        %v988 = vrot.slane %v878, 1
        %v989 = vrot.slane %v879, 1
        %v990 = vsel %vm535, %v988, %v989
        %v991 = vrot.slane %v880, 1
        %v992 = vsel %vm535, %v989, %v991
        %v993 = vrot.slane %v881, 1
        %v994 = vrot.slane %v882, 1
        %v995 = vsel %vm535, %v993, %v994
        %v996 = vrot.slane %v883, 1
        %v997 = vsel %vm535, %v994, %v996
        %v998 = vrot.slane %v884, 1
        %v999 = vrot.slane %v885, 1
        %v1000 = vsel %vm535, %v998, %v999
        %v1001 = vrot.slane %v886, 1
        %v1002 = vsel %vm535, %v999, %v1001
        %v1003 = vrot.slane %v887, 1
        %v1004 = vrot.slane %v888, 1
        %v1005 = vsel %vm535, %v1003, %v1004
        %v1006 = vrot.slane %v889, 1
        %v1007 = vsel %vm535, %v1004, %v1006
        %v1008 = vrot.slane %v890, 1
        %v1009 = vrot.slane %v891, 1
        %v1010 = vsel %vm535, %v1008, %v1009
        %v1011 = vrot.slane %v892, 1
        %v1012 = vsel %vm535, %v1009, %v1011
        %v1013 = vrot.slane %v893, 1
        %v1014 = vrot.slane %v894, 1
        %v1015 = vsel %vm535, %v1013, %v1014
        %v1016 = vrot.slane %v895, 1
        %v1017 = vsel %vm535, %v1014, %v1016
        %v1018 = vrot.slane %v896, 1
        %v1019 = vrot.slane %v897, 1
        %v1020 = vsel %vm535, %v1018, %v1019
        %v1021 = vrot.slane %v898, 1
        %v1022 = vsel %vm535, %v1019, %v1021
        %v1023 = vrot.slane %v899, 1
        %v1024 = vrot.slane %v900, 1
        %v1025 = vsel %vm535, %v1023, %v1024
        %v1026 = vrot.slane %v901, 1
        %v1027 = vsel %vm535, %v1024, %v1026
        %v1028 = vrot.slane %v902, 1
        %v1029 = vrot.slane %v903, 1
        %v1030 = vsel %vm535, %v1028, %v1029
        %v1031 = vrot.slane %v904, 1
        %v1032 = vsel %vm535, %v1029, %v1031
        %v1065 = vrot.slane %v857, 2
        %v1066 = vrot.slane %v858, 2
        %v1067 = vsel %vm648, %v1065, %v1066
        %v1068 = vrot.slane %v859, 2
        %v1069 = vsel %vm648, %v1066, %v1068
        %v1070 = vrot.slane %v860, 2
        %v1071 = vrot.slane %v861, 2
        %v1072 = vsel %vm648, %v1070, %v1071
        %v1073 = vrot.slane %v862, 2
        %v1074 = vsel %vm648, %v1071, %v1073
        %v1075 = vrot.slane %v863, 2
        %v1076 = vrot.slane %v864, 2
        %v1077 = vsel %vm648, %v1075, %v1076
        %v1078 = vrot.slane %v865, 2
        %v1079 = vsel %vm648, %v1076, %v1078
        %v1080 = vrot.slane %v866, 2
        %v1081 = vrot.slane %v867, 2
        %v1082 = vsel %vm648, %v1080, %v1081
        %v1083 = vrot.slane %v868, 2
        %v1084 = vsel %vm648, %v1081, %v1083
        %v1085 = vrot.slane %v869, 2
        %v1086 = vrot.slane %v870, 2
        %v1087 = vsel %vm648, %v1085, %v1086
        %v1088 = vrot.slane %v871, 2
        %v1089 = vsel %vm648, %v1086, %v1088
        %v1090 = vrot.slane %v872, 2
        %v1091 = vrot.slane %v873, 2
        %v1092 = vsel %vm648, %v1090, %v1091
        %v1093 = vrot.slane %v874, 2
        %v1094 = vsel %vm648, %v1091, %v1093
        %v1095 = vrot.slane %v875, 2
        %v1096 = vrot.slane %v876, 2
        %v1097 = vsel %vm648, %v1095, %v1096
        %v1098 = vrot.slane %v877, 2
        %v1099 = vsel %vm648, %v1096, %v1098
        %v1100 = vrot.slane %v878, 2
        %v1101 = vrot.slane %v879, 2
        %v1102 = vsel %vm648, %v1100, %v1101
        %v1103 = vrot.slane %v880, 2
        %v1104 = vsel %vm648, %v1101, %v1103
        %v1105 = vrot.slane %v881, 2
        %v1106 = vrot.slane %v882, 2
        %v1107 = vsel %vm648, %v1105, %v1106
        %v1108 = vrot.slane %v883, 2
        %v1109 = vsel %vm648, %v1106, %v1108
        %v1110 = vrot.slane %v884, 2
        %v1111 = vrot.slane %v885, 2
        %v1112 = vsel %vm648, %v1110, %v1111
        %v1113 = vrot.slane %v886, 2
        %v1114 = vsel %vm648, %v1111, %v1113
        %v1115 = vrot.slane %v887, 2
        %v1116 = vrot.slane %v888, 2
        %v1117 = vsel %vm648, %v1115, %v1116
        %v1118 = vrot.slane %v889, 2
        %v1119 = vsel %vm648, %v1116, %v1118
        %v1120 = vrot.slane %v890, 2
        %v1121 = vrot.slane %v891, 2
        %v1122 = vsel %vm648, %v1120, %v1121
        %v1123 = vrot.slane %v892, 2
        %v1124 = vsel %vm648, %v1121, %v1123
        %v1125 = vrot.slane %v893, 2
        %v1126 = vrot.slane %v894, 2
        %v1127 = vsel %vm648, %v1125, %v1126
        %v1128 = vrot.slane %v895, 2
        %v1129 = vsel %vm648, %v1126, %v1128
        %v1130 = vrot.slane %v896, 2
        %v1131 = vrot.slane %v897, 2
        %v1132 = vsel %vm648, %v1130, %v1131
        %v1133 = vrot.slane %v898, 2
        %v1134 = vsel %vm648, %v1131, %v1133
        %v1135 = vrot.slane %v899, 2
        %v1136 = vrot.slane %v900, 2
        %v1137 = vsel %vm648, %v1135, %v1136
        %v1138 = vrot.slane %v901, 2
        %v1139 = vsel %vm648, %v1136, %v1138
        %v1140 = vrot.slane %v902, 2
        %v1141 = vrot.slane %v903, 2
        %v1142 = vsel %vm648, %v1140, %v1141
        %v1143 = vrot.slane %v904, 2
        %v1144 = vsel %vm648, %v1141, %v1143
        %v1177 = vld [vmem:[#allocation7 + $0x180] sm:$0xff]
        %v1178 = vld [vmem:[#allocation7 + $0x188] sm:$0xff]
        %v1179 = vld [vmem:[#allocation7 + $0x190] sm:$0xff]
        %v1180 = vld [vmem:[#allocation7 + $0x198] sm:$0xff]
        %v1181 = vld [vmem:[#allocation7 + $0x1a0] sm:$0xff]
        %v1182 = vld [vmem:[#allocation7 + $0x1a8] sm:$0xff]
        %v1183 = vld [vmem:[#allocation7 + $0x1b0] sm:$0xff]
        %v1184 = vld [vmem:[#allocation7 + $0x1b8] sm:$0xff]
        %v1185 = vld [vmem:[#allocation7 + $0x1c0] sm:$0xff]
        %v1186 = vld [vmem:[#allocation7 + $0x1c8] sm:$0xff]
        %v1187 = vld [vmem:[#allocation7 + $0x1d0] sm:$0xff]
        %v1188 = vld [vmem:[#allocation7 + $0x1d8] sm:$0xff]
        %v1189 = vld [vmem:[#allocation7 + $0x1e0] sm:$0xff]
        %v1190 = vld [vmem:[#allocation7 + $0x1e8] sm:$0xff]
        %v1191 = vld [vmem:[#allocation7 + $0x1f0] sm:$0xff]
        %v1192 = vld [vmem:[#allocation7 + $0x1f8] sm:$0xff]
        %v1193 = vld [vmem:[#allocation7 + $0x200] sm:$0xff]
        %v1194 = vld [vmem:[#allocation7 + $0x208] sm:$0xff]
        %v1195 = vld [vmem:[#allocation7 + $0x210] sm:$0xff]
        %v1196 = vld [vmem:[#allocation7 + $0x218] sm:$0xff]
        %v1197 = vld [vmem:[#allocation7 + $0x220] sm:$0xff]
        %v1198 = vld [vmem:[#allocation7 + $0x228] sm:$0xff]
        %v1199 = vld [vmem:[#allocation7 + $0x230] sm:$0xff]
        %v1200 = vld [vmem:[#allocation7 + $0x238] sm:$0xff]
        %v1201 = vld [vmem:[#allocation7 + $0x240] sm:$0xff]
        %v1202 = vld [vmem:[#allocation7 + $0x248] sm:$0xff]
        %v1203 = vld [vmem:[#allocation7 + $0x250] sm:$0xff]
        %v1204 = vld [vmem:[#allocation7 + $0x258] sm:$0xff]
        %v1205 = vld [vmem:[#allocation7 + $0x260] sm:$0xff]
        %v1206 = vld [vmem:[#allocation7 + $0x268] sm:$0xff]
        %v1207 = vld [vmem:[#allocation7 + $0x270] sm:$0xff]
        %v1208 = vld [vmem:[#allocation7 + $0x278] sm:$0xff]
        %v1209 = vld [vmem:[#allocation7 + $0x280] sm:$0xff]
        %v1210 = vld [vmem:[#allocation7 + $0x288] sm:$0xff]
        %v1211 = vld [vmem:[#allocation7 + $0x290] sm:$0xff]
        %v1212 = vld [vmem:[#allocation7 + $0x298] sm:$0xff]
        %v1213 = vld [vmem:[#allocation7 + $0x2a0] sm:$0xff]
        %v1214 = vld [vmem:[#allocation7 + $0x2a8] sm:$0xff]
        %v1215 = vld [vmem:[#allocation7 + $0x2b0] sm:$0xff]
        %v1216 = vld [vmem:[#allocation7 + $0x2b8] sm:$0xff]
        %v1217 = vld [vmem:[#allocation7 + $0x2c0] sm:$0xff]
        %v1218 = vld [vmem:[#allocation7 + $0x2c8] sm:$0xff]
        %v1219 = vld [vmem:[#allocation7 + $0x2d0] sm:$0xff]
        %v1220 = vld [vmem:[#allocation7 + $0x2d8] sm:$0xff]
        %v1221 = vld [vmem:[#allocation7 + $0x2e0] sm:$0xff]
        %v1222 = vld [vmem:[#allocation7 + $0x2e8] sm:$0xff]
        %v1223 = vld [vmem:[#allocation7 + $0x2f0] sm:$0xff]
        %v1224 = vld [vmem:[#allocation7 + $0x2f8] sm:$0xff]
        %1225 = vmatprep.subr.mxu0 0.0
        %1226 = vmatpush1.msra.mxu0 %v1177
        %1227 = vmatprep.subr.mxu0 0.0
        %1228 = vmatpush1.msra.mxu0 %v1178
        %1229 = vmatprep.subr.mxu0 0.0
        %1230 = vmatpush1.msra.mxu0 %v1179
        %1231 = vmatprep.subr.mxu0 0.0
        %1232 = vmatpush1.msra.mxu0 %v1180
        %1233 = vmatprep.subr.mxu0 0.0
        %1234 = vmatpush1.msra.mxu0 %v1181
        %1235 = vmatprep.subr.mxu0 0.0
        %1236 = vmatpush1.msra.mxu0 %v1182
        %1237 = vmatprep.subr.mxu0 0.0
        %1238 = vmatpush1.msra.mxu0 %v1183
        %1239 = vmatprep.subr.mxu0 0.0
        %1240 = vmatpush1.msra.mxu0 %v1184
        %1241 = vmatprep.subr.mxu0 0.0
        %1242 = vmatpush1.msra.mxu0 %v1185
        %1243 = vmatprep.subr.mxu0 0.0
        %1244 = vmatpush1.msra.mxu0 %v1186
        %1245 = vmatprep.subr.mxu0 0.0
        %1246 = vmatpush1.msra.mxu0 %v1187
        %1247 = vmatprep.subr.mxu0 0.0
        %1248 = vmatpush1.msra.mxu0 %v1188
        %1249 = vmatprep.subr.mxu0 0.0
        %1250 = vmatpush1.msra.mxu0 %v1189
        %1251 = vmatprep.subr.mxu0 0.0
        %1252 = vmatpush1.msra.mxu0 %v1190
        %1253 = vmatprep.subr.mxu0 0.0
        %1254 = vmatpush1.msra.mxu0 %v1191
        %1255 = vmatprep.subr.mxu0 0.0
        %1256 = vmatpush1.msra.mxu0 %v1192
        %1257 = vmatprep.subr.mxu0 0.0
        %1258 = vmatpush1.msra.mxu0 %v1193
        %1259 = vmatprep.subr.mxu0 0.0
        %1260 = vmatpush1.msra.mxu0 %v1194
        %1261 = vmatprep.subr.mxu0 0.0
        %1262 = vmatpush1.msra.mxu0 %v1195
        %1263 = vmatprep.subr.mxu0 0.0
        %1264 = vmatpush1.msra.mxu0 %v1196
        %1265 = vmatprep.subr.mxu0 0.0
        %1266 = vmatpush1.msra.mxu0 %v1197
        %1267 = vmatprep.subr.mxu0 0.0
        %1268 = vmatpush1.msra.mxu0 %v1198
        %1269 = vmatprep.subr.mxu0 0.0
        %1270 = vmatpush1.msra.mxu0 %v1199
        %1271 = vmatprep.subr.mxu0 0.0
        %1272 = vmatpush1.msra.mxu0 %v1200
        %1273 = vmatprep.subr.mxu0 0.0
        %1274 = vmatpush1.msra.mxu0 %v1201
        %1275 = vmatprep.subr.mxu0 0.0
        %1276 = vmatpush1.msra.mxu0 %v1202
        %1277 = vmatprep.subr.mxu0 0.0
        %1278 = vmatpush1.msra.mxu0 %v1203
        %1279 = vmatprep.subr.mxu0 0.0
        %1280 = vmatpush1.msra.mxu0 %v1204
        %1281 = vmatprep.subr.mxu0 0.0
        %1282 = vmatpush1.msra.mxu0 %v1205
        %1283 = vmatprep.subr.mxu0 0.0
        %1284 = vmatpush1.msra.mxu0 %v1206
        %1285 = vmatprep.subr.mxu0 0.0
        %1286 = vmatpush1.msra.mxu0 %v1207
        %1287 = vmatprep.subr.mxu0 0.0
        %1288 = vmatpush1.msra.mxu0 %v1208
        %1289 = vmatprep.mubr.f32.mxu0 %v955
        %1290 = vmatmul.mubr.f32.gmra.mrb[0].mxu0 %v857
        %v1291 = vpop.f32.mrb[0].mxu0
        %v1292 = vadd.f32 0.0, %v1291
        %v1293 = vpop.f32.mrb[0].mxu0
        %1294 = vmatprep.mubr.f32.mxu0 %v957
        %1295 = vmatmul.mubr.f32.gmra.mrb[0].mxu0 %v858
        %v1296 = vpop.f32.mrb[0].mxu0
        %v1297 = vadd.f32 0.0, %v1296
        %v1298 = vpop.f32.mrb[0].mxu0
        %1299 = vmatprep.mubr.f32.mxu0 %v960
        %1300 = vmatmul.mubr.f32.gmra.mrb[0].mxu0 %v860
        %v1301 = vpop.f32.mrb[0].mxu0
        %v1302 = vadd.f32 0.0, %v1301
        %v1303 = vpop.f32.mrb[0].mxu0
        %1304 = vmatprep.mubr.f32.mxu0 %v962
        %1305 = vmatmul.mubr.f32.gmra.mrb[0].mxu0 %v861
        %v1306 = vpop.f32.mrb[0].mxu0
        %v1307 = vadd.f32 0.0, %v1306
        %v1308 = vpop.f32.mrb[0].mxu0
        %1309 = vmatprep.mubr.f32.mxu0 %v965
        %1310 = vmatmul.mubr.f32.gmra.mrb[0].mxu0 %v863
        %v1311 = vpop.f32.mrb[0].mxu0
        %v1312 = vadd.f32 0.0, %v1311
        %v1313 = vpop.f32.mrb[0].mxu0
        %1314 = vmatprep.mubr.f32.mxu0 %v967
        %1315 = vmatmul.mubr.f32.gmra.mrb[0].mxu0 %v864
        %v1316 = vpop.f32.mrb[0].mxu0
        %v1317 = vadd.f32 0.0, %v1316
        %v1318 = vpop.f32.mrb[0].mxu0
        %1319 = vmatprep.mubr.f32.mxu0 %v970
        %1320 = vmatmul.mubr.f32.gmra.mrb[0].mxu0 %v866
        %v1321 = vpop.f32.mrb[0].mxu0
        %v1322 = vadd.f32 0.0, %v1321
        %v1323 = vpop.f32.mrb[0].mxu0
        %1324 = vmatprep.mubr.f32.mxu0 %v972
        %1325 = vmatmul.mubr.f32.gmra.mrb[0].mxu0 %v867
        %v1326 = vpop.f32.mrb[0].mxu0
        %v1327 = vadd.f32 0.0, %v1326
        %v1328 = vpop.f32.mrb[0].mxu0
        %1329 = vmatprep.mubr.f32.mxu0 %v975
        %1330 = vmatmul.mubr.f32.gmra.mrb[0].mxu0 %v869
        %v1331 = vpop.f32.mrb[0].mxu0
        %v1332 = vadd.f32 0.0, %v1331
        %v1333 = vpop.f32.mrb[0].mxu0
        %1334 = vmatprep.mubr.f32.mxu0 %v977
        %1335 = vmatmul.mubr.f32.gmra.mrb[0].mxu0 %v870
        %v1336 = vpop.f32.mrb[0].mxu0
        %v1337 = vadd.f32 0.0, %v1336
        %v1338 = vpop.f32.mrb[0].mxu0
        %1339 = vmatprep.mubr.f32.mxu0 %v980
        %1340 = vmatmul.mubr.f32.gmra.mrb[0].mxu0 %v872
        %v1341 = vpop.f32.mrb[0].mxu0
        %v1342 = vadd.f32 0.0, %v1341
        %v1343 = vpop.f32.mrb[0].mxu0
        %1344 = vmatprep.mubr.f32.mxu0 %v982
        %1345 = vmatmul.mubr.f32.gmra.mrb[0].mxu0 %v873
        %v1346 = vpop.f32.mrb[0].mxu0
        %v1347 = vadd.f32 0.0, %v1346
        %v1348 = vpop.f32.mrb[0].mxu0
        %1349 = vmatprep.mubr.f32.mxu0 %v985
        %1350 = vmatmul.mubr.f32.gmra.mrb[0].mxu0 %v875
        %v1351 = vpop.f32.mrb[0].mxu0
        %v1352 = vadd.f32 0.0, %v1351
        %v1353 = vpop.f32.mrb[0].mxu0
        %1354 = vmatprep.mubr.f32.mxu0 %v987
        %1355 = vmatmul.mubr.f32.gmra.mrb[0].mxu0 %v876
        %v1356 = vpop.f32.mrb[0].mxu0
        %v1357 = vadd.f32 0.0, %v1356
        %v1358 = vpop.f32.mrb[0].mxu0
        %1359 = vmatprep.mubr.f32.mxu0 %v990
        %1360 = vmatmul.mubr.f32.gmra.mrb[0].mxu0 %v878
        %v1361 = vpop.f32.mrb[0].mxu0
        %v1362 = vadd.f32 0.0, %v1361
        %v1363 = vpop.f32.mrb[0].mxu0
        %1364 = vmatprep.mubr.f32.mxu0 %v992
        %1365 = vmatmul.mubr.f32.gmra.mrb[0].mxu0 %v879
        %v1366 = vpop.f32.mrb[0].mxu0
        %v1367 = vadd.f32 0.0, %v1366
        %v1368 = vpop.f32.mrb[0].mxu0
        %1369 = vmatprep.mubr.f32.mxu0 %v995
        %1370 = vmatmul.mubr.f32.gmra.mrb[0].mxu0 %v881
        %v1371 = vpop.f32.mrb[0].mxu0
        %v1372 = vadd.f32 0.0, %v1371
        %v1373 = vpop.f32.mrb[0].mxu0
        %1374 = vmatprep.mubr.f32.mxu0 %v997
        %1375 = vmatmul.mubr.f32.gmra.mrb[0].mxu0 %v882
        %v1376 = vpop.f32.mrb[0].mxu0
        %v1377 = vadd.f32 0.0, %v1376
        %v1378 = vpop.f32.mrb[0].mxu0
        %1379 = vmatprep.mubr.f32.mxu0 %v1000
        %1380 = vmatmul.mubr.f32.gmra.mrb[0].mxu0 %v884
        %v1381 = vpop.f32.mrb[0].mxu0
        %v1382 = vadd.f32 0.0, %v1381
        %v1383 = vpop.f32.mrb[0].mxu0
        %1384 = vmatprep.mubr.f32.mxu0 %v1002
        %1385 = vmatmul.mubr.f32.gmra.mrb[0].mxu0 %v885
        %v1386 = vpop.f32.mrb[0].mxu0
        %v1387 = vadd.f32 0.0, %v1386
        %v1388 = vpop.f32.mrb[0].mxu0
        %1389 = vmatprep.mubr.f32.mxu0 %v1005
        %1390 = vmatmul.mubr.f32.gmra.mrb[0].mxu0 %v887
        %v1391 = vpop.f32.mrb[0].mxu0
        %v1392 = vadd.f32 0.0, %v1391
        %v1393 = vpop.f32.mrb[0].mxu0
        %1394 = vmatprep.mubr.f32.mxu0 %v1007
        %1395 = vmatmul.mubr.f32.gmra.mrb[0].mxu0 %v888
        %v1396 = vpop.f32.mrb[0].mxu0
        %v1397 = vadd.f32 0.0, %v1396
        %v1398 = vpop.f32.mrb[0].mxu0
        %1399 = vmatprep.mubr.f32.mxu0 %v1010
        %1400 = vmatmul.mubr.f32.gmra.mrb[0].mxu0 %v890
        %v1401 = vpop.f32.mrb[0].mxu0
        %v1402 = vadd.f32 0.0, %v1401
        %v1403 = vpop.f32.mrb[0].mxu0
        %1404 = vmatprep.mubr.f32.mxu0 %v1012
        %1405 = vmatmul.mubr.f32.gmra.mrb[0].mxu0 %v891
        %v1406 = vpop.f32.mrb[0].mxu0
        %v1407 = vadd.f32 0.0, %v1406
        %v1408 = vpop.f32.mrb[0].mxu0
        %1409 = vmatprep.mubr.f32.mxu0 %v1015
        %1410 = vmatmul.mubr.f32.gmra.mrb[0].mxu0 %v893
        %v1411 = vpop.f32.mrb[0].mxu0
        %v1412 = vadd.f32 0.0, %v1411
        %v1413 = vpop.f32.mrb[0].mxu0
        %1414 = vmatprep.mubr.f32.mxu0 %v1017
        %1415 = vmatmul.mubr.f32.gmra.mrb[0].mxu0 %v894
        %v1416 = vpop.f32.mrb[0].mxu0
        %v1417 = vadd.f32 0.0, %v1416
        %v1418 = vpop.f32.mrb[0].mxu0
        %1419 = vmatprep.mubr.f32.mxu0 %v1020
        %1420 = vmatmul.mubr.f32.gmra.mrb[0].mxu0 %v896
        %v1421 = vpop.f32.mrb[0].mxu0
        %v1422 = vadd.f32 0.0, %v1421
        %v1423 = vpop.f32.mrb[0].mxu0
        %1424 = vmatprep.mubr.f32.mxu0 %v1022
        %1425 = vmatmul.mubr.f32.gmra.mrb[0].mxu0 %v897
        %v1426 = vpop.f32.mrb[0].mxu0
        %v1427 = vadd.f32 0.0, %v1426
        %v1428 = vpop.f32.mrb[0].mxu0
        %1429 = vmatprep.mubr.f32.mxu0 %v1025
        %1430 = vmatmul.mubr.f32.gmra.mrb[0].mxu0 %v899
        %v1431 = vpop.f32.mrb[0].mxu0
        %v1432 = vadd.f32 0.0, %v1431
        %v1433 = vpop.f32.mrb[0].mxu0
        %1434 = vmatprep.mubr.f32.mxu0 %v1027
        %1435 = vmatmul.mubr.f32.gmra.mrb[0].mxu0 %v900
        %v1436 = vpop.f32.mrb[0].mxu0
        %v1437 = vadd.f32 0.0, %v1436
        %v1438 = vpop.f32.mrb[0].mxu0
        %1439 = vmatprep.mubr.f32.mxu0 %v1030
        %1440 = vmatmul.mubr.f32.gmra.mrb[0].mxu0 %v902
        %v1441 = vpop.f32.mrb[0].mxu0
        %v1442 = vadd.f32 0.0, %v1441
        %v1443 = vpop.f32.mrb[0].mxu0
        %1444 = vmatprep.mubr.f32.mxu0 %v1032
        %1445 = vmatmul.mubr.f32.gmra.mrb[0].mxu0 %v903
        %v1446 = vpop.f32.mrb[0].mxu0
        %v1447 = vadd.f32 0.0, %v1446
        %v1448 = vpop.f32.mrb[0].mxu0
        %1449 = vdwg.mxu0
        %1450 = vmatprep.subr.mxu0 0.0
        %1451 = vmatpush1.msra.mxu0 %v1209
        %1452 = vmatprep.subr.mxu0 0.0
        %1453 = vmatpush1.msra.mxu0 %v1210
        %1454 = vmatprep.subr.mxu0 0.0
        %1455 = vmatpush1.msra.mxu0 %v1211
        %1456 = vmatprep.subr.mxu0 0.0
        %1457 = vmatpush1.msra.mxu0 %v1212
        %1458 = vmatprep.subr.mxu0 0.0
        %1459 = vmatpush1.msra.mxu0 %v1213
        %1460 = vmatprep.subr.mxu0 0.0
        %1461 = vmatpush1.msra.mxu0 %v1214
        %1462 = vmatprep.subr.mxu0 0.0
        %1463 = vmatpush1.msra.mxu0 %v1215
        %1464 = vmatprep.subr.mxu0 0.0
        %1465 = vmatpush1.msra.mxu0 %v1216
        %1466 = vmatprep.subr.mxu0 0.0
        %1467 = vmatpush1.msra.mxu0 %v1217
        %1468 = vmatprep.subr.mxu0 0.0
        %1469 = vmatpush1.msra.mxu0 %v1218
        %1470 = vmatprep.subr.mxu0 0.0
        %1471 = vmatpush1.msra.mxu0 %v1219
        %1472 = vmatprep.subr.mxu0 0.0
        %1473 = vmatpush1.msra.mxu0 %v1220
        %1474 = vmatprep.subr.mxu0 0.0
        %1475 = vmatpush1.msra.mxu0 %v1221
        %1476 = vmatprep.subr.mxu0 0.0
        %1477 = vmatpush1.msra.mxu0 %v1222
        %1478 = vmatprep.subr.mxu0 0.0
        %1479 = vmatpush1.msra.mxu0 %v1223
        %1480 = vmatprep.subr.mxu0 0.0
        %1481 = vmatpush1.msra.mxu0 %v1224
        %1482 = vmatprep.subr.mxu0 0.0
        %1483 = vmatpush1.msra.mxu0 0.0
        %1484 = vmatprep.subr.mxu0 0.0
        %1485 = vmatpush1.msra.mxu0 0.0
        %1486 = vmatprep.subr.mxu0 0.0
        %1487 = vmatpush1.msra.mxu0 0.0
        %1488 = vmatprep.subr.mxu0 0.0
        %1489 = vmatpush1.msra.mxu0 0.0
        %1490 = vmatprep.subr.mxu0 0.0
        %1491 = vmatpush1.msra.mxu0 0.0
        %1492 = vmatprep.subr.mxu0 0.0
        %1493 = vmatpush1.msra.mxu0 0.0
        %1494 = vmatprep.subr.mxu0 0.0
        %1495 = vmatpush1.msra.mxu0 0.0
        %1496 = vmatprep.subr.mxu0 0.0
        %1497 = vmatpush1.msra.mxu0 0.0
        %1498 = vmatprep.subr.mxu0 0.0
        %1499 = vmatpush1.msra.mxu0 0.0
        %1500 = vmatprep.subr.mxu0 0.0
        %1501 = vmatpush1.msra.mxu0 0.0
        %1502 = vmatprep.subr.mxu0 0.0
        %1503 = vmatpush1.msra.mxu0 0.0
        %1504 = vmatprep.subr.mxu0 0.0
        %1505 = vmatpush1.msra.mxu0 0.0
        %1506 = vmatprep.subr.mxu0 0.0
        %1507 = vmatpush1.msra.mxu0 0.0
        %1508 = vmatprep.subr.mxu0 0.0
        %1509 = vmatpush1.msra.mxu0 0.0
        %1510 = vmatprep.subr.mxu0 0.0
        %1511 = vmatpush1.msra.mxu0 0.0
        %1512 = vmatprep.subr.mxu0 0.0
        %1513 = vmatpush1.msra.mxu0 0.0
        %1514 = vmatprep.mubr.f32.mxu0 0.0
        %1515 = vmatmul.mubr.f32.gmra.mrb[0].mxu0 %v1067
        %v1516 = vpop.f32.mrb[0].mxu0
        %v1517 = vadd.f32 %v1292, %v1516
        %v1518 = vpop.f32.mrb[0].mxu0
        %1519 = vmatprep.mubr.f32.mxu0 0.0
        %1520 = vmatmul.mubr.f32.gmra.mrb[0].mxu0 %v1069
        %v1521 = vpop.f32.mrb[0].mxu0
        %v1522 = vadd.f32 %v1297, %v1521
        %v1523 = vpop.f32.mrb[0].mxu0
        %1524 = vmatprep.mubr.f32.mxu0 0.0
        %1525 = vmatmul.mubr.f32.gmra.mrb[0].mxu0 %v1072
        %v1526 = vpop.f32.mrb[0].mxu0
        %v1527 = vadd.f32 %v1302, %v1526
        %v1528 = vpop.f32.mrb[0].mxu0
        %1529 = vmatprep.mubr.f32.mxu0 0.0
        %1530 = vmatmul.mubr.f32.gmra.mrb[0].mxu0 %v1074
        %v1531 = vpop.f32.mrb[0].mxu0
        %v1532 = vadd.f32 %v1307, %v1531
        %v1533 = vpop.f32.mrb[0].mxu0
        %1534 = vmatprep.mubr.f32.mxu0 0.0
        %1535 = vmatmul.mubr.f32.gmra.mrb[0].mxu0 %v1077
        %v1536 = vpop.f32.mrb[0].mxu0
        %v1537 = vadd.f32 %v1312, %v1536
        %v1538 = vpop.f32.mrb[0].mxu0
        %1539 = vmatprep.mubr.f32.mxu0 0.0
        %1540 = vmatmul.mubr.f32.gmra.mrb[0].mxu0 %v1079
        %v1541 = vpop.f32.mrb[0].mxu0
        %v1542 = vadd.f32 %v1317, %v1541
        %v1543 = vpop.f32.mrb[0].mxu0
        %1544 = vmatprep.mubr.f32.mxu0 0.0
        %1545 = vmatmul.mubr.f32.gmra.mrb[0].mxu0 %v1082
        %v1546 = vpop.f32.mrb[0].mxu0
        %v1547 = vadd.f32 %v1322, %v1546
        %v1548 = vpop.f32.mrb[0].mxu0
        %1549 = vmatprep.mubr.f32.mxu0 0.0
        %1550 = vmatmul.mubr.f32.gmra.mrb[0].mxu0 %v1084
        %v1551 = vpop.f32.mrb[0].mxu0
        %v1552 = vadd.f32 %v1327, %v1551
        %v1553 = vpop.f32.mrb[0].mxu0
        %1554 = vmatprep.mubr.f32.mxu0 0.0
        %1555 = vmatmul.mubr.f32.gmra.mrb[0].mxu0 %v1087
        %v1556 = vpop.f32.mrb[0].mxu0
        %v1557 = vadd.f32 %v1332, %v1556
        %v1558 = vpop.f32.mrb[0].mxu0
        %1559 = vmatprep.mubr.f32.mxu0 0.0
        %1560 = vmatmul.mubr.f32.gmra.mrb[0].mxu0 %v1089
        %v1561 = vpop.f32.mrb[0].mxu0
        %v1562 = vadd.f32 %v1337, %v1561
        %v1563 = vpop.f32.mrb[0].mxu0
        %1564 = vmatprep.mubr.f32.mxu0 0.0
        %1565 = vmatmul.mubr.f32.gmra.mrb[0].mxu0 %v1092
        %v1566 = vpop.f32.mrb[0].mxu0
        %v1567 = vadd.f32 %v1342, %v1566
        %v1568 = vpop.f32.mrb[0].mxu0
        %1569 = vmatprep.mubr.f32.mxu0 0.0
        %1570 = vmatmul.mubr.f32.gmra.mrb[0].mxu0 %v1094
        %v1571 = vpop.f32.mrb[0].mxu0
        %v1572 = vadd.f32 %v1347, %v1571
        %v1573 = vpop.f32.mrb[0].mxu0
        %1574 = vmatprep.mubr.f32.mxu0 0.0
        %1575 = vmatmul.mubr.f32.gmra.mrb[0].mxu0 %v1097
        %v1576 = vpop.f32.mrb[0].mxu0
        %v1577 = vadd.f32 %v1352, %v1576
        %v1578 = vpop.f32.mrb[0].mxu0
        %1579 = vmatprep.mubr.f32.mxu0 0.0
        %1580 = vmatmul.mubr.f32.gmra.mrb[0].mxu0 %v1099
        %v1581 = vpop.f32.mrb[0].mxu0
        %v1582 = vadd.f32 %v1357, %v1581
        %v1583 = vpop.f32.mrb[0].mxu0
        %1584 = vmatprep.mubr.f32.mxu0 0.0
        %1585 = vmatmul.mubr.f32.gmra.mrb[0].mxu0 %v1102
        %v1586 = vpop.f32.mrb[0].mxu0
        %v1587 = vadd.f32 %v1362, %v1586
        %v1588 = vpop.f32.mrb[0].mxu0
        %1589 = vmatprep.mubr.f32.mxu0 0.0
        %1590 = vmatmul.mubr.f32.gmra.mrb[0].mxu0 %v1104
        %v1591 = vpop.f32.mrb[0].mxu0
        %v1592 = vadd.f32 %v1367, %v1591
        %v1593 = vpop.f32.mrb[0].mxu0
        %1594 = vmatprep.mubr.f32.mxu0 0.0
        %1595 = vmatmul.mubr.f32.gmra.mrb[0].mxu0 %v1107
        %v1596 = vpop.f32.mrb[0].mxu0
        %v1597 = vadd.f32 %v1372, %v1596
        %v1598 = vpop.f32.mrb[0].mxu0
        %1599 = vmatprep.mubr.f32.mxu0 0.0
        %1600 = vmatmul.mubr.f32.gmra.mrb[0].mxu0 %v1109
        %v1601 = vpop.f32.mrb[0].mxu0
        %v1602 = vadd.f32 %v1377, %v1601
        %v1603 = vpop.f32.mrb[0].mxu0
        %1604 = vmatprep.mubr.f32.mxu0 0.0
        %1605 = vmatmul.mubr.f32.gmra.mrb[0].mxu0 %v1112
        %v1606 = vpop.f32.mrb[0].mxu0
        %v1607 = vadd.f32 %v1382, %v1606
        %v1608 = vpop.f32.mrb[0].mxu0
        %1609 = vmatprep.mubr.f32.mxu0 0.0
        %1610 = vmatmul.mubr.f32.gmra.mrb[0].mxu0 %v1114
        %v1611 = vpop.f32.mrb[0].mxu0
        %v1612 = vadd.f32 %v1387, %v1611
        %v1613 = vpop.f32.mrb[0].mxu0
        %1614 = vmatprep.mubr.f32.mxu0 0.0
        %1615 = vmatmul.mubr.f32.gmra.mrb[0].mxu0 %v1117
        %v1616 = vpop.f32.mrb[0].mxu0
        %v1617 = vadd.f32 %v1392, %v1616
        %v1618 = vpop.f32.mrb[0].mxu0
        %1619 = vmatprep.mubr.f32.mxu0 0.0
        %1620 = vmatmul.mubr.f32.gmra.mrb[0].mxu0 %v1119
        %v1621 = vpop.f32.mrb[0].mxu0
        %v1622 = vadd.f32 %v1397, %v1621
        %v1623 = vpop.f32.mrb[0].mxu0
        %1624 = vmatprep.mubr.f32.mxu0 0.0
        %1625 = vmatmul.mubr.f32.gmra.mrb[0].mxu0 %v1122
        %v1626 = vpop.f32.mrb[0].mxu0
        %v1627 = vadd.f32 %v1402, %v1626
        %v1628 = vpop.f32.mrb[0].mxu0
        %1629 = vmatprep.mubr.f32.mxu0 0.0
        %1630 = vmatmul.mubr.f32.gmra.mrb[0].mxu0 %v1124
        %v1631 = vpop.f32.mrb[0].mxu0
        %v1632 = vadd.f32 %v1407, %v1631
        %v1633 = vpop.f32.mrb[0].mxu0
        %1634 = vmatprep.mubr.f32.mxu0 0.0
        %1635 = vmatmul.mubr.f32.gmra.mrb[0].mxu0 %v1127
        %v1636 = vpop.f32.mrb[0].mxu0
        %v1637 = vadd.f32 %v1412, %v1636
        %v1638 = vpop.f32.mrb[0].mxu0
        %1639 = vmatprep.mubr.f32.mxu0 0.0
        %1640 = vmatmul.mubr.f32.gmra.mrb[0].mxu0 %v1129
        %v1641 = vpop.f32.mrb[0].mxu0
        %v1642 = vadd.f32 %v1417, %v1641
        %v1643 = vpop.f32.mrb[0].mxu0
        %1644 = vmatprep.mubr.f32.mxu0 0.0
        %1645 = vmatmul.mubr.f32.gmra.mrb[0].mxu0 %v1132
        %v1646 = vpop.f32.mrb[0].mxu0
        %v1647 = vadd.f32 %v1422, %v1646
        %v1648 = vpop.f32.mrb[0].mxu0
        %1649 = vmatprep.mubr.f32.mxu0 0.0
        %1650 = vmatmul.mubr.f32.gmra.mrb[0].mxu0 %v1134
        %v1651 = vpop.f32.mrb[0].mxu0
        %v1652 = vadd.f32 %v1427, %v1651
        %v1653 = vpop.f32.mrb[0].mxu0
        %1654 = vmatprep.mubr.f32.mxu0 0.0
        %1655 = vmatmul.mubr.f32.gmra.mrb[0].mxu0 %v1137
        %v1656 = vpop.f32.mrb[0].mxu0
        %v1657 = vadd.f32 %v1432, %v1656
        %v1658 = vpop.f32.mrb[0].mxu0
        %1659 = vmatprep.mubr.f32.mxu0 0.0
        %1660 = vmatmul.mubr.f32.gmra.mrb[0].mxu0 %v1139
        %v1661 = vpop.f32.mrb[0].mxu0
        %v1662 = vadd.f32 %v1437, %v1661
        %v1663 = vpop.f32.mrb[0].mxu0
        %1664 = vmatprep.mubr.f32.mxu0 0.0
        %1665 = vmatmul.mubr.f32.gmra.mrb[0].mxu0 %v1142
        %v1666 = vpop.f32.mrb[0].mxu0
        %v1667 = vadd.f32 %v1442, %v1666
        %v1668 = vpop.f32.mrb[0].mxu0
        %1669 = vmatprep.mubr.f32.mxu0 0.0
        %1670 = vmatmul.mubr.f32.gmra.mrb[0].mxu0 %v1144
        %v1671 = vpop.f32.mrb[0].mxu0
        %v1672 = vadd.f32 %v1447, %v1671
        %v1673 = vpop.f32.mrb[0].mxu0
        %1674 = vdwg.mxu0
        %1675 = vmatprep.subr.mxu0 0.0
        %1676 = vmatpush1.msra.mxu0 %v761
        %1677 = vmatprep.subr.mxu0 0.0
        %1678 = vmatpush1.msra.mxu0 %v762
        %1679 = vmatprep.subr.mxu0 0.0
        %1680 = vmatpush1.msra.mxu0 %v763
        %1681 = vmatprep.subr.mxu0 0.0
        %1682 = vmatpush1.msra.mxu0 %v764
        %1683 = vmatprep.subr.mxu0 0.0
        %1684 = vmatpush1.msra.mxu0 %v765
        %1685 = vmatprep.subr.mxu0 0.0
        %1686 = vmatpush1.msra.mxu0 %v766
        %1687 = vmatprep.subr.mxu0 0.0
        %1688 = vmatpush1.msra.mxu0 %v767
        %1689 = vmatprep.subr.mxu0 0.0
        %1690 = vmatpush1.msra.mxu0 %v768
        %1691 = vmatprep.subr.mxu0 0.0
        %1692 = vmatpush1.msra.mxu0 %v769
        %1693 = vmatprep.subr.mxu0 0.0
        %1694 = vmatpush1.msra.mxu0 %v770
        %1695 = vmatprep.subr.mxu0 0.0
        %1696 = vmatpush1.msra.mxu0 %v771
        %1697 = vmatprep.subr.mxu0 0.0
        %1698 = vmatpush1.msra.mxu0 %v772
        %1699 = vmatprep.subr.mxu0 0.0
        %1700 = vmatpush1.msra.mxu0 %v773
        %1701 = vmatprep.subr.mxu0 0.0
        %1702 = vmatpush1.msra.mxu0 %v774
        %1703 = vmatprep.subr.mxu0 0.0
        %1704 = vmatpush1.msra.mxu0 %v775
        %1705 = vmatprep.subr.mxu0 0.0
        %1706 = vmatpush1.msra.mxu0 %v776
        %1707 = vmatprep.subr.mxu0 0.0
        %1708 = vmatpush1.msra.mxu0 %v777
        %1709 = vmatprep.subr.mxu0 0.0
        %1710 = vmatpush1.msra.mxu0 %v778
        %1711 = vmatprep.subr.mxu0 0.0
        %1712 = vmatpush1.msra.mxu0 %v779
        %1713 = vmatprep.subr.mxu0 0.0
        %1714 = vmatpush1.msra.mxu0 %v780
        %1715 = vmatprep.subr.mxu0 0.0
        %1716 = vmatpush1.msra.mxu0 %v781
        %1717 = vmatprep.subr.mxu0 0.0
        %1718 = vmatpush1.msra.mxu0 %v782
        %1719 = vmatprep.subr.mxu0 0.0
        %1720 = vmatpush1.msra.mxu0 %v783
        %1721 = vmatprep.subr.mxu0 0.0
        %1722 = vmatpush1.msra.mxu0 %v784
        %1723 = vmatprep.subr.mxu0 0.0
        %1724 = vmatpush1.msra.mxu0 %v785
        %1725 = vmatprep.subr.mxu0 0.0
        %1726 = vmatpush1.msra.mxu0 %v786
        %1727 = vmatprep.subr.mxu0 0.0
        %1728 = vmatpush1.msra.mxu0 %v787
        %1729 = vmatprep.subr.mxu0 0.0
        %1730 = vmatpush1.msra.mxu0 %v788
        %1731 = vmatprep.subr.mxu0 0.0
        %1732 = vmatpush1.msra.mxu0 %v789
        %1733 = vmatprep.subr.mxu0 0.0
        %1734 = vmatpush1.msra.mxu0 %v790
        %1735 = vmatprep.subr.mxu0 0.0
        %1736 = vmatpush1.msra.mxu0 %v791
        %1737 = vmatprep.subr.mxu0 0.0
        %1738 = vmatpush1.msra.mxu0 %v792
        %1739 = vmatprep.mubr.f32.mxu0 %v538
        %1740 = vmatmul.mubr.f32.gmra.mrb[0].mxu0 %v439
        %v1741 = vpop.f32.mrb[0].mxu0
        %v1742 = vadd.f32 %v1517, %v1741
        %v1743 = vpop.f32.mrb[0].mxu0
        %1744 = vmatprep.mubr.f32.mxu0 %v540
        %1745 = vmatmul.mubr.f32.gmra.mrb[0].mxu0 %v440
        %v1746 = vpop.f32.mrb[0].mxu0
        %v1747 = vadd.f32 %v1522, %v1746
        %v1748 = vpop.f32.mrb[0].mxu0
        %1749 = vmatprep.mubr.f32.mxu0 %v543
        %1750 = vmatmul.mubr.f32.gmra.mrb[0].mxu0 %v442
        %v1751 = vpop.f32.mrb[0].mxu0
        %v1752 = vadd.f32 %v1527, %v1751
        %v1753 = vpop.f32.mrb[0].mxu0
        %1754 = vmatprep.mubr.f32.mxu0 %v545
        %1755 = vmatmul.mubr.f32.gmra.mrb[0].mxu0 %v443
        %v1756 = vpop.f32.mrb[0].mxu0
        %v1757 = vadd.f32 %v1532, %v1756
        %v1758 = vpop.f32.mrb[0].mxu0
        %1759 = vmatprep.mubr.f32.mxu0 %v548
        %1760 = vmatmul.mubr.f32.gmra.mrb[0].mxu0 %v445
        %v1761 = vpop.f32.mrb[0].mxu0
        %v1762 = vadd.f32 %v1537, %v1761
        %v1763 = vpop.f32.mrb[0].mxu0
        %1764 = vmatprep.mubr.f32.mxu0 %v550
        %1765 = vmatmul.mubr.f32.gmra.mrb[0].mxu0 %v446
        %v1766 = vpop.f32.mrb[0].mxu0
        %v1767 = vadd.f32 %v1542, %v1766
        %v1768 = vpop.f32.mrb[0].mxu0
        %1769 = vmatprep.mubr.f32.mxu0 %v553
        %1770 = vmatmul.mubr.f32.gmra.mrb[0].mxu0 %v448
        %v1771 = vpop.f32.mrb[0].mxu0
        %v1772 = vadd.f32 %v1547, %v1771
        %v1773 = vpop.f32.mrb[0].mxu0
        %1774 = vmatprep.mubr.f32.mxu0 %v555
        %1775 = vmatmul.mubr.f32.gmra.mrb[0].mxu0 %v449
        %v1776 = vpop.f32.mrb[0].mxu0
        %v1777 = vadd.f32 %v1552, %v1776
        %v1778 = vpop.f32.mrb[0].mxu0
        %1779 = vmatprep.mubr.f32.mxu0 %v558
        %1780 = vmatmul.mubr.f32.gmra.mrb[0].mxu0 %v451
        %v1781 = vpop.f32.mrb[0].mxu0
        %v1782 = vadd.f32 %v1557, %v1781
        %v1783 = vpop.f32.mrb[0].mxu0
        %1784 = vmatprep.mubr.f32.mxu0 %v560
        %1785 = vmatmul.mubr.f32.gmra.mrb[0].mxu0 %v452
        %v1786 = vpop.f32.mrb[0].mxu0
        %v1787 = vadd.f32 %v1562, %v1786
        %v1788 = vpop.f32.mrb[0].mxu0
        %1789 = vmatprep.mubr.f32.mxu0 %v563
        %1790 = vmatmul.mubr.f32.gmra.mrb[0].mxu0 %v454
        %v1791 = vpop.f32.mrb[0].mxu0
        %v1792 = vadd.f32 %v1567, %v1791
        %v1793 = vpop.f32.mrb[0].mxu0
        %1794 = vmatprep.mubr.f32.mxu0 %v565
        %1795 = vmatmul.mubr.f32.gmra.mrb[0].mxu0 %v455
        %v1796 = vpop.f32.mrb[0].mxu0
        %v1797 = vadd.f32 %v1572, %v1796
        %v1798 = vpop.f32.mrb[0].mxu0
        %1799 = vmatprep.mubr.f32.mxu0 %v568
        %1800 = vmatmul.mubr.f32.gmra.mrb[0].mxu0 %v457
        %v1801 = vpop.f32.mrb[0].mxu0
        %v1802 = vadd.f32 %v1577, %v1801
        %v1803 = vpop.f32.mrb[0].mxu0
        %1804 = vmatprep.mubr.f32.mxu0 %v570
        %1805 = vmatmul.mubr.f32.gmra.mrb[0].mxu0 %v458
        %v1806 = vpop.f32.mrb[0].mxu0
        %v1807 = vadd.f32 %v1582, %v1806
        %v1808 = vpop.f32.mrb[0].mxu0
        %1809 = vmatprep.mubr.f32.mxu0 %v573
        %1810 = vmatmul.mubr.f32.gmra.mrb[0].mxu0 %v460
        %v1811 = vpop.f32.mrb[0].mxu0
        %v1812 = vadd.f32 %v1587, %v1811
        %v1813 = vpop.f32.mrb[0].mxu0
        %1814 = vmatprep.mubr.f32.mxu0 %v575
        %1815 = vmatmul.mubr.f32.gmra.mrb[0].mxu0 %v461
        %v1816 = vpop.f32.mrb[0].mxu0
        %v1817 = vadd.f32 %v1592, %v1816
        %v1818 = vpop.f32.mrb[0].mxu0
        %1819 = vmatprep.mubr.f32.mxu0 %v578
        %1820 = vmatmul.mubr.f32.gmra.mrb[0].mxu0 %v463
        %v1821 = vpop.f32.mrb[0].mxu0
        %v1822 = vadd.f32 %v1597, %v1821
        %v1823 = vpop.f32.mrb[0].mxu0
        %1824 = vmatprep.mubr.f32.mxu0 %v580
        %1825 = vmatmul.mubr.f32.gmra.mrb[0].mxu0 %v464
        %v1826 = vpop.f32.mrb[0].mxu0
        %v1827 = vadd.f32 %v1602, %v1826
        %v1828 = vpop.f32.mrb[0].mxu0
        %1829 = vmatprep.mubr.f32.mxu0 %v583
        %1830 = vmatmul.mubr.f32.gmra.mrb[0].mxu0 %v466
        %v1831 = vpop.f32.mrb[0].mxu0
        %v1832 = vadd.f32 %v1607, %v1831
        %v1833 = vpop.f32.mrb[0].mxu0
        %1834 = vmatprep.mubr.f32.mxu0 %v585
        %1835 = vmatmul.mubr.f32.gmra.mrb[0].mxu0 %v467
        %v1836 = vpop.f32.mrb[0].mxu0
        %v1837 = vadd.f32 %v1612, %v1836
        %v1838 = vpop.f32.mrb[0].mxu0
        %1839 = vmatprep.mubr.f32.mxu0 %v588
        %1840 = vmatmul.mubr.f32.gmra.mrb[0].mxu0 %v469
        %v1841 = vpop.f32.mrb[0].mxu0
        %v1842 = vadd.f32 %v1617, %v1841
        %v1843 = vpop.f32.mrb[0].mxu0
        %1844 = vmatprep.mubr.f32.mxu0 %v590
        %1845 = vmatmul.mubr.f32.gmra.mrb[0].mxu0 %v470
        %v1846 = vpop.f32.mrb[0].mxu0
        %v1847 = vadd.f32 %v1622, %v1846
        %v1848 = vpop.f32.mrb[0].mxu0
        %1849 = vmatprep.mubr.f32.mxu0 %v593
        %1850 = vmatmul.mubr.f32.gmra.mrb[0].mxu0 %v472
        %v1851 = vpop.f32.mrb[0].mxu0
        %v1852 = vadd.f32 %v1627, %v1851
        %v1853 = vpop.f32.mrb[0].mxu0
        %1854 = vmatprep.mubr.f32.mxu0 %v595
        %1855 = vmatmul.mubr.f32.gmra.mrb[0].mxu0 %v473
        %v1856 = vpop.f32.mrb[0].mxu0
        %v1857 = vadd.f32 %v1632, %v1856
        %v1858 = vpop.f32.mrb[0].mxu0
        %1859 = vmatprep.mubr.f32.mxu0 %v598
        %1860 = vmatmul.mubr.f32.gmra.mrb[0].mxu0 %v475
        %v1861 = vpop.f32.mrb[0].mxu0
        %v1862 = vadd.f32 %v1637, %v1861
        %v1863 = vpop.f32.mrb[0].mxu0
        %1864 = vmatprep.mubr.f32.mxu0 %v600
        %1865 = vmatmul.mubr.f32.gmra.mrb[0].mxu0 %v476
        %v1866 = vpop.f32.mrb[0].mxu0
        %v1867 = vadd.f32 %v1642, %v1866
        %v1868 = vpop.f32.mrb[0].mxu0
        %1869 = vmatprep.mubr.f32.mxu0 %v603
        %1870 = vmatmul.mubr.f32.gmra.mrb[0].mxu0 %v478
        %v1871 = vpop.f32.mrb[0].mxu0
        %v1872 = vadd.f32 %v1647, %v1871
        %v1873 = vpop.f32.mrb[0].mxu0
        %1874 = vmatprep.mubr.f32.mxu0 %v605
        %1875 = vmatmul.mubr.f32.gmra.mrb[0].mxu0 %v479
        %v1876 = vpop.f32.mrb[0].mxu0
        %v1877 = vadd.f32 %v1652, %v1876
        %v1878 = vpop.f32.mrb[0].mxu0
        %1879 = vmatprep.mubr.f32.mxu0 %v608
        %1880 = vmatmul.mubr.f32.gmra.mrb[0].mxu0 %v481
        %v1881 = vpop.f32.mrb[0].mxu0
        %v1882 = vadd.f32 %v1657, %v1881
        %v1883 = vpop.f32.mrb[0].mxu0
        %1884 = vmatprep.mubr.f32.mxu0 %v610
        %1885 = vmatmul.mubr.f32.gmra.mrb[0].mxu0 %v482
        %v1886 = vpop.f32.mrb[0].mxu0
        %v1887 = vadd.f32 %v1662, %v1886
        %v1888 = vpop.f32.mrb[0].mxu0
        %1889 = vmatprep.mubr.f32.mxu0 %v613
        %1890 = vmatmul.mubr.f32.gmra.mrb[0].mxu0 %v484
        %v1891 = vpop.f32.mrb[0].mxu0
        %v1892 = vadd.f32 %v1667, %v1891
        %v1893 = vpop.f32.mrb[0].mxu0
        %1894 = vmatprep.mubr.f32.mxu0 %v615
        %1895 = vmatmul.mubr.f32.gmra.mrb[0].mxu0 %v485
        %v1896 = vpop.f32.mrb[0].mxu0
        %v1897 = vadd.f32 %v1672, %v1896
        %v1898 = vpop.f32.mrb[0].mxu0
        %1899 = vdwg.mxu0
        %1900 = vmatprep.subr.mxu0 0.0
        %1901 = vmatpush1.msra.mxu0 %v793
        %1902 = vmatprep.subr.mxu0 0.0
        %1903 = vmatpush1.msra.mxu0 %v794
        %1904 = vmatprep.subr.mxu0 0.0
        %1905 = vmatpush1.msra.mxu0 %v795
        %1906 = vmatprep.subr.mxu0 0.0
        %1907 = vmatpush1.msra.mxu0 %v796
        %1908 = vmatprep.subr.mxu0 0.0
        %1909 = vmatpush1.msra.mxu0 %v797
        %1910 = vmatprep.subr.mxu0 0.0
        %1911 = vmatpush1.msra.mxu0 %v798
        %1912 = vmatprep.subr.mxu0 0.0
        %1913 = vmatpush1.msra.mxu0 %v799
        %1914 = vmatprep.subr.mxu0 0.0
        %1915 = vmatpush1.msra.mxu0 %v800
        %1916 = vmatprep.subr.mxu0 0.0
        %1917 = vmatpush1.msra.mxu0 %v801
        %1918 = vmatprep.subr.mxu0 0.0
        %1919 = vmatpush1.msra.mxu0 %v802
        %1920 = vmatprep.subr.mxu0 0.0
        %1921 = vmatpush1.msra.mxu0 %v803
        %1922 = vmatprep.subr.mxu0 0.0
        %1923 = vmatpush1.msra.mxu0 %v804
        %1924 = vmatprep.subr.mxu0 0.0
        %1925 = vmatpush1.msra.mxu0 %v805
        %1926 = vmatprep.subr.mxu0 0.0
        %1927 = vmatpush1.msra.mxu0 %v806
        %1928 = vmatprep.subr.mxu0 0.0
        %1929 = vmatpush1.msra.mxu0 %v807
        %1930 = vmatprep.subr.mxu0 0.0
        %1931 = vmatpush1.msra.mxu0 %v808
        %1932 = vmatprep.subr.mxu0 0.0
        %1933 = vmatpush1.msra.mxu0 0.0
        %1934 = vmatprep.subr.mxu0 0.0
        %1935 = vmatpush1.msra.mxu0 0.0
        %1936 = vmatprep.subr.mxu0 0.0
        %1937 = vmatpush1.msra.mxu0 0.0
        %1938 = vmatprep.subr.mxu0 0.0
        %1939 = vmatpush1.msra.mxu0 0.0
        %1940 = vmatprep.subr.mxu0 0.0
        %1941 = vmatpush1.msra.mxu0 0.0
        %1942 = vmatprep.subr.mxu0 0.0
        %1943 = vmatpush1.msra.mxu0 0.0
        %1944 = vmatprep.subr.mxu0 0.0
        %1945 = vmatpush1.msra.mxu0 0.0
        %1946 = vmatprep.subr.mxu0 0.0
        %1947 = vmatpush1.msra.mxu0 0.0
        %1948 = vmatprep.subr.mxu0 0.0
        %1949 = vmatpush1.msra.mxu0 0.0
        %1950 = vmatprep.subr.mxu0 0.0
        %1951 = vmatpush1.msra.mxu0 0.0
        %1952 = vmatprep.subr.mxu0 0.0
        %1953 = vmatpush1.msra.mxu0 0.0
        %1954 = vmatprep.subr.mxu0 0.0
        %1955 = vmatpush1.msra.mxu0 0.0
        %1956 = vmatprep.subr.mxu0 0.0
        %1957 = vmatpush1.msra.mxu0 0.0
        %1958 = vmatprep.subr.mxu0 0.0
        %1959 = vmatpush1.msra.mxu0 0.0
        %1960 = vmatprep.subr.mxu0 0.0
        %1961 = vmatpush1.msra.mxu0 0.0
        %1962 = vmatprep.subr.mxu0 0.0
        %1963 = vmatpush1.msra.mxu0 0.0
        %1964 = vmatprep.mubr.f32.mxu0 0.0
        %1965 = vmatmul.mubr.f32.gmra.mrb[0].mxu0 %v651
        %v1966 = vpop.f32.mrb[0].mxu0
        %v1967 = vadd.f32 %v1742, %v1966
        %v1968 = vpop.f32.mrb[0].mxu0
        %1969 = vmatprep.mubr.f32.mxu0 0.0
        %1970 = vmatmul.mubr.f32.gmra.mrb[0].mxu0 %v653
        %v1971 = vpop.f32.mrb[0].mxu0
        %v1972 = vadd.f32 %v1747, %v1971
        %v1973 = vpop.f32.mrb[0].mxu0
        %1974 = vmatprep.mubr.f32.mxu0 0.0
        %1975 = vmatmul.mubr.f32.gmra.mrb[0].mxu0 %v656
        %v1976 = vpop.f32.mrb[0].mxu0
        %v1977 = vadd.f32 %v1752, %v1976
        %v1978 = vpop.f32.mrb[0].mxu0
        %1979 = vmatprep.mubr.f32.mxu0 0.0
        %1980 = vmatmul.mubr.f32.gmra.mrb[0].mxu0 %v658
        %v1981 = vpop.f32.mrb[0].mxu0
        %v1982 = vadd.f32 %v1757, %v1981
        %v1983 = vpop.f32.mrb[0].mxu0
        %1984 = vmatprep.mubr.f32.mxu0 0.0
        %1985 = vmatmul.mubr.f32.gmra.mrb[0].mxu0 %v661
        %v1986 = vpop.f32.mrb[0].mxu0
        %v1987 = vadd.f32 %v1762, %v1986
        %v1988 = vpop.f32.mrb[0].mxu0
        %1989 = vmatprep.mubr.f32.mxu0 0.0
        %1990 = vmatmul.mubr.f32.gmra.mrb[0].mxu0 %v663
        %v1991 = vpop.f32.mrb[0].mxu0
        %v1992 = vadd.f32 %v1767, %v1991
        %v1993 = vpop.f32.mrb[0].mxu0
        %1994 = vmatprep.mubr.f32.mxu0 0.0
        %1995 = vmatmul.mubr.f32.gmra.mrb[0].mxu0 %v666
        %v1996 = vpop.f32.mrb[0].mxu0
        %v1997 = vadd.f32 %v1772, %v1996
        %v1998 = vpop.f32.mrb[0].mxu0
        %1999 = vmatprep.mubr.f32.mxu0 0.0
        %2000 = vmatmul.mubr.f32.gmra.mrb[0].mxu0 %v668
        %v2001 = vpop.f32.mrb[0].mxu0
        %v2002 = vadd.f32 %v1777, %v2001
        %v2003 = vpop.f32.mrb[0].mxu0
        %2004 = vmatprep.mubr.f32.mxu0 0.0
        %2005 = vmatmul.mubr.f32.gmra.mrb[0].mxu0 %v671
        %v2006 = vpop.f32.mrb[0].mxu0
        %v2007 = vadd.f32 %v1782, %v2006
        %v2008 = vpop.f32.mrb[0].mxu0
        %2009 = vmatprep.mubr.f32.mxu0 0.0
        %2010 = vmatmul.mubr.f32.gmra.mrb[0].mxu0 %v673
        %v2011 = vpop.f32.mrb[0].mxu0
        %v2012 = vadd.f32 %v1787, %v2011
        %v2013 = vpop.f32.mrb[0].mxu0
        %2014 = vmatprep.mubr.f32.mxu0 0.0
        %2015 = vmatmul.mubr.f32.gmra.mrb[0].mxu0 %v676
        %v2016 = vpop.f32.mrb[0].mxu0
        %v2017 = vadd.f32 %v1792, %v2016
        %v2018 = vpop.f32.mrb[0].mxu0
        %2019 = vmatprep.mubr.f32.mxu0 0.0
        %2020 = vmatmul.mubr.f32.gmra.mrb[0].mxu0 %v678
        %v2021 = vpop.f32.mrb[0].mxu0
        %v2022 = vadd.f32 %v1797, %v2021
        %v2023 = vpop.f32.mrb[0].mxu0
        %2024 = vmatprep.mubr.f32.mxu0 0.0
        %2025 = vmatmul.mubr.f32.gmra.mrb[0].mxu0 %v681
        %v2026 = vpop.f32.mrb[0].mxu0
        %v2027 = vadd.f32 %v1802, %v2026
        %v2028 = vpop.f32.mrb[0].mxu0
        %2029 = vmatprep.mubr.f32.mxu0 0.0
        %2030 = vmatmul.mubr.f32.gmra.mrb[0].mxu0 %v683
        %v2031 = vpop.f32.mrb[0].mxu0
        %v2032 = vadd.f32 %v1807, %v2031
        %v2033 = vpop.f32.mrb[0].mxu0
        %2034 = vmatprep.mubr.f32.mxu0 0.0
        %2035 = vmatmul.mubr.f32.gmra.mrb[0].mxu0 %v686
        %v2036 = vpop.f32.mrb[0].mxu0
        %v2037 = vadd.f32 %v1812, %v2036
        %v2038 = vpop.f32.mrb[0].mxu0
        %2039 = vmatprep.mubr.f32.mxu0 0.0
        %2040 = vmatmul.mubr.f32.gmra.mrb[0].mxu0 %v688
        %v2041 = vpop.f32.mrb[0].mxu0
        %v2042 = vadd.f32 %v1817, %v2041
        %v2043 = vpop.f32.mrb[0].mxu0
        %2044 = vmatprep.mubr.f32.mxu0 0.0
        %2045 = vmatmul.mubr.f32.gmra.mrb[0].mxu0 %v691
        %v2046 = vpop.f32.mrb[0].mxu0
        %v2047 = vadd.f32 %v1822, %v2046
        %v2048 = vpop.f32.mrb[0].mxu0
        %2049 = vmatprep.mubr.f32.mxu0 0.0
        %2050 = vmatmul.mubr.f32.gmra.mrb[0].mxu0 %v693
        %v2051 = vpop.f32.mrb[0].mxu0
        %v2052 = vadd.f32 %v1827, %v2051
        %v2053 = vpop.f32.mrb[0].mxu0
        %2054 = vmatprep.mubr.f32.mxu0 0.0
        %2055 = vmatmul.mubr.f32.gmra.mrb[0].mxu0 %v696
        %v2056 = vpop.f32.mrb[0].mxu0
        %v2057 = vadd.f32 %v1832, %v2056
        %v2058 = vpop.f32.mrb[0].mxu0
        %2059 = vmatprep.mubr.f32.mxu0 0.0
        %2060 = vmatmul.mubr.f32.gmra.mrb[0].mxu0 %v698
        %v2061 = vpop.f32.mrb[0].mxu0
        %v2062 = vadd.f32 %v1837, %v2061
        %v2063 = vpop.f32.mrb[0].mxu0
        %2064 = vmatprep.mubr.f32.mxu0 0.0
        %2065 = vmatmul.mubr.f32.gmra.mrb[0].mxu0 %v701
        %v2066 = vpop.f32.mrb[0].mxu0
        %v2067 = vadd.f32 %v1842, %v2066
        %v2068 = vpop.f32.mrb[0].mxu0
        %2069 = vmatprep.mubr.f32.mxu0 0.0
        %2070 = vmatmul.mubr.f32.gmra.mrb[0].mxu0 %v703
        %v2071 = vpop.f32.mrb[0].mxu0
        %v2072 = vadd.f32 %v1847, %v2071
        %v2073 = vpop.f32.mrb[0].mxu0
        %2074 = vmatprep.mubr.f32.mxu0 0.0
        %2075 = vmatmul.mubr.f32.gmra.mrb[0].mxu0 %v706
        %v2076 = vpop.f32.mrb[0].mxu0
        %v2077 = vadd.f32 %v1852, %v2076
        %v2078 = vpop.f32.mrb[0].mxu0
        %2079 = vmatprep.mubr.f32.mxu0 0.0
        %2080 = vmatmul.mubr.f32.gmra.mrb[0].mxu0 %v708
        %v2081 = vpop.f32.mrb[0].mxu0
        %v2082 = vadd.f32 %v1857, %v2081
        %v2083 = vpop.f32.mrb[0].mxu0
        %2084 = vmatprep.mubr.f32.mxu0 0.0
        %2085 = vmatmul.mubr.f32.gmra.mrb[0].mxu0 %v711
        %v2086 = vpop.f32.mrb[0].mxu0
        %v2087 = vadd.f32 %v1862, %v2086
        %v2088 = vpop.f32.mrb[0].mxu0
        %2089 = vmatprep.mubr.f32.mxu0 0.0
        %2090 = vmatmul.mubr.f32.gmra.mrb[0].mxu0 %v713
        %v2091 = vpop.f32.mrb[0].mxu0
        %v2092 = vadd.f32 %v1867, %v2091
        %v2093 = vpop.f32.mrb[0].mxu0
        %2094 = vmatprep.mubr.f32.mxu0 0.0
        %2095 = vmatmul.mubr.f32.gmra.mrb[0].mxu0 %v716
        %v2096 = vpop.f32.mrb[0].mxu0
        %v2097 = vadd.f32 %v1872, %v2096
        %v2098 = vpop.f32.mrb[0].mxu0
        %2099 = vmatprep.mubr.f32.mxu0 0.0
        %2100 = vmatmul.mubr.f32.gmra.mrb[0].mxu0 %v718
        %v2101 = vpop.f32.mrb[0].mxu0
        %v2102 = vadd.f32 %v1877, %v2101
        %v2103 = vpop.f32.mrb[0].mxu0
        %2104 = vmatprep.mubr.f32.mxu0 0.0
        %2105 = vmatmul.mubr.f32.gmra.mrb[0].mxu0 %v721
        %v2106 = vpop.f32.mrb[0].mxu0
        %v2107 = vadd.f32 %v1882, %v2106
        %v2108 = vpop.f32.mrb[0].mxu0
        %2109 = vmatprep.mubr.f32.mxu0 0.0
        %2110 = vmatmul.mubr.f32.gmra.mrb[0].mxu0 %v723
        %v2111 = vpop.f32.mrb[0].mxu0
        %v2112 = vadd.f32 %v1887, %v2111
        %v2113 = vpop.f32.mrb[0].mxu0
        %2114 = vmatprep.mubr.f32.mxu0 0.0
        %2115 = vmatmul.mubr.f32.gmra.mrb[0].mxu0 %v726
        %v2116 = vpop.f32.mrb[0].mxu0
        %v2117 = vadd.f32 %v1892, %v2116
        %v2118 = vpop.f32.mrb[0].mxu0
        %2119 = vmatprep.mubr.f32.mxu0 0.0
        %2120 = vmatmul.mubr.f32.gmra.mrb[0].mxu0 %v728
        %v2121 = vpop.f32.mrb[0].mxu0
        %v2122 = vadd.f32 %v1897, %v2121
        %v2123 = vpop.f32.mrb[0].mxu0
        %2124 = vdwg.mxu0
        %s2125 = scalar_lea.vmem [#allocation2], 48
        %v2126 = vld [vmem:[%s2125] sm:$0xff]
        %v2127 = vld [vmem:[%s2125 + $0x8] sm:$0xff]
        %v2128 = vld [vmem:[%s2125 + $0x10] sm:$0x3]
        %v2129 = vld [vmem:[%s2125 + $0x18] sm:$0xff]
        %v2130 = vld [vmem:[%s2125 + $0x20] sm:$0xff]
        %v2131 = vld [vmem:[%s2125 + $0x28] sm:$0x3]
        %v2132 = vld [vmem:[%s2125 + $0x30] sm:$0xff]
        %v2133 = vld [vmem:[%s2125 + $0x38] sm:$0xff]
        %v2134 = vld [vmem:[%s2125 + $0x40] sm:$0x3]
        %v2135 = vld [vmem:[%s2125 + $0x48] sm:$0xff]
        %v2136 = vld [vmem:[%s2125 + $0x50] sm:$0xff]
        %v2137 = vld [vmem:[%s2125 + $0x58] sm:$0x3]
        %v2138 = vld [vmem:[%s2125 + $0x60] sm:$0xff]
        %v2139 = vld [vmem:[%s2125 + $0x68] sm:$0xff]
        %v2140 = vld [vmem:[%s2125 + $0x70] sm:$0x3]
        %v2141 = vld [vmem:[%s2125 + $0x78] sm:$0xff]
        %v2142 = vld [vmem:[%s2125 + $0x80] sm:$0xff]
        %v2143 = vld [vmem:[%s2125 + $0x88] sm:$0x3]
        %v2144 = vld [vmem:[%s2125 + $0x90] sm:$0xff]
        %v2145 = vld [vmem:[%s2125 + $0x98] sm:$0xff]
        %v2146 = vld [vmem:[%s2125 + $0xa0] sm:$0x3]
        %v2147 = vld [vmem:[%s2125 + $0xa8] sm:$0xff]
        %v2148 = vld [vmem:[%s2125 + $0xb0] sm:$0xff]
        %v2149 = vld [vmem:[%s2125 + $0xb8] sm:$0x3]
        %v2150 = vld [vmem:[%s2125 + $0xc0] sm:$0xff]
        %v2151 = vld [vmem:[%s2125 + $0xc8] sm:$0xff]
        %v2152 = vld [vmem:[%s2125 + $0xd0] sm:$0x3]
        %v2153 = vld [vmem:[%s2125 + $0xd8] sm:$0xff]
        %v2154 = vld [vmem:[%s2125 + $0xe0] sm:$0xff]
        %v2155 = vld [vmem:[%s2125 + $0xe8] sm:$0x3]
        %v2156 = vld [vmem:[%s2125 + $0xf0] sm:$0xff]
        %v2157 = vld [vmem:[%s2125 + $0xf8] sm:$0xff]
        %v2158 = vld [vmem:[%s2125 + $0x100] sm:$0x3]
        %v2159 = vld [vmem:[%s2125 + $0x108] sm:$0xff]
        %v2160 = vld [vmem:[%s2125 + $0x110] sm:$0xff]
        %v2161 = vld [vmem:[%s2125 + $0x118] sm:$0x3]
        %v2162 = vld [vmem:[%s2125 + $0x120] sm:$0xff]
        %v2163 = vld [vmem:[%s2125 + $0x128] sm:$0xff]
        %v2164 = vld [vmem:[%s2125 + $0x130] sm:$0x3]
        %v2165 = vld [vmem:[%s2125 + $0x138] sm:$0xff]
        %v2166 = vld [vmem:[%s2125 + $0x140] sm:$0xff]
        %v2167 = vld [vmem:[%s2125 + $0x148] sm:$0x3]
        %v2168 = vld [vmem:[%s2125 + $0x150] sm:$0xff]
        %v2169 = vld [vmem:[%s2125 + $0x158] sm:$0xff]
        %v2170 = vld [vmem:[%s2125 + $0x160] sm:$0x3]
        %v2171 = vld [vmem:[%s2125 + $0x168] sm:$0xff]
        %v2172 = vld [vmem:[%s2125 + $0x170] sm:$0xff]
        %v2173 = vld [vmem:[%s2125 + $0x178] sm:$0x3]
        %v2174 = vmax.f32 %v2126, 0.0
        %v2175 = vmax.f32 %v2127, 0.0
        %v2176 = vmax.f32 %v2128, 0.0
        %v2177 = vmax.f32 %v2129, 0.0
        %v2178 = vmax.f32 %v2130, 0.0
        %v2179 = vmax.f32 %v2131, 0.0
        %v2180 = vmax.f32 %v2132, 0.0
        %v2181 = vmax.f32 %v2133, 0.0
        %v2182 = vmax.f32 %v2134, 0.0
        %v2183 = vmax.f32 %v2135, 0.0
        %v2184 = vmax.f32 %v2136, 0.0
        %v2185 = vmax.f32 %v2137, 0.0
        %v2186 = vmax.f32 %v2138, 0.0
        %v2187 = vmax.f32 %v2139, 0.0
        %v2188 = vmax.f32 %v2140, 0.0
        %v2189 = vmax.f32 %v2141, 0.0
        %v2190 = vmax.f32 %v2142, 0.0
        %v2191 = vmax.f32 %v2143, 0.0
        %v2192 = vmax.f32 %v2144, 0.0
        %v2193 = vmax.f32 %v2145, 0.0
        %v2194 = vmax.f32 %v2146, 0.0
        %v2195 = vmax.f32 %v2147, 0.0
        %v2196 = vmax.f32 %v2148, 0.0
        %v2197 = vmax.f32 %v2149, 0.0
        %v2198 = vmax.f32 %v2150, 0.0
        %v2199 = vmax.f32 %v2151, 0.0
        %v2200 = vmax.f32 %v2152, 0.0
        %v2201 = vmax.f32 %v2153, 0.0
        %v2202 = vmax.f32 %v2154, 0.0
        %v2203 = vmax.f32 %v2155, 0.0
        %v2204 = vmax.f32 %v2156, 0.0
        %v2205 = vmax.f32 %v2157, 0.0
        %v2206 = vmax.f32 %v2158, 0.0
        %v2207 = vmax.f32 %v2159, 0.0
        %v2208 = vmax.f32 %v2160, 0.0
        %v2209 = vmax.f32 %v2161, 0.0
        %v2210 = vmax.f32 %v2162, 0.0
        %v2211 = vmax.f32 %v2163, 0.0
        %v2212 = vmax.f32 %v2164, 0.0
        %v2213 = vmax.f32 %v2165, 0.0
        %v2214 = vmax.f32 %v2166, 0.0
        %v2215 = vmax.f32 %v2167, 0.0
        %v2216 = vmax.f32 %v2168, 0.0
        %v2217 = vmax.f32 %v2169, 0.0
        %v2218 = vmax.f32 %v2170, 0.0
        %v2219 = vmax.f32 %v2171, 0.0
        %v2220 = vmax.f32 %v2172, 0.0
        %v2221 = vmax.f32 %v2173, 0.0
        %v2270 = vrot.slane %v2174, 1
        %v2271 = vrot.slane %v2175, 1
        %v2272 = vsel %vm535, %v2270, %v2271
        %v2273 = vrot.slane %v2176, 1
        %v2274 = vsel %vm535, %v2271, %v2273
        %v2275 = vrot.slane %v2177, 1
        %v2276 = vrot.slane %v2178, 1
        %v2277 = vsel %vm535, %v2275, %v2276
        %v2278 = vrot.slane %v2179, 1
        %v2279 = vsel %vm535, %v2276, %v2278
        %v2280 = vrot.slane %v2180, 1
        %v2281 = vrot.slane %v2181, 1
        %v2282 = vsel %vm535, %v2280, %v2281
        %v2283 = vrot.slane %v2182, 1
        %v2284 = vsel %vm535, %v2281, %v2283
        %v2285 = vrot.slane %v2183, 1
        %v2286 = vrot.slane %v2184, 1
        %v2287 = vsel %vm535, %v2285, %v2286
        %v2288 = vrot.slane %v2185, 1
        %v2289 = vsel %vm535, %v2286, %v2288
        %v2290 = vrot.slane %v2186, 1
        %v2291 = vrot.slane %v2187, 1
        %v2292 = vsel %vm535, %v2290, %v2291
        %v2293 = vrot.slane %v2188, 1
        %v2294 = vsel %vm535, %v2291, %v2293
        %v2295 = vrot.slane %v2189, 1
        %v2296 = vrot.slane %v2190, 1
        %v2297 = vsel %vm535, %v2295, %v2296
        %v2298 = vrot.slane %v2191, 1
        %v2299 = vsel %vm535, %v2296, %v2298
        %v2300 = vrot.slane %v2192, 1
        %v2301 = vrot.slane %v2193, 1
        %v2302 = vsel %vm535, %v2300, %v2301
        %v2303 = vrot.slane %v2194, 1
        %v2304 = vsel %vm535, %v2301, %v2303
        %v2305 = vrot.slane %v2195, 1
        %v2306 = vrot.slane %v2196, 1
        %v2307 = vsel %vm535, %v2305, %v2306
        %v2308 = vrot.slane %v2197, 1
        %v2309 = vsel %vm535, %v2306, %v2308
        %v2310 = vrot.slane %v2198, 1
        %v2311 = vrot.slane %v2199, 1
        %v2312 = vsel %vm535, %v2310, %v2311
        %v2313 = vrot.slane %v2200, 1
        %v2314 = vsel %vm535, %v2311, %v2313
        %v2315 = vrot.slane %v2201, 1
        %v2316 = vrot.slane %v2202, 1
        %v2317 = vsel %vm535, %v2315, %v2316
        %v2318 = vrot.slane %v2203, 1
        %v2319 = vsel %vm535, %v2316, %v2318
        %v2320 = vrot.slane %v2204, 1
        %v2321 = vrot.slane %v2205, 1
        %v2322 = vsel %vm535, %v2320, %v2321
        %v2323 = vrot.slane %v2206, 1
        %v2324 = vsel %vm535, %v2321, %v2323
        %v2325 = vrot.slane %v2207, 1
        %v2326 = vrot.slane %v2208, 1
        %v2327 = vsel %vm535, %v2325, %v2326
        %v2328 = vrot.slane %v2209, 1
        %v2329 = vsel %vm535, %v2326, %v2328
        %v2330 = vrot.slane %v2210, 1
        %v2331 = vrot.slane %v2211, 1
        %v2332 = vsel %vm535, %v2330, %v2331
        %v2333 = vrot.slane %v2212, 1
        %v2334 = vsel %vm535, %v2331, %v2333
        %v2335 = vrot.slane %v2213, 1
        %v2336 = vrot.slane %v2214, 1
        %v2337 = vsel %vm535, %v2335, %v2336
        %v2338 = vrot.slane %v2215, 1
        %v2339 = vsel %vm535, %v2336, %v2338
        %v2340 = vrot.slane %v2216, 1
        %v2341 = vrot.slane %v2217, 1
        %v2342 = vsel %vm535, %v2340, %v2341
        %v2343 = vrot.slane %v2218, 1
        %v2344 = vsel %vm535, %v2341, %v2343
        %v2345 = vrot.slane %v2219, 1
        %v2346 = vrot.slane %v2220, 1
        %v2347 = vsel %vm535, %v2345, %v2346
        %v2348 = vrot.slane %v2221, 1
        %v2349 = vsel %vm535, %v2346, %v2348
        %v2382 = vrot.slane %v2174, 2
        %v2383 = vrot.slane %v2175, 2
        %v2384 = vsel %vm648, %v2382, %v2383
        %v2385 = vrot.slane %v2176, 2
        %v2386 = vsel %vm648, %v2383, %v2385
        %v2387 = vrot.slane %v2177, 2
        %v2388 = vrot.slane %v2178, 2
        %v2389 = vsel %vm648, %v2387, %v2388
        %v2390 = vrot.slane %v2179, 2
        %v2391 = vsel %vm648, %v2388, %v2390
        %v2392 = vrot.slane %v2180, 2
        %v2393 = vrot.slane %v2181, 2
        %v2394 = vsel %vm648, %v2392, %v2393
        %v2395 = vrot.slane %v2182, 2
        %v2396 = vsel %vm648, %v2393, %v2395
        %v2397 = vrot.slane %v2183, 2
        %v2398 = vrot.slane %v2184, 2
        %v2399 = vsel %vm648, %v2397, %v2398
        %v2400 = vrot.slane %v2185, 2
        %v2401 = vsel %vm648, %v2398, %v2400
        %v2402 = vrot.slane %v2186, 2
        %v2403 = vrot.slane %v2187, 2
        %v2404 = vsel %vm648, %v2402, %v2403
        %v2405 = vrot.slane %v2188, 2
        %v2406 = vsel %vm648, %v2403, %v2405
        %v2407 = vrot.slane %v2189, 2
        %v2408 = vrot.slane %v2190, 2
        %v2409 = vsel %vm648, %v2407, %v2408
        %v2410 = vrot.slane %v2191, 2
        %v2411 = vsel %vm648, %v2408, %v2410
        %v2412 = vrot.slane %v2192, 2
        %v2413 = vrot.slane %v2193, 2
        %v2414 = vsel %vm648, %v2412, %v2413
        %v2415 = vrot.slane %v2194, 2
        %v2416 = vsel %vm648, %v2413, %v2415
        %v2417 = vrot.slane %v2195, 2
        %v2418 = vrot.slane %v2196, 2
        %v2419 = vsel %vm648, %v2417, %v2418
        %v2420 = vrot.slane %v2197, 2
        %v2421 = vsel %vm648, %v2418, %v2420
        %v2422 = vrot.slane %v2198, 2
        %v2423 = vrot.slane %v2199, 2
        %v2424 = vsel %vm648, %v2422, %v2423
        %v2425 = vrot.slane %v2200, 2
        %v2426 = vsel %vm648, %v2423, %v2425
        %v2427 = vrot.slane %v2201, 2
        %v2428 = vrot.slane %v2202, 2
        %v2429 = vsel %vm648, %v2427, %v2428
        %v2430 = vrot.slane %v2203, 2
        %v2431 = vsel %vm648, %v2428, %v2430
        %v2432 = vrot.slane %v2204, 2
        %v2433 = vrot.slane %v2205, 2
        %v2434 = vsel %vm648, %v2432, %v2433
        %v2435 = vrot.slane %v2206, 2
        %v2436 = vsel %vm648, %v2433, %v2435
        %v2437 = vrot.slane %v2207, 2
        %v2438 = vrot.slane %v2208, 2
        %v2439 = vsel %vm648, %v2437, %v2438
        %v2440 = vrot.slane %v2209, 2
        %v2441 = vsel %vm648, %v2438, %v2440
        %v2442 = vrot.slane %v2210, 2
        %v2443 = vrot.slane %v2211, 2
        %v2444 = vsel %vm648, %v2442, %v2443
        %v2445 = vrot.slane %v2212, 2
        %v2446 = vsel %vm648, %v2443, %v2445
        %v2447 = vrot.slane %v2213, 2
        %v2448 = vrot.slane %v2214, 2
        %v2449 = vsel %vm648, %v2447, %v2448
        %v2450 = vrot.slane %v2215, 2
        %v2451 = vsel %vm648, %v2448, %v2450
        %v2452 = vrot.slane %v2216, 2
        %v2453 = vrot.slane %v2217, 2
        %v2454 = vsel %vm648, %v2452, %v2453
        %v2455 = vrot.slane %v2218, 2
        %v2456 = vsel %vm648, %v2453, %v2455
        %v2457 = vrot.slane %v2219, 2
        %v2458 = vrot.slane %v2220, 2
        %v2459 = vsel %vm648, %v2457, %v2458
        %v2460 = vrot.slane %v2221, 2
        %v2461 = vsel %vm648, %v2458, %v2460
        %v2494 = vld [vmem:[#allocation7 + $0x300] sm:$0xff]
        %v2495 = vld [vmem:[#allocation7 + $0x308] sm:$0xff]
        %v2496 = vld [vmem:[#allocation7 + $0x310] sm:$0xff]
        %v2497 = vld [vmem:[#allocation7 + $0x318] sm:$0xff]
        %v2498 = vld [vmem:[#allocation7 + $0x320] sm:$0xff]
        %v2499 = vld [vmem:[#allocation7 + $0x328] sm:$0xff]
        %v2500 = vld [vmem:[#allocation7 + $0x330] sm:$0xff]
        %v2501 = vld [vmem:[#allocation7 + $0x338] sm:$0xff]
        %v2502 = vld [vmem:[#allocation7 + $0x340] sm:$0xff]
        %v2503 = vld [vmem:[#allocation7 + $0x348] sm:$0xff]
        %v2504 = vld [vmem:[#allocation7 + $0x350] sm:$0xff]
        %v2505 = vld [vmem:[#allocation7 + $0x358] sm:$0xff]
        %v2506 = vld [vmem:[#allocation7 + $0x360] sm:$0xff]
        %v2507 = vld [vmem:[#allocation7 + $0x368] sm:$0xff]
        %v2508 = vld [vmem:[#allocation7 + $0x370] sm:$0xff]
        %v2509 = vld [vmem:[#allocation7 + $0x378] sm:$0xff]
        %v2510 = vld [vmem:[#allocation7 + $0x380] sm:$0xff]
        %v2511 = vld [vmem:[#allocation7 + $0x388] sm:$0xff]
        %v2512 = vld [vmem:[#allocation7 + $0x390] sm:$0xff]
        %v2513 = vld [vmem:[#allocation7 + $0x398] sm:$0xff]
        %v2514 = vld [vmem:[#allocation7 + $0x3a0] sm:$0xff]
        %v2515 = vld [vmem:[#allocation7 + $0x3a8] sm:$0xff]
        %v2516 = vld [vmem:[#allocation7 + $0x3b0] sm:$0xff]
        %v2517 = vld [vmem:[#allocation7 + $0x3b8] sm:$0xff]
        %v2518 = vld [vmem:[#allocation7 + $0x3c0] sm:$0xff]
        %v2519 = vld [vmem:[#allocation7 + $0x3c8] sm:$0xff]
        %v2520 = vld [vmem:[#allocation7 + $0x3d0] sm:$0xff]
        %v2521 = vld [vmem:[#allocation7 + $0x3d8] sm:$0xff]
        %v2522 = vld [vmem:[#allocation7 + $0x3e0] sm:$0xff]
        %v2523 = vld [vmem:[#allocation7 + $0x3e8] sm:$0xff]
        %v2524 = vld [vmem:[#allocation7 + $0x3f0] sm:$0xff]
        %v2525 = vld [vmem:[#allocation7 + $0x3f8] sm:$0xff]
        %v2526 = vld [vmem:[#allocation7 + $0x400] sm:$0xff]
        %v2527 = vld [vmem:[#allocation7 + $0x408] sm:$0xff]
        %v2528 = vld [vmem:[#allocation7 + $0x410] sm:$0xff]
        %v2529 = vld [vmem:[#allocation7 + $0x418] sm:$0xff]
        %v2530 = vld [vmem:[#allocation7 + $0x420] sm:$0xff]
        %v2531 = vld [vmem:[#allocation7 + $0x428] sm:$0xff]
        %v2532 = vld [vmem:[#allocation7 + $0x430] sm:$0xff]
        %v2533 = vld [vmem:[#allocation7 + $0x438] sm:$0xff]
        %v2534 = vld [vmem:[#allocation7 + $0x440] sm:$0xff]
        %v2535 = vld [vmem:[#allocation7 + $0x448] sm:$0xff]
        %v2536 = vld [vmem:[#allocation7 + $0x450] sm:$0xff]
        %v2537 = vld [vmem:[#allocation7 + $0x458] sm:$0xff]
        %v2538 = vld [vmem:[#allocation7 + $0x460] sm:$0xff]
        %v2539 = vld [vmem:[#allocation7 + $0x468] sm:$0xff]
        %v2540 = vld [vmem:[#allocation7 + $0x470] sm:$0xff]
        %v2541 = vld [vmem:[#allocation7 + $0x478] sm:$0xff]
        %2542 = vmatprep.subr.mxu0 0.0
        %2543 = vmatpush1.msra.mxu0 %v2494
        %2544 = vmatprep.subr.mxu0 0.0
        %2545 = vmatpush1.msra.mxu0 %v2495
        %2546 = vmatprep.subr.mxu0 0.0
        %2547 = vmatpush1.msra.mxu0 %v2496
        %2548 = vmatprep.subr.mxu0 0.0
        %2549 = vmatpush1.msra.mxu0 %v2497
        %2550 = vmatprep.subr.mxu0 0.0
        %2551 = vmatpush1.msra.mxu0 %v2498
        %2552 = vmatprep.subr.mxu0 0.0
        %2553 = vmatpush1.msra.mxu0 %v2499
        %2554 = vmatprep.subr.mxu0 0.0
        %2555 = vmatpush1.msra.mxu0 %v2500
        %2556 = vmatprep.subr.mxu0 0.0
        %2557 = vmatpush1.msra.mxu0 %v2501
        %2558 = vmatprep.subr.mxu0 0.0
        %2559 = vmatpush1.msra.mxu0 %v2502
        %2560 = vmatprep.subr.mxu0 0.0
        %2561 = vmatpush1.msra.mxu0 %v2503
        %2562 = vmatprep.subr.mxu0 0.0
        %2563 = vmatpush1.msra.mxu0 %v2504
        %2564 = vmatprep.subr.mxu0 0.0
        %2565 = vmatpush1.msra.mxu0 %v2505
        %2566 = vmatprep.subr.mxu0 0.0
        %2567 = vmatpush1.msra.mxu0 %v2506
        %2568 = vmatprep.subr.mxu0 0.0
        %2569 = vmatpush1.msra.mxu0 %v2507
        %2570 = vmatprep.subr.mxu0 0.0
        %2571 = vmatpush1.msra.mxu0 %v2508
        %2572 = vmatprep.subr.mxu0 0.0
        %2573 = vmatpush1.msra.mxu0 %v2509
        %2574 = vmatprep.subr.mxu0 0.0
        %2575 = vmatpush1.msra.mxu0 %v2510
        %2576 = vmatprep.subr.mxu0 0.0
        %2577 = vmatpush1.msra.mxu0 %v2511
        %2578 = vmatprep.subr.mxu0 0.0
        %2579 = vmatpush1.msra.mxu0 %v2512
        %2580 = vmatprep.subr.mxu0 0.0
        %2581 = vmatpush1.msra.mxu0 %v2513
        %2582 = vmatprep.subr.mxu0 0.0
        %2583 = vmatpush1.msra.mxu0 %v2514
        %2584 = vmatprep.subr.mxu0 0.0
        %2585 = vmatpush1.msra.mxu0 %v2515
        %2586 = vmatprep.subr.mxu0 0.0
        %2587 = vmatpush1.msra.mxu0 %v2516
        %2588 = vmatprep.subr.mxu0 0.0
        %2589 = vmatpush1.msra.mxu0 %v2517
        %2590 = vmatprep.subr.mxu0 0.0
        %2591 = vmatpush1.msra.mxu0 %v2518
        %2592 = vmatprep.subr.mxu0 0.0
        %2593 = vmatpush1.msra.mxu0 %v2519
        %2594 = vmatprep.subr.mxu0 0.0
        %2595 = vmatpush1.msra.mxu0 %v2520
        %2596 = vmatprep.subr.mxu0 0.0
        %2597 = vmatpush1.msra.mxu0 %v2521
        %2598 = vmatprep.subr.mxu0 0.0
        %2599 = vmatpush1.msra.mxu0 %v2522
        %2600 = vmatprep.subr.mxu0 0.0
        %2601 = vmatpush1.msra.mxu0 %v2523
        %2602 = vmatprep.subr.mxu0 0.0
        %2603 = vmatpush1.msra.mxu0 %v2524
        %2604 = vmatprep.subr.mxu0 0.0
        %2605 = vmatpush1.msra.mxu0 %v2525
        %2606 = vmatprep.mubr.f32.mxu0 %v2272
        %2607 = vmatmul.mubr.f32.gmra.mrb[0].mxu0 %v2174
        %v2608 = vpop.f32.mrb[0].mxu0
        %v2609 = vadd.f32 0.0, %v2608
        %v2610 = vpop.f32.mrb[0].mxu0
        %2611 = vmatprep.mubr.f32.mxu0 %v2274
        %2612 = vmatmul.mubr.f32.gmra.mrb[0].mxu0 %v2175
        %v2613 = vpop.f32.mrb[0].mxu0
        %v2614 = vadd.f32 0.0, %v2613
        %v2615 = vpop.f32.mrb[0].mxu0
        %2616 = vmatprep.mubr.f32.mxu0 %v2277
        %2617 = vmatmul.mubr.f32.gmra.mrb[0].mxu0 %v2177
        %v2618 = vpop.f32.mrb[0].mxu0
        %v2619 = vadd.f32 0.0, %v2618
        %v2620 = vpop.f32.mrb[0].mxu0
        %2621 = vmatprep.mubr.f32.mxu0 %v2279
        %2622 = vmatmul.mubr.f32.gmra.mrb[0].mxu0 %v2178
        %v2623 = vpop.f32.mrb[0].mxu0
        %v2624 = vadd.f32 0.0, %v2623
        %v2625 = vpop.f32.mrb[0].mxu0
        %2626 = vmatprep.mubr.f32.mxu0 %v2282
        %2627 = vmatmul.mubr.f32.gmra.mrb[0].mxu0 %v2180
        %v2628 = vpop.f32.mrb[0].mxu0
        %v2629 = vadd.f32 0.0, %v2628
        %v2630 = vpop.f32.mrb[0].mxu0
        %2631 = vmatprep.mubr.f32.mxu0 %v2284
        %2632 = vmatmul.mubr.f32.gmra.mrb[0].mxu0 %v2181
        %v2633 = vpop.f32.mrb[0].mxu0
        %v2634 = vadd.f32 0.0, %v2633
        %v2635 = vpop.f32.mrb[0].mxu0
        %2636 = vmatprep.mubr.f32.mxu0 %v2287
        %2637 = vmatmul.mubr.f32.gmra.mrb[0].mxu0 %v2183
        %v2638 = vpop.f32.mrb[0].mxu0
        %v2639 = vadd.f32 0.0, %v2638
        %v2640 = vpop.f32.mrb[0].mxu0
        %2641 = vmatprep.mubr.f32.mxu0 %v2289
        %2642 = vmatmul.mubr.f32.gmra.mrb[0].mxu0 %v2184
        %v2643 = vpop.f32.mrb[0].mxu0
        %v2644 = vadd.f32 0.0, %v2643
        %v2645 = vpop.f32.mrb[0].mxu0
        %2646 = vmatprep.mubr.f32.mxu0 %v2292
        %2647 = vmatmul.mubr.f32.gmra.mrb[0].mxu0 %v2186
        %v2648 = vpop.f32.mrb[0].mxu0
        %v2649 = vadd.f32 0.0, %v2648
        %v2650 = vpop.f32.mrb[0].mxu0
        %2651 = vmatprep.mubr.f32.mxu0 %v2294
        %2652 = vmatmul.mubr.f32.gmra.mrb[0].mxu0 %v2187
        %v2653 = vpop.f32.mrb[0].mxu0
        %v2654 = vadd.f32 0.0, %v2653
        %v2655 = vpop.f32.mrb[0].mxu0
        %2656 = vmatprep.mubr.f32.mxu0 %v2297
        %2657 = vmatmul.mubr.f32.gmra.mrb[0].mxu0 %v2189
        %v2658 = vpop.f32.mrb[0].mxu0
        %v2659 = vadd.f32 0.0, %v2658
        %v2660 = vpop.f32.mrb[0].mxu0
        %2661 = vmatprep.mubr.f32.mxu0 %v2299
        %2662 = vmatmul.mubr.f32.gmra.mrb[0].mxu0 %v2190
        %v2663 = vpop.f32.mrb[0].mxu0
        %v2664 = vadd.f32 0.0, %v2663
        %v2665 = vpop.f32.mrb[0].mxu0
        %2666 = vmatprep.mubr.f32.mxu0 %v2302
        %2667 = vmatmul.mubr.f32.gmra.mrb[0].mxu0 %v2192
        %v2668 = vpop.f32.mrb[0].mxu0
        %v2669 = vadd.f32 0.0, %v2668
        %v2670 = vpop.f32.mrb[0].mxu0
        %2671 = vmatprep.mubr.f32.mxu0 %v2304
        %2672 = vmatmul.mubr.f32.gmra.mrb[0].mxu0 %v2193
        %v2673 = vpop.f32.mrb[0].mxu0
        %v2674 = vadd.f32 0.0, %v2673
        %v2675 = vpop.f32.mrb[0].mxu0
        %2676 = vmatprep.mubr.f32.mxu0 %v2307
        %2677 = vmatmul.mubr.f32.gmra.mrb[0].mxu0 %v2195
        %v2678 = vpop.f32.mrb[0].mxu0
        %v2679 = vadd.f32 0.0, %v2678
        %v2680 = vpop.f32.mrb[0].mxu0
        %2681 = vmatprep.mubr.f32.mxu0 %v2309
        %2682 = vmatmul.mubr.f32.gmra.mrb[0].mxu0 %v2196
        %v2683 = vpop.f32.mrb[0].mxu0
        %v2684 = vadd.f32 0.0, %v2683
        %v2685 = vpop.f32.mrb[0].mxu0
        %2686 = vmatprep.mubr.f32.mxu0 %v2312
        %2687 = vmatmul.mubr.f32.gmra.mrb[0].mxu0 %v2198
        %v2688 = vpop.f32.mrb[0].mxu0
        %v2689 = vadd.f32 0.0, %v2688
        %v2690 = vpop.f32.mrb[0].mxu0
        %2691 = vmatprep.mubr.f32.mxu0 %v2314
        %2692 = vmatmul.mubr.f32.gmra.mrb[0].mxu0 %v2199
        %v2693 = vpop.f32.mrb[0].mxu0
        %v2694 = vadd.f32 0.0, %v2693
        %v2695 = vpop.f32.mrb[0].mxu0
        %2696 = vmatprep.mubr.f32.mxu0 %v2317
        %2697 = vmatmul.mubr.f32.gmra.mrb[0].mxu0 %v2201
        %v2698 = vpop.f32.mrb[0].mxu0
        %v2699 = vadd.f32 0.0, %v2698
        %v2700 = vpop.f32.mrb[0].mxu0
        %2701 = vmatprep.mubr.f32.mxu0 %v2319
        %2702 = vmatmul.mubr.f32.gmra.mrb[0].mxu0 %v2202
        %v2703 = vpop.f32.mrb[0].mxu0
        %v2704 = vadd.f32 0.0, %v2703
        %v2705 = vpop.f32.mrb[0].mxu0
        %2706 = vmatprep.mubr.f32.mxu0 %v2322
        %2707 = vmatmul.mubr.f32.gmra.mrb[0].mxu0 %v2204
        %v2708 = vpop.f32.mrb[0].mxu0
        %v2709 = vadd.f32 0.0, %v2708
        %v2710 = vpop.f32.mrb[0].mxu0
        %2711 = vmatprep.mubr.f32.mxu0 %v2324
        %2712 = vmatmul.mubr.f32.gmra.mrb[0].mxu0 %v2205
        %v2713 = vpop.f32.mrb[0].mxu0
        %v2714 = vadd.f32 0.0, %v2713
        %v2715 = vpop.f32.mrb[0].mxu0
        %2716 = vmatprep.mubr.f32.mxu0 %v2327
        %2717 = vmatmul.mubr.f32.gmra.mrb[0].mxu0 %v2207
        %v2718 = vpop.f32.mrb[0].mxu0
        %v2719 = vadd.f32 0.0, %v2718
        %v2720 = vpop.f32.mrb[0].mxu0
        %2721 = vmatprep.mubr.f32.mxu0 %v2329
        %2722 = vmatmul.mubr.f32.gmra.mrb[0].mxu0 %v2208
        %v2723 = vpop.f32.mrb[0].mxu0
        %v2724 = vadd.f32 0.0, %v2723
        %v2725 = vpop.f32.mrb[0].mxu0
        %2726 = vmatprep.mubr.f32.mxu0 %v2332
        %2727 = vmatmul.mubr.f32.gmra.mrb[0].mxu0 %v2210
        %v2728 = vpop.f32.mrb[0].mxu0
        %v2729 = vadd.f32 0.0, %v2728
        %v2730 = vpop.f32.mrb[0].mxu0
        %2731 = vmatprep.mubr.f32.mxu0 %v2334
        %2732 = vmatmul.mubr.f32.gmra.mrb[0].mxu0 %v2211
        %v2733 = vpop.f32.mrb[0].mxu0
        %v2734 = vadd.f32 0.0, %v2733
        %v2735 = vpop.f32.mrb[0].mxu0
        %2736 = vmatprep.mubr.f32.mxu0 %v2337
        %2737 = vmatmul.mubr.f32.gmra.mrb[0].mxu0 %v2213
        %v2738 = vpop.f32.mrb[0].mxu0
        %v2739 = vadd.f32 0.0, %v2738
        %v2740 = vpop.f32.mrb[0].mxu0
        %2741 = vmatprep.mubr.f32.mxu0 %v2339
        %2742 = vmatmul.mubr.f32.gmra.mrb[0].mxu0 %v2214
        %v2743 = vpop.f32.mrb[0].mxu0
        %v2744 = vadd.f32 0.0, %v2743
        %v2745 = vpop.f32.mrb[0].mxu0
        %2746 = vmatprep.mubr.f32.mxu0 %v2342
        %2747 = vmatmul.mubr.f32.gmra.mrb[0].mxu0 %v2216
        %v2748 = vpop.f32.mrb[0].mxu0
        %v2749 = vadd.f32 0.0, %v2748
        %v2750 = vpop.f32.mrb[0].mxu0
        %2751 = vmatprep.mubr.f32.mxu0 %v2344
        %2752 = vmatmul.mubr.f32.gmra.mrb[0].mxu0 %v2217
        %v2753 = vpop.f32.mrb[0].mxu0
        %v2754 = vadd.f32 0.0, %v2753
        %v2755 = vpop.f32.mrb[0].mxu0
        %2756 = vmatprep.mubr.f32.mxu0 %v2347
        %2757 = vmatmul.mubr.f32.gmra.mrb[0].mxu0 %v2219
        %v2758 = vpop.f32.mrb[0].mxu0
        %v2759 = vadd.f32 0.0, %v2758
        %v2760 = vpop.f32.mrb[0].mxu0
        %2761 = vmatprep.mubr.f32.mxu0 %v2349
        %2762 = vmatmul.mubr.f32.gmra.mrb[0].mxu0 %v2220
        %v2763 = vpop.f32.mrb[0].mxu0
        %v2764 = vadd.f32 0.0, %v2763
        %v2765 = vpop.f32.mrb[0].mxu0
        %2766 = vdwg.mxu0
        %2767 = vmatprep.subr.mxu0 0.0
        %2768 = vmatpush1.msra.mxu0 %v2526
        %2769 = vmatprep.subr.mxu0 0.0
        %2770 = vmatpush1.msra.mxu0 %v2527
        %2771 = vmatprep.subr.mxu0 0.0
        %2772 = vmatpush1.msra.mxu0 %v2528
        %2773 = vmatprep.subr.mxu0 0.0
        %2774 = vmatpush1.msra.mxu0 %v2529
        %2775 = vmatprep.subr.mxu0 0.0
        %2776 = vmatpush1.msra.mxu0 %v2530
        %2777 = vmatprep.subr.mxu0 0.0
        %2778 = vmatpush1.msra.mxu0 %v2531
        %2779 = vmatprep.subr.mxu0 0.0
        %2780 = vmatpush1.msra.mxu0 %v2532
        %2781 = vmatprep.subr.mxu0 0.0
        %2782 = vmatpush1.msra.mxu0 %v2533
        %2783 = vmatprep.subr.mxu0 0.0
        %2784 = vmatpush1.msra.mxu0 %v2534
        %2785 = vmatprep.subr.mxu0 0.0
        %2786 = vmatpush1.msra.mxu0 %v2535
        %2787 = vmatprep.subr.mxu0 0.0
        %2788 = vmatpush1.msra.mxu0 %v2536
        %2789 = vmatprep.subr.mxu0 0.0
        %2790 = vmatpush1.msra.mxu0 %v2537
        %2791 = vmatprep.subr.mxu0 0.0
        %2792 = vmatpush1.msra.mxu0 %v2538
        %2793 = vmatprep.subr.mxu0 0.0
        %2794 = vmatpush1.msra.mxu0 %v2539
        %2795 = vmatprep.subr.mxu0 0.0
        %2796 = vmatpush1.msra.mxu0 %v2540
        %2797 = vmatprep.subr.mxu0 0.0
        %2798 = vmatpush1.msra.mxu0 %v2541
        %2799 = vmatprep.subr.mxu0 0.0
        %2800 = vmatpush1.msra.mxu0 0.0
        %2801 = vmatprep.subr.mxu0 0.0
        %2802 = vmatpush1.msra.mxu0 0.0
        %2803 = vmatprep.subr.mxu0 0.0
        %2804 = vmatpush1.msra.mxu0 0.0
        %2805 = vmatprep.subr.mxu0 0.0
        %2806 = vmatpush1.msra.mxu0 0.0
        %2807 = vmatprep.subr.mxu0 0.0
        %2808 = vmatpush1.msra.mxu0 0.0
        %2809 = vmatprep.subr.mxu0 0.0
        %2810 = vmatpush1.msra.mxu0 0.0
        %2811 = vmatprep.subr.mxu0 0.0
        %2812 = vmatpush1.msra.mxu0 0.0
        %2813 = vmatprep.subr.mxu0 0.0
        %2814 = vmatpush1.msra.mxu0 0.0
        %2815 = vmatprep.subr.mxu0 0.0
        %2816 = vmatpush1.msra.mxu0 0.0
        %2817 = vmatprep.subr.mxu0 0.0
        %2818 = vmatpush1.msra.mxu0 0.0
        %2819 = vmatprep.subr.mxu0 0.0
        %2820 = vmatpush1.msra.mxu0 0.0
        %2821 = vmatprep.subr.mxu0 0.0
        %2822 = vmatpush1.msra.mxu0 0.0
        %2823 = vmatprep.subr.mxu0 0.0
        %2824 = vmatpush1.msra.mxu0 0.0
        %2825 = vmatprep.subr.mxu0 0.0
        %2826 = vmatpush1.msra.mxu0 0.0
        %2827 = vmatprep.subr.mxu0 0.0
        %2828 = vmatpush1.msra.mxu0 0.0
        %2829 = vmatprep.subr.mxu0 0.0
        %2830 = vmatpush1.msra.mxu0 0.0
        %2831 = vmatprep.mubr.f32.mxu0 0.0
        %2832 = vmatmul.mubr.f32.gmra.mrb[0].mxu0 %v2384
        %v2833 = vpop.f32.mrb[0].mxu0
        %v2834 = vadd.f32 %v2609, %v2833
        %v2835 = vpop.f32.mrb[0].mxu0
        %2836 = vmatprep.mubr.f32.mxu0 0.0
        %2837 = vmatmul.mubr.f32.gmra.mrb[0].mxu0 %v2386
        %v2838 = vpop.f32.mrb[0].mxu0
        %v2839 = vadd.f32 %v2614, %v2838
        %v2840 = vpop.f32.mrb[0].mxu0
        %2841 = vmatprep.mubr.f32.mxu0 0.0
        %2842 = vmatmul.mubr.f32.gmra.mrb[0].mxu0 %v2389
        %v2843 = vpop.f32.mrb[0].mxu0
        %v2844 = vadd.f32 %v2619, %v2843
        %v2845 = vpop.f32.mrb[0].mxu0
        %2846 = vmatprep.mubr.f32.mxu0 0.0
        %2847 = vmatmul.mubr.f32.gmra.mrb[0].mxu0 %v2391
        %v2848 = vpop.f32.mrb[0].mxu0
        %v2849 = vadd.f32 %v2624, %v2848
        %v2850 = vpop.f32.mrb[0].mxu0
        %2851 = vmatprep.mubr.f32.mxu0 0.0
        %2852 = vmatmul.mubr.f32.gmra.mrb[0].mxu0 %v2394
        %v2853 = vpop.f32.mrb[0].mxu0
        %v2854 = vadd.f32 %v2629, %v2853
        %v2855 = vpop.f32.mrb[0].mxu0
        %2856 = vmatprep.mubr.f32.mxu0 0.0
        %2857 = vmatmul.mubr.f32.gmra.mrb[0].mxu0 %v2396
        %v2858 = vpop.f32.mrb[0].mxu0
        %v2859 = vadd.f32 %v2634, %v2858
        %v2860 = vpop.f32.mrb[0].mxu0
        %2861 = vmatprep.mubr.f32.mxu0 0.0
        %2862 = vmatmul.mubr.f32.gmra.mrb[0].mxu0 %v2399
        %v2863 = vpop.f32.mrb[0].mxu0
        %v2864 = vadd.f32 %v2639, %v2863
        %v2865 = vpop.f32.mrb[0].mxu0
        %2866 = vmatprep.mubr.f32.mxu0 0.0
        %2867 = vmatmul.mubr.f32.gmra.mrb[0].mxu0 %v2401
        %v2868 = vpop.f32.mrb[0].mxu0
        %v2869 = vadd.f32 %v2644, %v2868
        %v2870 = vpop.f32.mrb[0].mxu0
        %2871 = vmatprep.mubr.f32.mxu0 0.0
        %2872 = vmatmul.mubr.f32.gmra.mrb[0].mxu0 %v2404
        %v2873 = vpop.f32.mrb[0].mxu0
        %v2874 = vadd.f32 %v2649, %v2873
        %v2875 = vpop.f32.mrb[0].mxu0
        %2876 = vmatprep.mubr.f32.mxu0 0.0
        %2877 = vmatmul.mubr.f32.gmra.mrb[0].mxu0 %v2406
        %v2878 = vpop.f32.mrb[0].mxu0
        %v2879 = vadd.f32 %v2654, %v2878
        %v2880 = vpop.f32.mrb[0].mxu0
        %2881 = vmatprep.mubr.f32.mxu0 0.0
        %2882 = vmatmul.mubr.f32.gmra.mrb[0].mxu0 %v2409
        %v2883 = vpop.f32.mrb[0].mxu0
        %v2884 = vadd.f32 %v2659, %v2883
        %v2885 = vpop.f32.mrb[0].mxu0
        %2886 = vmatprep.mubr.f32.mxu0 0.0
        %2887 = vmatmul.mubr.f32.gmra.mrb[0].mxu0 %v2411
        %v2888 = vpop.f32.mrb[0].mxu0
        %v2889 = vadd.f32 %v2664, %v2888
        %v2890 = vpop.f32.mrb[0].mxu0
        %2891 = vmatprep.mubr.f32.mxu0 0.0
        %2892 = vmatmul.mubr.f32.gmra.mrb[0].mxu0 %v2414
        %v2893 = vpop.f32.mrb[0].mxu0
        %v2894 = vadd.f32 %v2669, %v2893
        %v2895 = vpop.f32.mrb[0].mxu0
        %2896 = vmatprep.mubr.f32.mxu0 0.0
        %2897 = vmatmul.mubr.f32.gmra.mrb[0].mxu0 %v2416
        %v2898 = vpop.f32.mrb[0].mxu0
        %v2899 = vadd.f32 %v2674, %v2898
        %v2900 = vpop.f32.mrb[0].mxu0
        %2901 = vmatprep.mubr.f32.mxu0 0.0
        %2902 = vmatmul.mubr.f32.gmra.mrb[0].mxu0 %v2419
        %v2903 = vpop.f32.mrb[0].mxu0
        %v2904 = vadd.f32 %v2679, %v2903
        %v2905 = vpop.f32.mrb[0].mxu0
        %2906 = vmatprep.mubr.f32.mxu0 0.0
        %2907 = vmatmul.mubr.f32.gmra.mrb[0].mxu0 %v2421
        %v2908 = vpop.f32.mrb[0].mxu0
        %v2909 = vadd.f32 %v2684, %v2908
        %v2910 = vpop.f32.mrb[0].mxu0
        %2911 = vmatprep.mubr.f32.mxu0 0.0
        %2912 = vmatmul.mubr.f32.gmra.mrb[0].mxu0 %v2424
        %v2913 = vpop.f32.mrb[0].mxu0
        %v2914 = vadd.f32 %v2689, %v2913
        %v2915 = vpop.f32.mrb[0].mxu0
        %2916 = vmatprep.mubr.f32.mxu0 0.0
        %2917 = vmatmul.mubr.f32.gmra.mrb[0].mxu0 %v2426
        %v2918 = vpop.f32.mrb[0].mxu0
        %v2919 = vadd.f32 %v2694, %v2918
        %v2920 = vpop.f32.mrb[0].mxu0
        %2921 = vmatprep.mubr.f32.mxu0 0.0
        %2922 = vmatmul.mubr.f32.gmra.mrb[0].mxu0 %v2429
        %v2923 = vpop.f32.mrb[0].mxu0
        %v2924 = vadd.f32 %v2699, %v2923
        %v2925 = vpop.f32.mrb[0].mxu0
        %2926 = vmatprep.mubr.f32.mxu0 0.0
        %2927 = vmatmul.mubr.f32.gmra.mrb[0].mxu0 %v2431
        %v2928 = vpop.f32.mrb[0].mxu0
        %v2929 = vadd.f32 %v2704, %v2928
        %v2930 = vpop.f32.mrb[0].mxu0
        %2931 = vmatprep.mubr.f32.mxu0 0.0
        %2932 = vmatmul.mubr.f32.gmra.mrb[0].mxu0 %v2434
        %v2933 = vpop.f32.mrb[0].mxu0
        %v2934 = vadd.f32 %v2709, %v2933
        %v2935 = vpop.f32.mrb[0].mxu0
        %2936 = vmatprep.mubr.f32.mxu0 0.0
        %2937 = vmatmul.mubr.f32.gmra.mrb[0].mxu0 %v2436
        %v2938 = vpop.f32.mrb[0].mxu0
        %v2939 = vadd.f32 %v2714, %v2938
        %v2940 = vpop.f32.mrb[0].mxu0
        %2941 = vmatprep.mubr.f32.mxu0 0.0
        %2942 = vmatmul.mubr.f32.gmra.mrb[0].mxu0 %v2439
        %v2943 = vpop.f32.mrb[0].mxu0
        %v2944 = vadd.f32 %v2719, %v2943
        %v2945 = vpop.f32.mrb[0].mxu0
        %2946 = vmatprep.mubr.f32.mxu0 0.0
        %2947 = vmatmul.mubr.f32.gmra.mrb[0].mxu0 %v2441
        %v2948 = vpop.f32.mrb[0].mxu0
        %v2949 = vadd.f32 %v2724, %v2948
        %v2950 = vpop.f32.mrb[0].mxu0
        %2951 = vmatprep.mubr.f32.mxu0 0.0
        %2952 = vmatmul.mubr.f32.gmra.mrb[0].mxu0 %v2444
        %v2953 = vpop.f32.mrb[0].mxu0
        %v2954 = vadd.f32 %v2729, %v2953
        %v2955 = vpop.f32.mrb[0].mxu0
        %2956 = vmatprep.mubr.f32.mxu0 0.0
        %2957 = vmatmul.mubr.f32.gmra.mrb[0].mxu0 %v2446
        %v2958 = vpop.f32.mrb[0].mxu0
        %v2959 = vadd.f32 %v2734, %v2958
        %v2960 = vpop.f32.mrb[0].mxu0
        %2961 = vmatprep.mubr.f32.mxu0 0.0
        %2962 = vmatmul.mubr.f32.gmra.mrb[0].mxu0 %v2449
        %v2963 = vpop.f32.mrb[0].mxu0
        %v2964 = vadd.f32 %v2739, %v2963
        %v2965 = vpop.f32.mrb[0].mxu0
        %2966 = vmatprep.mubr.f32.mxu0 0.0
        %2967 = vmatmul.mubr.f32.gmra.mrb[0].mxu0 %v2451
        %v2968 = vpop.f32.mrb[0].mxu0
        %v2969 = vadd.f32 %v2744, %v2968
        %v2970 = vpop.f32.mrb[0].mxu0
        %2971 = vmatprep.mubr.f32.mxu0 0.0
        %2972 = vmatmul.mubr.f32.gmra.mrb[0].mxu0 %v2454
        %v2973 = vpop.f32.mrb[0].mxu0
        %v2974 = vadd.f32 %v2749, %v2973
        %v2975 = vpop.f32.mrb[0].mxu0
        %2976 = vmatprep.mubr.f32.mxu0 0.0
        %2977 = vmatmul.mubr.f32.gmra.mrb[0].mxu0 %v2456
        %v2978 = vpop.f32.mrb[0].mxu0
        %v2979 = vadd.f32 %v2754, %v2978
        %v2980 = vpop.f32.mrb[0].mxu0
        %2981 = vmatprep.mubr.f32.mxu0 0.0
        %2982 = vmatmul.mubr.f32.gmra.mrb[0].mxu0 %v2459
        %v2983 = vpop.f32.mrb[0].mxu0
        %v2984 = vadd.f32 %v2759, %v2983
        %v2985 = vpop.f32.mrb[0].mxu0
        %2986 = vmatprep.mubr.f32.mxu0 0.0
        %2987 = vmatmul.mubr.f32.gmra.mrb[0].mxu0 %v2461
        %v2988 = vpop.f32.mrb[0].mxu0
        %v2989 = vadd.f32 %v2764, %v2988
        %v2990 = vpop.f32.mrb[0].mxu0
        %2991 = vdwg.mxu0
        %v2992 = vadd.f32 %v1967, %v2834
        %v2993 = vadd.f32 %v1972, %v2839
        %v2994 = vadd.f32 %v1977, %v2844
        %v2995 = vadd.f32 %v1982, %v2849
        %v2996 = vadd.f32 %v1987, %v2854
        %v2997 = vadd.f32 %v1992, %v2859
        %v2998 = vadd.f32 %v1997, %v2864
        %v2999 = vadd.f32 %v2002, %v2869
        %v3000 = vadd.f32 %v2007, %v2874
        %v3001 = vadd.f32 %v2012, %v2879
        %v3002 = vadd.f32 %v2017, %v2884
        %v3003 = vadd.f32 %v2022, %v2889
        %v3004 = vadd.f32 %v2027, %v2894
        %v3005 = vadd.f32 %v2032, %v2899
        %v3006 = vadd.f32 %v2037, %v2904
        %v3007 = vadd.f32 %v2042, %v2909
        %v3008 = vadd.f32 %v2047, %v2914
        %v3009 = vadd.f32 %v2052, %v2919
        %v3010 = vadd.f32 %v2057, %v2924
        %v3011 = vadd.f32 %v2062, %v2929
        %v3012 = vadd.f32 %v2067, %v2934
        %v3013 = vadd.f32 %v2072, %v2939
        %v3014 = vadd.f32 %v2077, %v2944
        %v3015 = vadd.f32 %v2082, %v2949
        %v3016 = vadd.f32 %v2087, %v2954
        %v3017 = vadd.f32 %v2092, %v2959
        %v3018 = vadd.f32 %v2097, %v2964
        %v3019 = vadd.f32 %v2102, %v2969
        %v3020 = vadd.f32 %v2107, %v2974
        %v3021 = vadd.f32 %v2112, %v2979
        %v3022 = vadd.f32 %v2117, %v2984
        %v3023 = vadd.f32 %v2122, %v2989
        %v3024 = vld [vmem:[%s2] sm:$0x1]
        %v3026 = vlaneseq
        %v3027 = vshrl.u32 %v3026, 7
        %v3028 = vsub.s32 0, %v3027
        %v3029 = vrot.slane %v3024, %v3028
        %v3031 = vadd.f32 %v2992, %v3029
        %v3032 = vadd.f32 %v2993, %v3029
        %v3033 = vadd.f32 %v2994, %v3029
        %v3034 = vadd.f32 %v2995, %v3029
        %v3035 = vadd.f32 %v2996, %v3029
        %v3036 = vadd.f32 %v2997, %v3029
        %v3037 = vadd.f32 %v2998, %v3029
        %v3038 = vadd.f32 %v2999, %v3029
        %v3039 = vadd.f32 %v3000, %v3029
        %v3040 = vadd.f32 %v3001, %v3029
        %v3041 = vadd.f32 %v3002, %v3029
        %v3042 = vadd.f32 %v3003, %v3029
        %v3043 = vadd.f32 %v3004, %v3029
        %v3044 = vadd.f32 %v3005, %v3029
        %v3045 = vadd.f32 %v3006, %v3029
        %v3046 = vadd.f32 %v3007, %v3029
        %v3047 = vadd.f32 %v3008, %v3029
        %v3048 = vadd.f32 %v3009, %v3029
        %v3049 = vadd.f32 %v3010, %v3029
        %v3050 = vadd.f32 %v3011, %v3029
        %v3051 = vadd.f32 %v3012, %v3029
        %v3052 = vadd.f32 %v3013, %v3029
        %v3053 = vadd.f32 %v3014, %v3029
        %v3054 = vadd.f32 %v3015, %v3029
        %v3055 = vadd.f32 %v3016, %v3029
        %v3056 = vadd.f32 %v3017, %v3029
        %v3057 = vadd.f32 %v3018, %v3029
        %v3058 = vadd.f32 %v3019, %v3029
        %v3059 = vadd.f32 %v3020, %v3029
        %v3060 = vadd.f32 %v3021, %v3029
        %v3061 = vadd.f32 %v3022, %v3029
        %v3062 = vadd.f32 %v3023, %v3029
        %3063 = vst [vmem:[#allocation3] sm:$0xff] 0.0
        %3064 = vst [vmem:[#allocation3 + $0x8] sm:$0xff] 0.0
        %3065 = vst [vmem:[#allocation3 + $0x10] sm:$0x3] 0.0
        %3066 = vst [vmem:[#allocation3 + $0x18] sm:$0xff] 0.0
        %3067 = vst [vmem:[#allocation3 + $0x20] sm:$0xff] 0.0
        %3068 = vst [vmem:[#allocation3 + $0x28] sm:$0x3] 0.0
        %3069 = vst [vmem:[#allocation3 + $0x30] sm:$0xff] 0.0
        %3070 = vst [vmem:[#allocation3 + $0x38] sm:$0xff] 0.0
        %3071 = vst [vmem:[#allocation3 + $0x40] sm:$0x3] 0.0
        %3072 = vst [vmem:[#allocation3 + $0x48] sm:$0xff] 0.0
        %3073 = vst [vmem:[#allocation3 + $0x50] sm:$0xff] 0.0
        %3074 = vst [vmem:[#allocation3 + $0x58] sm:$0x3] 0.0
        %3075 = vst [vmem:[#allocation3 + $0x60] sm:$0xff] 0.0
        %3076 = vst [vmem:[#allocation3 + $0x68] sm:$0xff] 0.0
        %3077 = vst [vmem:[#allocation3 + $0x70] sm:$0x3] 0.0
        %3078 = vst [vmem:[#allocation3 + $0x78] sm:$0xff] 0.0
        %3079 = vst [vmem:[#allocation3 + $0x80] sm:$0xff] 0.0
        %3080 = vst [vmem:[#allocation3 + $0x88] sm:$0x3] 0.0
        %3081 = vst [vmem:[#allocation3 + $0x90] sm:$0xff] 0.0
        %3082 = vst [vmem:[#allocation3 + $0x98] sm:$0xff] 0.0
        %3083 = vst [vmem:[#allocation3 + $0xa0] sm:$0x3] 0.0
        %3084 = vst [vmem:[#allocation3 + $0xa8] sm:$0xff] 0.0
        %3085 = vst [vmem:[#allocation3 + $0xb0] sm:$0xff] 0.0
        %3086 = vst [vmem:[#allocation3 + $0xb8] sm:$0x3] 0.0
        %3087 = vst [vmem:[#allocation3 + $0xc0] sm:$0xff] 0.0
        %3088 = vst [vmem:[#allocation3 + $0xc8] sm:$0xff] 0.0
        %3089 = vst [vmem:[#allocation3 + $0xd0] sm:$0x3] 0.0
        %3090 = vst [vmem:[#allocation3 + $0xd8] sm:$0xff] 0.0
        %3091 = vst [vmem:[#allocation3 + $0xe0] sm:$0xff] 0.0
        %3092 = vst [vmem:[#allocation3 + $0xe8] sm:$0x3] 0.0
        %3093 = vst [vmem:[#allocation3 + $0xf0] sm:$0xff] 0.0
        %3094 = vst [vmem:[#allocation3 + $0xf8] sm:$0xff] 0.0
        %3095 = vst [vmem:[#allocation3 + $0x100] sm:$0x3] 0.0
        %3096 = vst [vmem:[#allocation3 + $0x108] sm:$0xff] 0.0
        %3097 = vst [vmem:[#allocation3 + $0x110] sm:$0xff] 0.0
        %3098 = vst [vmem:[#allocation3 + $0x118] sm:$0x3] 0.0
        %3099 = vst [vmem:[#allocation3 + $0x120] sm:$0xff] 0.0
        %3100 = vst [vmem:[#allocation3 + $0x128] sm:$0xff] 0.0
        %3101 = vst [vmem:[#allocation3 + $0x130] sm:$0x3] 0.0
        %3102 = vst [vmem:[#allocation3 + $0x138] sm:$0xff] 0.0
        %3103 = vst [vmem:[#allocation3 + $0x140] sm:$0xff] 0.0
        %3104 = vst [vmem:[#allocation3 + $0x148] sm:$0x3] 0.0
        %3105 = vst [vmem:[#allocation3 + $0x150] sm:$0xff] 0.0
        %3106 = vst [vmem:[#allocation3 + $0x158] sm:$0xff] 0.0
        %3107 = vst [vmem:[#allocation3 + $0x160] sm:$0x3] 0.0
        %3108 = vst [vmem:[#allocation3 + $0x168] sm:$0xff] 0.0
        %3109 = vst [vmem:[#allocation3 + $0x170] sm:$0xff] 0.0
        %3110 = vst [vmem:[#allocation3 + $0x178] sm:$0x3] 0.0
        %3111 = vst [vmem:[#allocation3 + $0x180] sm:$0xff] 0.0
        %3112 = vst [vmem:[#allocation3 + $0x188] sm:$0xff] 0.0
        %3113 = vst [vmem:[#allocation3 + $0x190] sm:$0x3] 0.0
        %3114 = vst [vmem:[#allocation3 + $0x198] sm:$0xff] 0.0
        %3115 = vst [vmem:[#allocation3 + $0x1a0] sm:$0xff] 0.0
        %3116 = vst [vmem:[#allocation3 + $0x1a8] sm:$0x3] 0.0
        %v3117 = vmax.f32 %v3031, 0.0
        %v3118 = vmax.f32 %v3032, 0.0
        %v3119 = vmax.f32 %v3033, 0.0
        %v3120 = vmax.f32 %v3034, 0.0
        %v3121 = vmax.f32 %v3035, 0.0
        %v3122 = vmax.f32 %v3036, 0.0
        %v3123 = vmax.f32 %v3037, 0.0
        %v3124 = vmax.f32 %v3038, 0.0
        %v3125 = vmax.f32 %v3039, 0.0
        %v3126 = vmax.f32 %v3040, 0.0
        %v3127 = vmax.f32 %v3041, 0.0
        %v3128 = vmax.f32 %v3042, 0.0
        %v3129 = vmax.f32 %v3043, 0.0
        %v3130 = vmax.f32 %v3044, 0.0
        %v3131 = vmax.f32 %v3045, 0.0
        %v3132 = vmax.f32 %v3046, 0.0
        %v3133 = vmax.f32 %v3047, 0.0
        %v3134 = vmax.f32 %v3048, 0.0
        %v3135 = vmax.f32 %v3049, 0.0
        %v3136 = vmax.f32 %v3050, 0.0
        %v3137 = vmax.f32 %v3051, 0.0
        %v3138 = vmax.f32 %v3052, 0.0
        %v3139 = vmax.f32 %v3053, 0.0
        %v3140 = vmax.f32 %v3054, 0.0
        %v3141 = vmax.f32 %v3055, 0.0
        %v3142 = vmax.f32 %v3056, 0.0
        %v3143 = vmax.f32 %v3057, 0.0
        %v3144 = vmax.f32 %v3058, 0.0
        %v3145 = vmax.f32 %v3059, 0.0
        %v3146 = vmax.f32 %v3060, 0.0
        %v3147 = vmax.f32 %v3061, 0.0
        %v3148 = vmax.f32 %v3062, 0.0
        %s3149 = scalar_lea.vmem [#allocation3], 24
        %3150 = vst [vmem:[%s3149 + $0x1] sm:$0xff] %v3117
        %3151 = vst [vmem:[%s3149 + $0x9] sm:$0xff] %v3118
        %3152 = vst [vmem:[%s3149 + $0x19] sm:$0xff] %v3119
        %3153 = vst [vmem:[%s3149 + $0x21] sm:$0xff] %v3120
        %3154 = vst [vmem:[%s3149 + $0x31] sm:$0xff] %v3121
        %3155 = vst [vmem:[%s3149 + $0x39] sm:$0xff] %v3122
        %3156 = vst [vmem:[%s3149 + $0x49] sm:$0xff] %v3123
        %3157 = vst [vmem:[%s3149 + $0x51] sm:$0xff] %v3124
        %3158 = vst [vmem:[%s3149 + $0x61] sm:$0xff] %v3125
        %3159 = vst [vmem:[%s3149 + $0x69] sm:$0xff] %v3126
        %3160 = vst [vmem:[%s3149 + $0x79] sm:$0xff] %v3127
        %3161 = vst [vmem:[%s3149 + $0x81] sm:$0xff] %v3128
        %3162 = vst [vmem:[%s3149 + $0x91] sm:$0xff] %v3129
        %3163 = vst [vmem:[%s3149 + $0x99] sm:$0xff] %v3130
        %3164 = vst [vmem:[%s3149 + $0xa9] sm:$0xff] %v3131
        %3165 = vst [vmem:[%s3149 + $0xb1] sm:$0xff] %v3132
        %3166 = vst [vmem:[%s3149 + $0xc1] sm:$0xff] %v3133
        %3167 = vst [vmem:[%s3149 + $0xc9] sm:$0xff] %v3134
        %3168 = vst [vmem:[%s3149 + $0xd9] sm:$0xff] %v3135
        %3169 = vst [vmem:[%s3149 + $0xe1] sm:$0xff] %v3136
        %3170 = vst [vmem:[%s3149 + $0xf1] sm:$0xff] %v3137
        %3171 = vst [vmem:[%s3149 + $0xf9] sm:$0xff] %v3138
        %3172 = vst [vmem:[%s3149 + $0x109] sm:$0xff] %v3139
        %3173 = vst [vmem:[%s3149 + $0x111] sm:$0xff] %v3140
        %3174 = vst [vmem:[%s3149 + $0x121] sm:$0xff] %v3141
        %3175 = vst [vmem:[%s3149 + $0x129] sm:$0xff] %v3142
        %3176 = vst [vmem:[%s3149 + $0x139] sm:$0xff] %v3143
        %3177 = vst [vmem:[%s3149 + $0x141] sm:$0xff] %v3144
        %3178 = vst [vmem:[%s3149 + $0x151] sm:$0xff] %v3145
        %3179 = vst [vmem:[%s3149 + $0x159] sm:$0xff] %v3146
        %3180 = vst [vmem:[%s3149 + $0x169] sm:$0xff] %v3147
        %3181 = vst [vmem:[%s3149 + $0x171] sm:$0xff] %v3148
        %v3182 = vld [vmem:[#allocation3] sm:$0xff]
        %v3183 = vld [vmem:[#allocation3 + $0x8] sm:$0xff]
        %v3184 = vld [vmem:[#allocation3 + $0x10] sm:$0x3]
        %v3185 = vld [vmem:[#allocation3 + $0x18] sm:$0xff]
        %v3186 = vld [vmem:[#allocation3 + $0x20] sm:$0xff]
        %v3187 = vld [vmem:[#allocation3 + $0x28] sm:$0x3]
        %v3188 = vld [vmem:[#allocation3 + $0x30] sm:$0xff]
        %v3189 = vld [vmem:[#allocation3 + $0x38] sm:$0xff]
        %v3190 = vld [vmem:[#allocation3 + $0x40] sm:$0x3]
        %v3191 = vld [vmem:[#allocation3 + $0x48] sm:$0xff]
        %v3192 = vld [vmem:[#allocation3 + $0x50] sm:$0xff]
        %v3193 = vld [vmem:[#allocation3 + $0x58] sm:$0x3]
        %v3194 = vld [vmem:[#allocation3 + $0x60] sm:$0xff]
        %v3195 = vld [vmem:[#allocation3 + $0x68] sm:$0xff]
        %v3196 = vld [vmem:[#allocation3 + $0x70] sm:$0x3]
        %v3197 = vld [vmem:[#allocation3 + $0x78] sm:$0xff]
        %v3198 = vld [vmem:[#allocation3 + $0x80] sm:$0xff]
        %v3199 = vld [vmem:[#allocation3 + $0x88] sm:$0x3]
        %v3200 = vld [vmem:[#allocation3 + $0x90] sm:$0xff]
        %v3201 = vld [vmem:[#allocation3 + $0x98] sm:$0xff]
        %v3202 = vld [vmem:[#allocation3 + $0xa0] sm:$0x3]
        %v3203 = vld [vmem:[#allocation3 + $0xa8] sm:$0xff]
        %v3204 = vld [vmem:[#allocation3 + $0xb0] sm:$0xff]
        %v3205 = vld [vmem:[#allocation3 + $0xb8] sm:$0x3]
        %v3206 = vld [vmem:[#allocation3 + $0xc0] sm:$0xff]
        %v3207 = vld [vmem:[#allocation3 + $0xc8] sm:$0xff]
        %v3208 = vld [vmem:[#allocation3 + $0xd0] sm:$0x3]
        %v3209 = vld [vmem:[#allocation3 + $0xd8] sm:$0xff]
        %v3210 = vld [vmem:[#allocation3 + $0xe0] sm:$0xff]
        %v3211 = vld [vmem:[#allocation3 + $0xe8] sm:$0x3]
        %v3212 = vld [vmem:[#allocation3 + $0xf0] sm:$0xff]
        %v3213 = vld [vmem:[#allocation3 + $0xf8] sm:$0xff]
        %v3214 = vld [vmem:[#allocation3 + $0x100] sm:$0x3]
        %v3215 = vld [vmem:[#allocation3 + $0x108] sm:$0xff]
        %v3216 = vld [vmem:[#allocation3 + $0x110] sm:$0xff]
        %v3217 = vld [vmem:[#allocation3 + $0x118] sm:$0x3]
        %v3218 = vld [vmem:[#allocation3 + $0x120] sm:$0xff]
        %v3219 = vld [vmem:[#allocation3 + $0x128] sm:$0xff]
        %v3220 = vld [vmem:[#allocation3 + $0x130] sm:$0x3]
        %v3221 = vld [vmem:[#allocation3 + $0x138] sm:$0xff]
        %v3222 = vld [vmem:[#allocation3 + $0x140] sm:$0xff]
        %v3223 = vld [vmem:[#allocation3 + $0x148] sm:$0x3]
        %v3224 = vld [vmem:[#allocation3 + $0x150] sm:$0xff]
        %v3225 = vld [vmem:[#allocation3 + $0x158] sm:$0xff]
        %v3226 = vld [vmem:[#allocation3 + $0x160] sm:$0x3]
        %v3227 = vld [vmem:[#allocation3 + $0x168] sm:$0xff]
        %v3228 = vld [vmem:[#allocation3 + $0x170] sm:$0xff]
        %v3229 = vld [vmem:[#allocation3 + $0x178] sm:$0x3]
        %v3278 = vrot.slane %v3182, 1
        %v3279 = vrot.slane %v3183, 1
        %v3280 = vsel %vm535, %v3278, %v3279
        %v3281 = vrot.slane %v3184, 1
        %v3282 = vsel %vm535, %v3279, %v3281
        %v3283 = vrot.slane %v3185, 1
        %v3284 = vrot.slane %v3186, 1
        %v3285 = vsel %vm535, %v3283, %v3284
        %v3286 = vrot.slane %v3187, 1
        %v3287 = vsel %vm535, %v3284, %v3286
        %v3288 = vrot.slane %v3188, 1
        %v3289 = vrot.slane %v3189, 1
        %v3290 = vsel %vm535, %v3288, %v3289
        %v3291 = vrot.slane %v3190, 1
        %v3292 = vsel %vm535, %v3289, %v3291
        %v3293 = vrot.slane %v3191, 1
        %v3294 = vrot.slane %v3192, 1
        %v3295 = vsel %vm535, %v3293, %v3294
        %v3296 = vrot.slane %v3193, 1
        %v3297 = vsel %vm535, %v3294, %v3296
        %v3298 = vrot.slane %v3194, 1
        %v3299 = vrot.slane %v3195, 1
        %v3300 = vsel %vm535, %v3298, %v3299
        %v3301 = vrot.slane %v3196, 1
        %v3302 = vsel %vm535, %v3299, %v3301
        %v3303 = vrot.slane %v3197, 1
        %v3304 = vrot.slane %v3198, 1
        %v3305 = vsel %vm535, %v3303, %v3304
        %v3306 = vrot.slane %v3199, 1
        %v3307 = vsel %vm535, %v3304, %v3306
        %v3308 = vrot.slane %v3200, 1
        %v3309 = vrot.slane %v3201, 1
        %v3310 = vsel %vm535, %v3308, %v3309
        %v3311 = vrot.slane %v3202, 1
        %v3312 = vsel %vm535, %v3309, %v3311
        %v3313 = vrot.slane %v3203, 1
        %v3314 = vrot.slane %v3204, 1
        %v3315 = vsel %vm535, %v3313, %v3314
        %v3316 = vrot.slane %v3205, 1
        %v3317 = vsel %vm535, %v3314, %v3316
        %v3318 = vrot.slane %v3206, 1
        %v3319 = vrot.slane %v3207, 1
        %v3320 = vsel %vm535, %v3318, %v3319
        %v3321 = vrot.slane %v3208, 1
        %v3322 = vsel %vm535, %v3319, %v3321
        %v3323 = vrot.slane %v3209, 1
        %v3324 = vrot.slane %v3210, 1
        %v3325 = vsel %vm535, %v3323, %v3324
        %v3326 = vrot.slane %v3211, 1
        %v3327 = vsel %vm535, %v3324, %v3326
        %v3328 = vrot.slane %v3212, 1
        %v3329 = vrot.slane %v3213, 1
        %v3330 = vsel %vm535, %v3328, %v3329
        %v3331 = vrot.slane %v3214, 1
        %v3332 = vsel %vm535, %v3329, %v3331
        %v3333 = vrot.slane %v3215, 1
        %v3334 = vrot.slane %v3216, 1
        %v3335 = vsel %vm535, %v3333, %v3334
        %v3336 = vrot.slane %v3217, 1
        %v3337 = vsel %vm535, %v3334, %v3336
        %v3338 = vrot.slane %v3218, 1
        %v3339 = vrot.slane %v3219, 1
        %v3340 = vsel %vm535, %v3338, %v3339
        %v3341 = vrot.slane %v3220, 1
        %v3342 = vsel %vm535, %v3339, %v3341
        %v3343 = vrot.slane %v3221, 1
        %v3344 = vrot.slane %v3222, 1
        %v3345 = vsel %vm535, %v3343, %v3344
        %v3346 = vrot.slane %v3223, 1
        %v3347 = vsel %vm535, %v3344, %v3346
        %v3348 = vrot.slane %v3224, 1
        %v3349 = vrot.slane %v3225, 1
        %v3350 = vsel %vm535, %v3348, %v3349
        %v3351 = vrot.slane %v3226, 1
        %v3352 = vsel %vm535, %v3349, %v3351
        %v3353 = vrot.slane %v3227, 1
        %v3354 = vrot.slane %v3228, 1
        %v3355 = vsel %vm535, %v3353, %v3354
        %v3356 = vrot.slane %v3229, 1
        %v3357 = vsel %vm535, %v3354, %v3356
        %v3390 = vrot.slane %v3182, 2
        %v3391 = vrot.slane %v3183, 2
        %v3392 = vsel %vm648, %v3390, %v3391
        %v3393 = vrot.slane %v3184, 2
        %v3394 = vsel %vm648, %v3391, %v3393
        %v3395 = vrot.slane %v3185, 2
        %v3396 = vrot.slane %v3186, 2
        %v3397 = vsel %vm648, %v3395, %v3396
        %v3398 = vrot.slane %v3187, 2
        %v3399 = vsel %vm648, %v3396, %v3398
        %v3400 = vrot.slane %v3188, 2
        %v3401 = vrot.slane %v3189, 2
        %v3402 = vsel %vm648, %v3400, %v3401
        %v3403 = vrot.slane %v3190, 2
        %v3404 = vsel %vm648, %v3401, %v3403
        %v3405 = vrot.slane %v3191, 2
        %v3406 = vrot.slane %v3192, 2
        %v3407 = vsel %vm648, %v3405, %v3406
        %v3408 = vrot.slane %v3193, 2
        %v3409 = vsel %vm648, %v3406, %v3408
        %v3410 = vrot.slane %v3194, 2
        %v3411 = vrot.slane %v3195, 2
        %v3412 = vsel %vm648, %v3410, %v3411
        %v3413 = vrot.slane %v3196, 2
        %v3414 = vsel %vm648, %v3411, %v3413
        %v3415 = vrot.slane %v3197, 2
        %v3416 = vrot.slane %v3198, 2
        %v3417 = vsel %vm648, %v3415, %v3416
        %v3418 = vrot.slane %v3199, 2
        %v3419 = vsel %vm648, %v3416, %v3418
        %v3420 = vrot.slane %v3200, 2
        %v3421 = vrot.slane %v3201, 2
        %v3422 = vsel %vm648, %v3420, %v3421
        %v3423 = vrot.slane %v3202, 2
        %v3424 = vsel %vm648, %v3421, %v3423
        %v3425 = vrot.slane %v3203, 2
        %v3426 = vrot.slane %v3204, 2
        %v3427 = vsel %vm648, %v3425, %v3426
        %v3428 = vrot.slane %v3205, 2
        %v3429 = vsel %vm648, %v3426, %v3428
        %v3430 = vrot.slane %v3206, 2
        %v3431 = vrot.slane %v3207, 2
        %v3432 = vsel %vm648, %v3430, %v3431
        %v3433 = vrot.slane %v3208, 2
        %v3434 = vsel %vm648, %v3431, %v3433
        %v3435 = vrot.slane %v3209, 2
        %v3436 = vrot.slane %v3210, 2
        %v3437 = vsel %vm648, %v3435, %v3436
        %v3438 = vrot.slane %v3211, 2
        %v3439 = vsel %vm648, %v3436, %v3438
        %v3440 = vrot.slane %v3212, 2
        %v3441 = vrot.slane %v3213, 2
        %v3442 = vsel %vm648, %v3440, %v3441
        %v3443 = vrot.slane %v3214, 2
        %v3444 = vsel %vm648, %v3441, %v3443
        %v3445 = vrot.slane %v3215, 2
        %v3446 = vrot.slane %v3216, 2
        %v3447 = vsel %vm648, %v3445, %v3446
        %v3448 = vrot.slane %v3217, 2
        %v3449 = vsel %vm648, %v3446, %v3448
        %v3450 = vrot.slane %v3218, 2
        %v3451 = vrot.slane %v3219, 2
        %v3452 = vsel %vm648, %v3450, %v3451
        %v3453 = vrot.slane %v3220, 2
        %v3454 = vsel %vm648, %v3451, %v3453
        %v3455 = vrot.slane %v3221, 2
        %v3456 = vrot.slane %v3222, 2
        %v3457 = vsel %vm648, %v3455, %v3456
        %v3458 = vrot.slane %v3223, 2
        %v3459 = vsel %vm648, %v3456, %v3458
        %v3460 = vrot.slane %v3224, 2
        %v3461 = vrot.slane %v3225, 2
        %v3462 = vsel %vm648, %v3460, %v3461
        %v3463 = vrot.slane %v3226, 2
        %v3464 = vsel %vm648, %v3461, %v3463
        %v3465 = vrot.slane %v3227, 2
        %v3466 = vrot.slane %v3228, 2
        %v3467 = vsel %vm648, %v3465, %v3466
        %v3468 = vrot.slane %v3229, 2
        %v3469 = vsel %vm648, %v3466, %v3468
        %v3502 = vld [vmem:[#allocation9] sm:$0xff]
        %v3503 = vld [vmem:[#allocation9 + $0x8] sm:$0xff]
        %v3504 = vld [vmem:[#allocation9 + $0x10] sm:$0xff]
        %v3505 = vld [vmem:[#allocation9 + $0x18] sm:$0xff]
        %v3506 = vld [vmem:[#allocation9 + $0x20] sm:$0xff]
        %v3507 = vld [vmem:[#allocation9 + $0x28] sm:$0xff]
        %v3508 = vld [vmem:[#allocation9 + $0x30] sm:$0xff]
        %v3509 = vld [vmem:[#allocation9 + $0x38] sm:$0xff]
        %v3510 = vld [vmem:[#allocation9 + $0x40] sm:$0xff]
        %v3511 = vld [vmem:[#allocation9 + $0x48] sm:$0xff]
        %v3512 = vld [vmem:[#allocation9 + $0x50] sm:$0xff]
        %v3513 = vld [vmem:[#allocation9 + $0x58] sm:$0xff]
        %v3514 = vld [vmem:[#allocation9 + $0x60] sm:$0xff]
        %v3515 = vld [vmem:[#allocation9 + $0x68] sm:$0xff]
        %v3516 = vld [vmem:[#allocation9 + $0x70] sm:$0xff]
        %v3517 = vld [vmem:[#allocation9 + $0x78] sm:$0xff]
        %v3518 = vld [vmem:[#allocation9 + $0x80] sm:$0xff]
        %v3519 = vld [vmem:[#allocation9 + $0x88] sm:$0xff]
        %v3520 = vld [vmem:[#allocation9 + $0x90] sm:$0xff]
        %v3521 = vld [vmem:[#allocation9 + $0x98] sm:$0xff]
        %v3522 = vld [vmem:[#allocation9 + $0xa0] sm:$0xff]
        %v3523 = vld [vmem:[#allocation9 + $0xa8] sm:$0xff]
        %v3524 = vld [vmem:[#allocation9 + $0xb0] sm:$0xff]
        %v3525 = vld [vmem:[#allocation9 + $0xb8] sm:$0xff]
        %v3526 = vld [vmem:[#allocation9 + $0xc0] sm:$0xff]
        %v3527 = vld [vmem:[#allocation9 + $0xc8] sm:$0xff]
        %v3528 = vld [vmem:[#allocation9 + $0xd0] sm:$0xff]
        %v3529 = vld [vmem:[#allocation9 + $0xd8] sm:$0xff]
        %v3530 = vld [vmem:[#allocation9 + $0xe0] sm:$0xff]
        %v3531 = vld [vmem:[#allocation9 + $0xe8] sm:$0xff]
        %v3532 = vld [vmem:[#allocation9 + $0xf0] sm:$0xff]
        %v3533 = vld [vmem:[#allocation9 + $0xf8] sm:$0xff]
        %v3534 = vld [vmem:[#allocation9 + $0x100] sm:$0xff]
        %v3535 = vld [vmem:[#allocation9 + $0x108] sm:$0xff]
        %v3536 = vld [vmem:[#allocation9 + $0x110] sm:$0xff]
        %v3537 = vld [vmem:[#allocation9 + $0x118] sm:$0xff]
        %v3538 = vld [vmem:[#allocation9 + $0x120] sm:$0xff]
        %v3539 = vld [vmem:[#allocation9 + $0x128] sm:$0xff]
        %v3540 = vld [vmem:[#allocation9 + $0x130] sm:$0xff]
        %v3541 = vld [vmem:[#allocation9 + $0x138] sm:$0xff]
        %v3542 = vld [vmem:[#allocation9 + $0x140] sm:$0xff]
        %v3543 = vld [vmem:[#allocation9 + $0x148] sm:$0xff]
        %v3544 = vld [vmem:[#allocation9 + $0x150] sm:$0xff]
        %v3545 = vld [vmem:[#allocation9 + $0x158] sm:$0xff]
        %v3546 = vld [vmem:[#allocation9 + $0x160] sm:$0xff]
        %v3547 = vld [vmem:[#allocation9 + $0x168] sm:$0xff]
        %v3548 = vld [vmem:[#allocation9 + $0x170] sm:$0xff]
        %v3549 = vld [vmem:[#allocation9 + $0x178] sm:$0xff]
        %v3550 = vld [vmem:[%s3149] sm:$0xff]
        %v3551 = vld [vmem:[%s3149 + $0x8] sm:$0xff]
        %v3552 = vld [vmem:[%s3149 + $0x10] sm:$0x3]
        %v3553 = vld [vmem:[%s3149 + $0x18] sm:$0xff]
        %v3554 = vld [vmem:[%s3149 + $0x20] sm:$0xff]
        %v3555 = vld [vmem:[%s3149 + $0x28] sm:$0x3]
        %v3556 = vld [vmem:[%s3149 + $0x30] sm:$0xff]
        %v3557 = vld [vmem:[%s3149 + $0x38] sm:$0xff]
        %v3558 = vld [vmem:[%s3149 + $0x40] sm:$0x3]
        %v3559 = vld [vmem:[%s3149 + $0x48] sm:$0xff]
        %v3560 = vld [vmem:[%s3149 + $0x50] sm:$0xff]
        %v3561 = vld [vmem:[%s3149 + $0x58] sm:$0x3]
        %v3562 = vld [vmem:[%s3149 + $0x60] sm:$0xff]
        %v3563 = vld [vmem:[%s3149 + $0x68] sm:$0xff]
        %v3564 = vld [vmem:[%s3149 + $0x70] sm:$0x3]
        %v3565 = vld [vmem:[%s3149 + $0x78] sm:$0xff]
        %v3566 = vld [vmem:[%s3149 + $0x80] sm:$0xff]
        %v3567 = vld [vmem:[%s3149 + $0x88] sm:$0x3]
        %v3568 = vld [vmem:[%s3149 + $0x90] sm:$0xff]
        %v3569 = vld [vmem:[%s3149 + $0x98] sm:$0xff]
        %v3570 = vld [vmem:[%s3149 + $0xa0] sm:$0x3]
        %v3571 = vld [vmem:[%s3149 + $0xa8] sm:$0xff]
        %v3572 = vld [vmem:[%s3149 + $0xb0] sm:$0xff]
        %v3573 = vld [vmem:[%s3149 + $0xb8] sm:$0x3]
        %v3574 = vld [vmem:[%s3149 + $0xc0] sm:$0xff]
        %v3575 = vld [vmem:[%s3149 + $0xc8] sm:$0xff]
        %v3576 = vld [vmem:[%s3149 + $0xd0] sm:$0x3]
        %v3577 = vld [vmem:[%s3149 + $0xd8] sm:$0xff]
        %v3578 = vld [vmem:[%s3149 + $0xe0] sm:$0xff]
        %v3579 = vld [vmem:[%s3149 + $0xe8] sm:$0x3]
        %v3580 = vld [vmem:[%s3149 + $0xf0] sm:$0xff]
        %v3581 = vld [vmem:[%s3149 + $0xf8] sm:$0xff]
        %v3582 = vld [vmem:[%s3149 + $0x100] sm:$0x3]
        %v3583 = vld [vmem:[%s3149 + $0x108] sm:$0xff]
        %v3584 = vld [vmem:[%s3149 + $0x110] sm:$0xff]
        %v3585 = vld [vmem:[%s3149 + $0x118] sm:$0x3]
        %v3586 = vld [vmem:[%s3149 + $0x120] sm:$0xff]
        %v3587 = vld [vmem:[%s3149 + $0x128] sm:$0xff]
        %v3588 = vld [vmem:[%s3149 + $0x130] sm:$0x3]
        %v3589 = vld [vmem:[%s3149 + $0x138] sm:$0xff]
        %v3590 = vld [vmem:[%s3149 + $0x140] sm:$0xff]
        %v3591 = vld [vmem:[%s3149 + $0x148] sm:$0x3]
        %v3592 = vld [vmem:[%s3149 + $0x150] sm:$0xff]
        %v3593 = vld [vmem:[%s3149 + $0x158] sm:$0xff]
        %v3594 = vld [vmem:[%s3149 + $0x160] sm:$0x3]
        %v3595 = vld [vmem:[%s3149 + $0x168] sm:$0xff]
        %v3596 = vld [vmem:[%s3149 + $0x170] sm:$0xff]
        %v3597 = vld [vmem:[%s3149 + $0x178] sm:$0x3]
        %v3646 = vrot.slane %v3550, 1
        %v3647 = vrot.slane %v3551, 1
        %v3648 = vsel %vm535, %v3646, %v3647
        %v3649 = vrot.slane %v3552, 1
        %v3650 = vsel %vm535, %v3647, %v3649
        %v3651 = vrot.slane %v3553, 1
        %v3652 = vrot.slane %v3554, 1
        %v3653 = vsel %vm535, %v3651, %v3652
        %v3654 = vrot.slane %v3555, 1
        %v3655 = vsel %vm535, %v3652, %v3654
        %v3656 = vrot.slane %v3556, 1
        %v3657 = vrot.slane %v3557, 1
        %v3658 = vsel %vm535, %v3656, %v3657
        %v3659 = vrot.slane %v3558, 1
        %v3660 = vsel %vm535, %v3657, %v3659
        %v3661 = vrot.slane %v3559, 1
        %v3662 = vrot.slane %v3560, 1
        %v3663 = vsel %vm535, %v3661, %v3662
        %v3664 = vrot.slane %v3561, 1
        %v3665 = vsel %vm535, %v3662, %v3664
        %v3666 = vrot.slane %v3562, 1
        %v3667 = vrot.slane %v3563, 1
        %v3668 = vsel %vm535, %v3666, %v3667
        %v3669 = vrot.slane %v3564, 1
        %v3670 = vsel %vm535, %v3667, %v3669
        %v3671 = vrot.slane %v3565, 1
        %v3672 = vrot.slane %v3566, 1
        %v3673 = vsel %vm535, %v3671, %v3672
        %v3674 = vrot.slane %v3567, 1
        %v3675 = vsel %vm535, %v3672, %v3674
        %v3676 = vrot.slane %v3568, 1
        %v3677 = vrot.slane %v3569, 1
        %v3678 = vsel %vm535, %v3676, %v3677
        %v3679 = vrot.slane %v3570, 1
        %v3680 = vsel %vm535, %v3677, %v3679
        %v3681 = vrot.slane %v3571, 1
        %v3682 = vrot.slane %v3572, 1
        %v3683 = vsel %vm535, %v3681, %v3682
        %v3684 = vrot.slane %v3573, 1
        %v3685 = vsel %vm535, %v3682, %v3684
        %v3686 = vrot.slane %v3574, 1
        %v3687 = vrot.slane %v3575, 1
        %v3688 = vsel %vm535, %v3686, %v3687
        %v3689 = vrot.slane %v3576, 1
        %v3690 = vsel %vm535, %v3687, %v3689
        %v3691 = vrot.slane %v3577, 1
        %v3692 = vrot.slane %v3578, 1
        %v3693 = vsel %vm535, %v3691, %v3692
        %v3694 = vrot.slane %v3579, 1
        %v3695 = vsel %vm535, %v3692, %v3694
        %v3696 = vrot.slane %v3580, 1
        %v3697 = vrot.slane %v3581, 1
        %v3698 = vsel %vm535, %v3696, %v3697
        %v3699 = vrot.slane %v3582, 1
        %v3700 = vsel %vm535, %v3697, %v3699
        %v3701 = vrot.slane %v3583, 1
        %v3702 = vrot.slane %v3584, 1
        %v3703 = vsel %vm535, %v3701, %v3702
        %v3704 = vrot.slane %v3585, 1
        %v3705 = vsel %vm535, %v3702, %v3704
        %v3706 = vrot.slane %v3586, 1
        %v3707 = vrot.slane %v3587, 1
        %v3708 = vsel %vm535, %v3706, %v3707
        %v3709 = vrot.slane %v3588, 1
        %v3710 = vsel %vm535, %v3707, %v3709
        %v3711 = vrot.slane %v3589, 1
        %v3712 = vrot.slane %v3590, 1
        %v3713 = vsel %vm535, %v3711, %v3712
        %v3714 = vrot.slane %v3591, 1
        %v3715 = vsel %vm535, %v3712, %v3714
        %v3716 = vrot.slane %v3592, 1
        %v3717 = vrot.slane %v3593, 1
        %v3718 = vsel %vm535, %v3716, %v3717
        %v3719 = vrot.slane %v3594, 1
        %v3720 = vsel %vm535, %v3717, %v3719
        %v3721 = vrot.slane %v3595, 1
        %v3722 = vrot.slane %v3596, 1
        %v3723 = vsel %vm535, %v3721, %v3722
        %v3724 = vrot.slane %v3597, 1
        %v3725 = vsel %vm535, %v3722, %v3724
        %v3758 = vrot.slane %v3550, 2
        %v3759 = vrot.slane %v3551, 2
        %v3760 = vsel %vm648, %v3758, %v3759
        %v3761 = vrot.slane %v3552, 2
        %v3762 = vsel %vm648, %v3759, %v3761
        %v3763 = vrot.slane %v3553, 2
        %v3764 = vrot.slane %v3554, 2
        %v3765 = vsel %vm648, %v3763, %v3764
        %v3766 = vrot.slane %v3555, 2
        %v3767 = vsel %vm648, %v3764, %v3766
        %v3768 = vrot.slane %v3556, 2
        %v3769 = vrot.slane %v3557, 2
        %v3770 = vsel %vm648, %v3768, %v3769
        %v3771 = vrot.slane %v3558, 2
        %v3772 = vsel %vm648, %v3769, %v3771
        %v3773 = vrot.slane %v3559, 2
        %v3774 = vrot.slane %v3560, 2
        %v3775 = vsel %vm648, %v3773, %v3774
        %v3776 = vrot.slane %v3561, 2
        %v3777 = vsel %vm648, %v3774, %v3776
        %v3778 = vrot.slane %v3562, 2
        %v3779 = vrot.slane %v3563, 2
        %v3780 = vsel %vm648, %v3778, %v3779
        %v3781 = vrot.slane %v3564, 2
        %v3782 = vsel %vm648, %v3779, %v3781
        %v3783 = vrot.slane %v3565, 2
        %v3784 = vrot.slane %v3566, 2
        %v3785 = vsel %vm648, %v3783, %v3784
        %v3786 = vrot.slane %v3567, 2
        %v3787 = vsel %vm648, %v3784, %v3786
        %v3788 = vrot.slane %v3568, 2
        %v3789 = vrot.slane %v3569, 2
        %v3790 = vsel %vm648, %v3788, %v3789
        %v3791 = vrot.slane %v3570, 2
        %v3792 = vsel %vm648, %v3789, %v3791
        %v3793 = vrot.slane %v3571, 2
        %v3794 = vrot.slane %v3572, 2
        %v3795 = vsel %vm648, %v3793, %v3794
        %v3796 = vrot.slane %v3573, 2
        %v3797 = vsel %vm648, %v3794, %v3796
        %v3798 = vrot.slane %v3574, 2
        %v3799 = vrot.slane %v3575, 2
        %v3800 = vsel %vm648, %v3798, %v3799
        %v3801 = vrot.slane %v3576, 2
        %v3802 = vsel %vm648, %v3799, %v3801
        %v3803 = vrot.slane %v3577, 2
        %v3804 = vrot.slane %v3578, 2
        %v3805 = vsel %vm648, %v3803, %v3804
        %v3806 = vrot.slane %v3579, 2
        %v3807 = vsel %vm648, %v3804, %v3806
        %v3808 = vrot.slane %v3580, 2
        %v3809 = vrot.slane %v3581, 2
        %v3810 = vsel %vm648, %v3808, %v3809
        %v3811 = vrot.slane %v3582, 2
        %v3812 = vsel %vm648, %v3809, %v3811
        %v3813 = vrot.slane %v3583, 2
        %v3814 = vrot.slane %v3584, 2
        %v3815 = vsel %vm648, %v3813, %v3814
        %v3816 = vrot.slane %v3585, 2
        %v3817 = vsel %vm648, %v3814, %v3816
        %v3818 = vrot.slane %v3586, 2
        %v3819 = vrot.slane %v3587, 2
        %v3820 = vsel %vm648, %v3818, %v3819
        %v3821 = vrot.slane %v3588, 2
        %v3822 = vsel %vm648, %v3819, %v3821
        %v3823 = vrot.slane %v3589, 2
        %v3824 = vrot.slane %v3590, 2
        %v3825 = vsel %vm648, %v3823, %v3824
        %v3826 = vrot.slane %v3591, 2
        %v3827 = vsel %vm648, %v3824, %v3826
        %v3828 = vrot.slane %v3592, 2
        %v3829 = vrot.slane %v3593, 2
        %v3830 = vsel %vm648, %v3828, %v3829
        %v3831 = vrot.slane %v3594, 2
        %v3832 = vsel %vm648, %v3829, %v3831
        %v3833 = vrot.slane %v3595, 2
        %v3834 = vrot.slane %v3596, 2
        %v3835 = vsel %vm648, %v3833, %v3834
        %v3836 = vrot.slane %v3597, 2
        %v3837 = vsel %vm648, %v3834, %v3836
        %v3870 = vld [vmem:[#allocation9 + $0x180] sm:$0xff]
        %v3871 = vld [vmem:[#allocation9 + $0x188] sm:$0xff]
        %v3872 = vld [vmem:[#allocation9 + $0x190] sm:$0xff]
        %v3873 = vld [vmem:[#allocation9 + $0x198] sm:$0xff]
        %v3874 = vld [vmem:[#allocation9 + $0x1a0] sm:$0xff]
        %v3875 = vld [vmem:[#allocation9 + $0x1a8] sm:$0xff]
        %v3876 = vld [vmem:[#allocation9 + $0x1b0] sm:$0xff]
        %v3877 = vld [vmem:[#allocation9 + $0x1b8] sm:$0xff]
        %v3878 = vld [vmem:[#allocation9 + $0x1c0] sm:$0xff]
        %v3879 = vld [vmem:[#allocation9 + $0x1c8] sm:$0xff]
        %v3880 = vld [vmem:[#allocation9 + $0x1d0] sm:$0xff]
        %v3881 = vld [vmem:[#allocation9 + $0x1d8] sm:$0xff]
        %v3882 = vld [vmem:[#allocation9 + $0x1e0] sm:$0xff]
        %v3883 = vld [vmem:[#allocation9 + $0x1e8] sm:$0xff]
        %v3884 = vld [vmem:[#allocation9 + $0x1f0] sm:$0xff]
        %v3885 = vld [vmem:[#allocation9 + $0x1f8] sm:$0xff]
        %v3886 = vld [vmem:[#allocation9 + $0x200] sm:$0xff]
        %v3887 = vld [vmem:[#allocation9 + $0x208] sm:$0xff]
        %v3888 = vld [vmem:[#allocation9 + $0x210] sm:$0xff]
        %v3889 = vld [vmem:[#allocation9 + $0x218] sm:$0xff]
        %v3890 = vld [vmem:[#allocation9 + $0x220] sm:$0xff]
        %v3891 = vld [vmem:[#allocation9 + $0x228] sm:$0xff]
        %v3892 = vld [vmem:[#allocation9 + $0x230] sm:$0xff]
        %v3893 = vld [vmem:[#allocation9 + $0x238] sm:$0xff]
        %v3894 = vld [vmem:[#allocation9 + $0x240] sm:$0xff]
        %v3895 = vld [vmem:[#allocation9 + $0x248] sm:$0xff]
        %v3896 = vld [vmem:[#allocation9 + $0x250] sm:$0xff]
        %v3897 = vld [vmem:[#allocation9 + $0x258] sm:$0xff]
        %v3898 = vld [vmem:[#allocation9 + $0x260] sm:$0xff]
        %v3899 = vld [vmem:[#allocation9 + $0x268] sm:$0xff]
        %v3900 = vld [vmem:[#allocation9 + $0x270] sm:$0xff]
        %v3901 = vld [vmem:[#allocation9 + $0x278] sm:$0xff]
        %v3902 = vld [vmem:[#allocation9 + $0x280] sm:$0xff]
        %v3903 = vld [vmem:[#allocation9 + $0x288] sm:$0xff]
        %v3904 = vld [vmem:[#allocation9 + $0x290] sm:$0xff]
        %v3905 = vld [vmem:[#allocation9 + $0x298] sm:$0xff]
        %v3906 = vld [vmem:[#allocation9 + $0x2a0] sm:$0xff]
        %v3907 = vld [vmem:[#allocation9 + $0x2a8] sm:$0xff]
        %v3908 = vld [vmem:[#allocation9 + $0x2b0] sm:$0xff]
        %v3909 = vld [vmem:[#allocation9 + $0x2b8] sm:$0xff]
        %v3910 = vld [vmem:[#allocation9 + $0x2c0] sm:$0xff]
        %v3911 = vld [vmem:[#allocation9 + $0x2c8] sm:$0xff]
        %v3912 = vld [vmem:[#allocation9 + $0x2d0] sm:$0xff]
        %v3913 = vld [vmem:[#allocation9 + $0x2d8] sm:$0xff]
        %v3914 = vld [vmem:[#allocation9 + $0x2e0] sm:$0xff]
        %v3915 = vld [vmem:[#allocation9 + $0x2e8] sm:$0xff]
        %v3916 = vld [vmem:[#allocation9 + $0x2f0] sm:$0xff]
        %v3917 = vld [vmem:[#allocation9 + $0x2f8] sm:$0xff]
        %3918 = vmatprep.subr.mxu0 0.0
        %3919 = vmatpush1.msra.mxu0 %v3870
        %3920 = vmatprep.subr.mxu0 0.0
        %3921 = vmatpush1.msra.mxu0 %v3871
        %3922 = vmatprep.subr.mxu0 0.0
        %3923 = vmatpush1.msra.mxu0 %v3872
        %3924 = vmatprep.subr.mxu0 0.0
        %3925 = vmatpush1.msra.mxu0 %v3873
        %3926 = vmatprep.subr.mxu0 0.0
        %3927 = vmatpush1.msra.mxu0 %v3874
        %3928 = vmatprep.subr.mxu0 0.0
        %3929 = vmatpush1.msra.mxu0 %v3875
        %3930 = vmatprep.subr.mxu0 0.0
        %3931 = vmatpush1.msra.mxu0 %v3876
        %3932 = vmatprep.subr.mxu0 0.0
        %3933 = vmatpush1.msra.mxu0 %v3877
        %3934 = vmatprep.subr.mxu0 0.0
        %3935 = vmatpush1.msra.mxu0 %v3878
        %3936 = vmatprep.subr.mxu0 0.0
        %3937 = vmatpush1.msra.mxu0 %v3879
        %3938 = vmatprep.subr.mxu0 0.0
        %3939 = vmatpush1.msra.mxu0 %v3880
        %3940 = vmatprep.subr.mxu0 0.0
        %3941 = vmatpush1.msra.mxu0 %v3881
        %3942 = vmatprep.subr.mxu0 0.0
        %3943 = vmatpush1.msra.mxu0 %v3882
        %3944 = vmatprep.subr.mxu0 0.0
        %3945 = vmatpush1.msra.mxu0 %v3883
        %3946 = vmatprep.subr.mxu0 0.0
        %3947 = vmatpush1.msra.mxu0 %v3884
        %3948 = vmatprep.subr.mxu0 0.0
        %3949 = vmatpush1.msra.mxu0 %v3885
        %3950 = vmatprep.subr.mxu0 0.0
        %3951 = vmatpush1.msra.mxu0 %v3886
        %3952 = vmatprep.subr.mxu0 0.0
        %3953 = vmatpush1.msra.mxu0 %v3887
        %3954 = vmatprep.subr.mxu0 0.0
        %3955 = vmatpush1.msra.mxu0 %v3888
        %3956 = vmatprep.subr.mxu0 0.0
        %3957 = vmatpush1.msra.mxu0 %v3889
        %3958 = vmatprep.subr.mxu0 0.0
        %3959 = vmatpush1.msra.mxu0 %v3890
        %3960 = vmatprep.subr.mxu0 0.0
        %3961 = vmatpush1.msra.mxu0 %v3891
        %3962 = vmatprep.subr.mxu0 0.0
        %3963 = vmatpush1.msra.mxu0 %v3892
        %3964 = vmatprep.subr.mxu0 0.0
        %3965 = vmatpush1.msra.mxu0 %v3893
        %3966 = vmatprep.subr.mxu0 0.0
        %3967 = vmatpush1.msra.mxu0 %v3894
        %3968 = vmatprep.subr.mxu0 0.0
        %3969 = vmatpush1.msra.mxu0 %v3895
        %3970 = vmatprep.subr.mxu0 0.0
        %3971 = vmatpush1.msra.mxu0 %v3896
        %3972 = vmatprep.subr.mxu0 0.0
        %3973 = vmatpush1.msra.mxu0 %v3897
        %3974 = vmatprep.subr.mxu0 0.0
        %3975 = vmatpush1.msra.mxu0 %v3898
        %3976 = vmatprep.subr.mxu0 0.0
        %3977 = vmatpush1.msra.mxu0 %v3899
        %3978 = vmatprep.subr.mxu0 0.0
        %3979 = vmatpush1.msra.mxu0 %v3900
        %3980 = vmatprep.subr.mxu0 0.0
        %3981 = vmatpush1.msra.mxu0 %v3901
        %3982 = vmatprep.mubr.f32.mxu0 %v3648
        %3983 = vmatmul.mubr.f32.gmra.mrb[0].mxu0 %v3550
        %v3984 = vpop.f32.mrb[0].mxu0
        %v3985 = vadd.f32 0.0, %v3984
        %v3986 = vpop.f32.mrb[0].mxu0
        %3987 = vmatprep.mubr.f32.mxu0 %v3650
        %3988 = vmatmul.mubr.f32.gmra.mrb[0].mxu0 %v3551
        %v3989 = vpop.f32.mrb[0].mxu0
        %v3990 = vadd.f32 0.0, %v3989
        %v3991 = vpop.f32.mrb[0].mxu0
        %3992 = vmatprep.mubr.f32.mxu0 %v3653
        %3993 = vmatmul.mubr.f32.gmra.mrb[0].mxu0 %v3553
        %v3994 = vpop.f32.mrb[0].mxu0
        %v3995 = vadd.f32 0.0, %v3994
        %v3996 = vpop.f32.mrb[0].mxu0
        %3997 = vmatprep.mubr.f32.mxu0 %v3655
        %3998 = vmatmul.mubr.f32.gmra.mrb[0].mxu0 %v3554
        %v3999 = vpop.f32.mrb[0].mxu0
        %v4000 = vadd.f32 0.0, %v3999
        %v4001 = vpop.f32.mrb[0].mxu0
        %4002 = vmatprep.mubr.f32.mxu0 %v3658
        %4003 = vmatmul.mubr.f32.gmra.mrb[0].mxu0 %v3556
        %v4004 = vpop.f32.mrb[0].mxu0
        %v4005 = vadd.f32 0.0, %v4004
        %v4006 = vpop.f32.mrb[0].mxu0
        %4007 = vmatprep.mubr.f32.mxu0 %v3660
        %4008 = vmatmul.mubr.f32.gmra.mrb[0].mxu0 %v3557
        %v4009 = vpop.f32.mrb[0].mxu0
        %v4010 = vadd.f32 0.0, %v4009
        %v4011 = vpop.f32.mrb[0].mxu0
        %4012 = vmatprep.mubr.f32.mxu0 %v3663
        %4013 = vmatmul.mubr.f32.gmra.mrb[0].mxu0 %v3559
        %v4014 = vpop.f32.mrb[0].mxu0
        %v4015 = vadd.f32 0.0, %v4014
        %v4016 = vpop.f32.mrb[0].mxu0
        %4017 = vmatprep.mubr.f32.mxu0 %v3665
        %4018 = vmatmul.mubr.f32.gmra.mrb[0].mxu0 %v3560
        %v4019 = vpop.f32.mrb[0].mxu0
        %v4020 = vadd.f32 0.0, %v4019
        %v4021 = vpop.f32.mrb[0].mxu0
        %4022 = vmatprep.mubr.f32.mxu0 %v3668
        %4023 = vmatmul.mubr.f32.gmra.mrb[0].mxu0 %v3562
        %v4024 = vpop.f32.mrb[0].mxu0
        %v4025 = vadd.f32 0.0, %v4024
        %v4026 = vpop.f32.mrb[0].mxu0
        %4027 = vmatprep.mubr.f32.mxu0 %v3670
        %4028 = vmatmul.mubr.f32.gmra.mrb[0].mxu0 %v3563
        %v4029 = vpop.f32.mrb[0].mxu0
        %v4030 = vadd.f32 0.0, %v4029
        %v4031 = vpop.f32.mrb[0].mxu0
        %4032 = vmatprep.mubr.f32.mxu0 %v3673
        %4033 = vmatmul.mubr.f32.gmra.mrb[0].mxu0 %v3565
        %v4034 = vpop.f32.mrb[0].mxu0
        %v4035 = vadd.f32 0.0, %v4034
        %v4036 = vpop.f32.mrb[0].mxu0
        %4037 = vmatprep.mubr.f32.mxu0 %v3675
        %4038 = vmatmul.mubr.f32.gmra.mrb[0].mxu0 %v3566
        %v4039 = vpop.f32.mrb[0].mxu0
        %v4040 = vadd.f32 0.0, %v4039
        %v4041 = vpop.f32.mrb[0].mxu0
        %4042 = vmatprep.mubr.f32.mxu0 %v3678
        %4043 = vmatmul.mubr.f32.gmra.mrb[0].mxu0 %v3568
        %v4044 = vpop.f32.mrb[0].mxu0
        %v4045 = vadd.f32 0.0, %v4044
        %v4046 = vpop.f32.mrb[0].mxu0
        %4047 = vmatprep.mubr.f32.mxu0 %v3680
        %4048 = vmatmul.mubr.f32.gmra.mrb[0].mxu0 %v3569
        %v4049 = vpop.f32.mrb[0].mxu0
        %v4050 = vadd.f32 0.0, %v4049
        %v4051 = vpop.f32.mrb[0].mxu0
        %4052 = vmatprep.mubr.f32.mxu0 %v3683
        %4053 = vmatmul.mubr.f32.gmra.mrb[0].mxu0 %v3571
        %v4054 = vpop.f32.mrb[0].mxu0
        %v4055 = vadd.f32 0.0, %v4054
        %v4056 = vpop.f32.mrb[0].mxu0
        %4057 = vmatprep.mubr.f32.mxu0 %v3685
        %4058 = vmatmul.mubr.f32.gmra.mrb[0].mxu0 %v3572
        %v4059 = vpop.f32.mrb[0].mxu0
        %v4060 = vadd.f32 0.0, %v4059
        %v4061 = vpop.f32.mrb[0].mxu0
        %4062 = vmatprep.mubr.f32.mxu0 %v3688
        %4063 = vmatmul.mubr.f32.gmra.mrb[0].mxu0 %v3574
        %v4064 = vpop.f32.mrb[0].mxu0
        %v4065 = vadd.f32 0.0, %v4064
        %v4066 = vpop.f32.mrb[0].mxu0
        %4067 = vmatprep.mubr.f32.mxu0 %v3690
        %4068 = vmatmul.mubr.f32.gmra.mrb[0].mxu0 %v3575
        %v4069 = vpop.f32.mrb[0].mxu0
        %v4070 = vadd.f32 0.0, %v4069
        %v4071 = vpop.f32.mrb[0].mxu0
        %4072 = vmatprep.mubr.f32.mxu0 %v3693
        %4073 = vmatmul.mubr.f32.gmra.mrb[0].mxu0 %v3577
        %v4074 = vpop.f32.mrb[0].mxu0
        %v4075 = vadd.f32 0.0, %v4074
        %v4076 = vpop.f32.mrb[0].mxu0
        %4077 = vmatprep.mubr.f32.mxu0 %v3695
        %4078 = vmatmul.mubr.f32.gmra.mrb[0].mxu0 %v3578
        %v4079 = vpop.f32.mrb[0].mxu0
        %v4080 = vadd.f32 0.0, %v4079
        %v4081 = vpop.f32.mrb[0].mxu0
        %4082 = vmatprep.mubr.f32.mxu0 %v3698
        %4083 = vmatmul.mubr.f32.gmra.mrb[0].mxu0 %v3580
        %v4084 = vpop.f32.mrb[0].mxu0
        %v4085 = vadd.f32 0.0, %v4084
        %v4086 = vpop.f32.mrb[0].mxu0
        %4087 = vmatprep.mubr.f32.mxu0 %v3700
        %4088 = vmatmul.mubr.f32.gmra.mrb[0].mxu0 %v3581
        %v4089 = vpop.f32.mrb[0].mxu0
        %v4090 = vadd.f32 0.0, %v4089
        %v4091 = vpop.f32.mrb[0].mxu0
        %4092 = vmatprep.mubr.f32.mxu0 %v3703
        %4093 = vmatmul.mubr.f32.gmra.mrb[0].mxu0 %v3583
        %v4094 = vpop.f32.mrb[0].mxu0
        %v4095 = vadd.f32 0.0, %v4094
        %v4096 = vpop.f32.mrb[0].mxu0
        %4097 = vmatprep.mubr.f32.mxu0 %v3705
        %4098 = vmatmul.mubr.f32.gmra.mrb[0].mxu0 %v3584
        %v4099 = vpop.f32.mrb[0].mxu0
        %v4100 = vadd.f32 0.0, %v4099
        %v4101 = vpop.f32.mrb[0].mxu0
        %4102 = vmatprep.mubr.f32.mxu0 %v3708
        %4103 = vmatmul.mubr.f32.gmra.mrb[0].mxu0 %v3586
        %v4104 = vpop.f32.mrb[0].mxu0
        %v4105 = vadd.f32 0.0, %v4104
        %v4106 = vpop.f32.mrb[0].mxu0
        %4107 = vmatprep.mubr.f32.mxu0 %v3710
        %4108 = vmatmul.mubr.f32.gmra.mrb[0].mxu0 %v3587
        %v4109 = vpop.f32.mrb[0].mxu0
        %v4110 = vadd.f32 0.0, %v4109
        %v4111 = vpop.f32.mrb[0].mxu0
        %4112 = vmatprep.mubr.f32.mxu0 %v3713
        %4113 = vmatmul.mubr.f32.gmra.mrb[0].mxu0 %v3589
        %v4114 = vpop.f32.mrb[0].mxu0
        %v4115 = vadd.f32 0.0, %v4114
        %v4116 = vpop.f32.mrb[0].mxu0
        %4117 = vmatprep.mubr.f32.mxu0 %v3715
        %4118 = vmatmul.mubr.f32.gmra.mrb[0].mxu0 %v3590
        %v4119 = vpop.f32.mrb[0].mxu0
        %v4120 = vadd.f32 0.0, %v4119
        %v4121 = vpop.f32.mrb[0].mxu0
        %4122 = vmatprep.mubr.f32.mxu0 %v3718
        %4123 = vmatmul.mubr.f32.gmra.mrb[0].mxu0 %v3592
        %v4124 = vpop.f32.mrb[0].mxu0
        %v4125 = vadd.f32 0.0, %v4124
        %v4126 = vpop.f32.mrb[0].mxu0
        %4127 = vmatprep.mubr.f32.mxu0 %v3720
        %4128 = vmatmul.mubr.f32.gmra.mrb[0].mxu0 %v3593
        %v4129 = vpop.f32.mrb[0].mxu0
        %v4130 = vadd.f32 0.0, %v4129
        %v4131 = vpop.f32.mrb[0].mxu0
        %4132 = vmatprep.mubr.f32.mxu0 %v3723
        %4133 = vmatmul.mubr.f32.gmra.mrb[0].mxu0 %v3595
        %v4134 = vpop.f32.mrb[0].mxu0
        %v4135 = vadd.f32 0.0, %v4134
        %v4136 = vpop.f32.mrb[0].mxu0
        %4137 = vmatprep.mubr.f32.mxu0 %v3725
        %4138 = vmatmul.mubr.f32.gmra.mrb[0].mxu0 %v3596
        %v4139 = vpop.f32.mrb[0].mxu0
        %v4140 = vadd.f32 0.0, %v4139
        %v4141 = vpop.f32.mrb[0].mxu0
        %4142 = vdwg.mxu0
        %4143 = vmatprep.subr.mxu0 0.0
        %4144 = vmatpush1.msra.mxu0 %v3902
        %4145 = vmatprep.subr.mxu0 0.0
        %4146 = vmatpush1.msra.mxu0 %v3903
        %4147 = vmatprep.subr.mxu0 0.0
        %4148 = vmatpush1.msra.mxu0 %v3904
        %4149 = vmatprep.subr.mxu0 0.0
        %4150 = vmatpush1.msra.mxu0 %v3905
        %4151 = vmatprep.subr.mxu0 0.0
        %4152 = vmatpush1.msra.mxu0 %v3906
        %4153 = vmatprep.subr.mxu0 0.0
        %4154 = vmatpush1.msra.mxu0 %v3907
        %4155 = vmatprep.subr.mxu0 0.0
        %4156 = vmatpush1.msra.mxu0 %v3908
        %4157 = vmatprep.subr.mxu0 0.0
        %4158 = vmatpush1.msra.mxu0 %v3909
        %4159 = vmatprep.subr.mxu0 0.0
        %4160 = vmatpush1.msra.mxu0 %v3910
        %4161 = vmatprep.subr.mxu0 0.0
        %4162 = vmatpush1.msra.mxu0 %v3911
        %4163 = vmatprep.subr.mxu0 0.0
        %4164 = vmatpush1.msra.mxu0 %v3912
        %4165 = vmatprep.subr.mxu0 0.0
        %4166 = vmatpush1.msra.mxu0 %v3913
        %4167 = vmatprep.subr.mxu0 0.0
        %4168 = vmatpush1.msra.mxu0 %v3914
        %4169 = vmatprep.subr.mxu0 0.0
        %4170 = vmatpush1.msra.mxu0 %v3915
        %4171 = vmatprep.subr.mxu0 0.0
        %4172 = vmatpush1.msra.mxu0 %v3916
        %4173 = vmatprep.subr.mxu0 0.0
        %4174 = vmatpush1.msra.mxu0 %v3917
        %4175 = vmatprep.subr.mxu0 0.0
        %4176 = vmatpush1.msra.mxu0 0.0
        %4177 = vmatprep.subr.mxu0 0.0
        %4178 = vmatpush1.msra.mxu0 0.0
        %4179 = vmatprep.subr.mxu0 0.0
        %4180 = vmatpush1.msra.mxu0 0.0
        %4181 = vmatprep.subr.mxu0 0.0
        %4182 = vmatpush1.msra.mxu0 0.0
        %4183 = vmatprep.subr.mxu0 0.0
        %4184 = vmatpush1.msra.mxu0 0.0
        %4185 = vmatprep.subr.mxu0 0.0
        %4186 = vmatpush1.msra.mxu0 0.0
        %4187 = vmatprep.subr.mxu0 0.0
        %4188 = vmatpush1.msra.mxu0 0.0
        %4189 = vmatprep.subr.mxu0 0.0
        %4190 = vmatpush1.msra.mxu0 0.0
        %4191 = vmatprep.subr.mxu0 0.0
        %4192 = vmatpush1.msra.mxu0 0.0
        %4193 = vmatprep.subr.mxu0 0.0
        %4194 = vmatpush1.msra.mxu0 0.0
        %4195 = vmatprep.subr.mxu0 0.0
        %4196 = vmatpush1.msra.mxu0 0.0
        %4197 = vmatprep.subr.mxu0 0.0
        %4198 = vmatpush1.msra.mxu0 0.0
        %4199 = vmatprep.subr.mxu0 0.0
        %4200 = vmatpush1.msra.mxu0 0.0
        %4201 = vmatprep.subr.mxu0 0.0
        %4202 = vmatpush1.msra.mxu0 0.0
        %4203 = vmatprep.subr.mxu0 0.0
        %4204 = vmatpush1.msra.mxu0 0.0
        %4205 = vmatprep.subr.mxu0 0.0
        %4206 = vmatpush1.msra.mxu0 0.0
        %4207 = vmatprep.mubr.f32.mxu0 0.0
        %4208 = vmatmul.mubr.f32.gmra.mrb[0].mxu0 %v3760
        %v4209 = vpop.f32.mrb[0].mxu0
        %v4210 = vadd.f32 %v3985, %v4209
        %v4211 = vpop.f32.mrb[0].mxu0
        %4212 = vmatprep.mubr.f32.mxu0 0.0
        %4213 = vmatmul.mubr.f32.gmra.mrb[0].mxu0 %v3762
        %v4214 = vpop.f32.mrb[0].mxu0
        %v4215 = vadd.f32 %v3990, %v4214
        %v4216 = vpop.f32.mrb[0].mxu0
        %4217 = vmatprep.mubr.f32.mxu0 0.0
        %4218 = vmatmul.mubr.f32.gmra.mrb[0].mxu0 %v3765
        %v4219 = vpop.f32.mrb[0].mxu0
        %v4220 = vadd.f32 %v3995, %v4219
        %v4221 = vpop.f32.mrb[0].mxu0
        %4222 = vmatprep.mubr.f32.mxu0 0.0
        %4223 = vmatmul.mubr.f32.gmra.mrb[0].mxu0 %v3767
        %v4224 = vpop.f32.mrb[0].mxu0
        %v4225 = vadd.f32 %v4000, %v4224
        %v4226 = vpop.f32.mrb[0].mxu0
        %4227 = vmatprep.mubr.f32.mxu0 0.0
        %4228 = vmatmul.mubr.f32.gmra.mrb[0].mxu0 %v3770
        %v4229 = vpop.f32.mrb[0].mxu0
        %v4230 = vadd.f32 %v4005, %v4229
        %v4231 = vpop.f32.mrb[0].mxu0
        %4232 = vmatprep.mubr.f32.mxu0 0.0
        %4233 = vmatmul.mubr.f32.gmra.mrb[0].mxu0 %v3772
        %v4234 = vpop.f32.mrb[0].mxu0
        %v4235 = vadd.f32 %v4010, %v4234
        %v4236 = vpop.f32.mrb[0].mxu0
        %4237 = vmatprep.mubr.f32.mxu0 0.0
        %4238 = vmatmul.mubr.f32.gmra.mrb[0].mxu0 %v3775
        %v4239 = vpop.f32.mrb[0].mxu0
        %v4240 = vadd.f32 %v4015, %v4239
        %v4241 = vpop.f32.mrb[0].mxu0
        %4242 = vmatprep.mubr.f32.mxu0 0.0
        %4243 = vmatmul.mubr.f32.gmra.mrb[0].mxu0 %v3777
        %v4244 = vpop.f32.mrb[0].mxu0
        %v4245 = vadd.f32 %v4020, %v4244
        %v4246 = vpop.f32.mrb[0].mxu0
        %4247 = vmatprep.mubr.f32.mxu0 0.0
        %4248 = vmatmul.mubr.f32.gmra.mrb[0].mxu0 %v3780
        %v4249 = vpop.f32.mrb[0].mxu0
        %v4250 = vadd.f32 %v4025, %v4249
        %v4251 = vpop.f32.mrb[0].mxu0
        %4252 = vmatprep.mubr.f32.mxu0 0.0
        %4253 = vmatmul.mubr.f32.gmra.mrb[0].mxu0 %v3782
        %v4254 = vpop.f32.mrb[0].mxu0
        %v4255 = vadd.f32 %v4030, %v4254
        %v4256 = vpop.f32.mrb[0].mxu0
        %4257 = vmatprep.mubr.f32.mxu0 0.0
        %4258 = vmatmul.mubr.f32.gmra.mrb[0].mxu0 %v3785
        %v4259 = vpop.f32.mrb[0].mxu0
        %v4260 = vadd.f32 %v4035, %v4259
        %v4261 = vpop.f32.mrb[0].mxu0
        %4262 = vmatprep.mubr.f32.mxu0 0.0
        %4263 = vmatmul.mubr.f32.gmra.mrb[0].mxu0 %v3787
        %v4264 = vpop.f32.mrb[0].mxu0
        %v4265 = vadd.f32 %v4040, %v4264
        %v4266 = vpop.f32.mrb[0].mxu0
        %4267 = vmatprep.mubr.f32.mxu0 0.0
        %4268 = vmatmul.mubr.f32.gmra.mrb[0].mxu0 %v3790
        %v4269 = vpop.f32.mrb[0].mxu0
        %v4270 = vadd.f32 %v4045, %v4269
        %v4271 = vpop.f32.mrb[0].mxu0
        %4272 = vmatprep.mubr.f32.mxu0 0.0
        %4273 = vmatmul.mubr.f32.gmra.mrb[0].mxu0 %v3792
        %v4274 = vpop.f32.mrb[0].mxu0
        %v4275 = vadd.f32 %v4050, %v4274
        %v4276 = vpop.f32.mrb[0].mxu0
        %4277 = vmatprep.mubr.f32.mxu0 0.0
        %4278 = vmatmul.mubr.f32.gmra.mrb[0].mxu0 %v3795
        %v4279 = vpop.f32.mrb[0].mxu0
        %v4280 = vadd.f32 %v4055, %v4279
        %v4281 = vpop.f32.mrb[0].mxu0
        %4282 = vmatprep.mubr.f32.mxu0 0.0
        %4283 = vmatmul.mubr.f32.gmra.mrb[0].mxu0 %v3797
        %v4284 = vpop.f32.mrb[0].mxu0
        %v4285 = vadd.f32 %v4060, %v4284
        %v4286 = vpop.f32.mrb[0].mxu0
        %4287 = vmatprep.mubr.f32.mxu0 0.0
        %4288 = vmatmul.mubr.f32.gmra.mrb[0].mxu0 %v3800
        %v4289 = vpop.f32.mrb[0].mxu0
        %v4290 = vadd.f32 %v4065, %v4289
        %v4291 = vpop.f32.mrb[0].mxu0
        %4292 = vmatprep.mubr.f32.mxu0 0.0
        %4293 = vmatmul.mubr.f32.gmra.mrb[0].mxu0 %v3802
        %v4294 = vpop.f32.mrb[0].mxu0
        %v4295 = vadd.f32 %v4070, %v4294
        %v4296 = vpop.f32.mrb[0].mxu0
        %4297 = vmatprep.mubr.f32.mxu0 0.0
        %4298 = vmatmul.mubr.f32.gmra.mrb[0].mxu0 %v3805
        %v4299 = vpop.f32.mrb[0].mxu0
        %v4300 = vadd.f32 %v4075, %v4299
        %v4301 = vpop.f32.mrb[0].mxu0
        %4302 = vmatprep.mubr.f32.mxu0 0.0
        %4303 = vmatmul.mubr.f32.gmra.mrb[0].mxu0 %v3807
        %v4304 = vpop.f32.mrb[0].mxu0
        %v4305 = vadd.f32 %v4080, %v4304
        %v4306 = vpop.f32.mrb[0].mxu0
        %4307 = vmatprep.mubr.f32.mxu0 0.0
        %4308 = vmatmul.mubr.f32.gmra.mrb[0].mxu0 %v3810
        %v4309 = vpop.f32.mrb[0].mxu0
        %v4310 = vadd.f32 %v4085, %v4309
        %v4311 = vpop.f32.mrb[0].mxu0
        %4312 = vmatprep.mubr.f32.mxu0 0.0
        %4313 = vmatmul.mubr.f32.gmra.mrb[0].mxu0 %v3812
        %v4314 = vpop.f32.mrb[0].mxu0
        %v4315 = vadd.f32 %v4090, %v4314
        %v4316 = vpop.f32.mrb[0].mxu0
        %4317 = vmatprep.mubr.f32.mxu0 0.0
        %4318 = vmatmul.mubr.f32.gmra.mrb[0].mxu0 %v3815
        %v4319 = vpop.f32.mrb[0].mxu0
        %v4320 = vadd.f32 %v4095, %v4319
        %v4321 = vpop.f32.mrb[0].mxu0
        %4322 = vmatprep.mubr.f32.mxu0 0.0
        %4323 = vmatmul.mubr.f32.gmra.mrb[0].mxu0 %v3817
        %v4324 = vpop.f32.mrb[0].mxu0
        %v4325 = vadd.f32 %v4100, %v4324
        %v4326 = vpop.f32.mrb[0].mxu0
        %4327 = vmatprep.mubr.f32.mxu0 0.0
        %4328 = vmatmul.mubr.f32.gmra.mrb[0].mxu0 %v3820
        %v4329 = vpop.f32.mrb[0].mxu0
        %v4330 = vadd.f32 %v4105, %v4329
        %v4331 = vpop.f32.mrb[0].mxu0
        %4332 = vmatprep.mubr.f32.mxu0 0.0
        %4333 = vmatmul.mubr.f32.gmra.mrb[0].mxu0 %v3822
        %v4334 = vpop.f32.mrb[0].mxu0
        %v4335 = vadd.f32 %v4110, %v4334
        %v4336 = vpop.f32.mrb[0].mxu0
        %4337 = vmatprep.mubr.f32.mxu0 0.0
        %4338 = vmatmul.mubr.f32.gmra.mrb[0].mxu0 %v3825
        %v4339 = vpop.f32.mrb[0].mxu0
        %v4340 = vadd.f32 %v4115, %v4339
        %v4341 = vpop.f32.mrb[0].mxu0
        %4342 = vmatprep.mubr.f32.mxu0 0.0
        %4343 = vmatmul.mubr.f32.gmra.mrb[0].mxu0 %v3827
        %v4344 = vpop.f32.mrb[0].mxu0
        %v4345 = vadd.f32 %v4120, %v4344
        %v4346 = vpop.f32.mrb[0].mxu0
        %4347 = vmatprep.mubr.f32.mxu0 0.0
        %4348 = vmatmul.mubr.f32.gmra.mrb[0].mxu0 %v3830
        %v4349 = vpop.f32.mrb[0].mxu0
        %v4350 = vadd.f32 %v4125, %v4349
        %v4351 = vpop.f32.mrb[0].mxu0
        %4352 = vmatprep.mubr.f32.mxu0 0.0
        %4353 = vmatmul.mubr.f32.gmra.mrb[0].mxu0 %v3832
        %v4354 = vpop.f32.mrb[0].mxu0
        %v4355 = vadd.f32 %v4130, %v4354
        %v4356 = vpop.f32.mrb[0].mxu0
        %4357 = vmatprep.mubr.f32.mxu0 0.0
        %4358 = vmatmul.mubr.f32.gmra.mrb[0].mxu0 %v3835
        %v4359 = vpop.f32.mrb[0].mxu0
        %v4360 = vadd.f32 %v4135, %v4359
        %v4361 = vpop.f32.mrb[0].mxu0
        %4362 = vmatprep.mubr.f32.mxu0 0.0
        %4363 = vmatmul.mubr.f32.gmra.mrb[0].mxu0 %v3837
        %v4364 = vpop.f32.mrb[0].mxu0
        %v4365 = vadd.f32 %v4140, %v4364
        %v4366 = vpop.f32.mrb[0].mxu0
        %4367 = vdwg.mxu0
        %4368 = vmatprep.subr.mxu0 0.0
        %4369 = vmatpush1.msra.mxu0 %v3502
        %4370 = vmatprep.subr.mxu0 0.0
        %4371 = vmatpush1.msra.mxu0 %v3503
        %4372 = vmatprep.subr.mxu0 0.0
        %4373 = vmatpush1.msra.mxu0 %v3504
        %4374 = vmatprep.subr.mxu0 0.0
        %4375 = vmatpush1.msra.mxu0 %v3505
        %4376 = vmatprep.subr.mxu0 0.0
        %4377 = vmatpush1.msra.mxu0 %v3506
        %4378 = vmatprep.subr.mxu0 0.0
        %4379 = vmatpush1.msra.mxu0 %v3507
        %4380 = vmatprep.subr.mxu0 0.0
        %4381 = vmatpush1.msra.mxu0 %v3508
        %4382 = vmatprep.subr.mxu0 0.0
        %4383 = vmatpush1.msra.mxu0 %v3509
        %4384 = vmatprep.subr.mxu0 0.0
        %4385 = vmatpush1.msra.mxu0 %v3510
        %4386 = vmatprep.subr.mxu0 0.0
        %4387 = vmatpush1.msra.mxu0 %v3511
        %4388 = vmatprep.subr.mxu0 0.0
        %4389 = vmatpush1.msra.mxu0 %v3512
        %4390 = vmatprep.subr.mxu0 0.0
        %4391 = vmatpush1.msra.mxu0 %v3513
        %4392 = vmatprep.subr.mxu0 0.0
        %4393 = vmatpush1.msra.mxu0 %v3514
        %4394 = vmatprep.subr.mxu0 0.0
        %4395 = vmatpush1.msra.mxu0 %v3515
        %4396 = vmatprep.subr.mxu0 0.0
        %4397 = vmatpush1.msra.mxu0 %v3516
        %4398 = vmatprep.subr.mxu0 0.0
        %4399 = vmatpush1.msra.mxu0 %v3517
        %4400 = vmatprep.subr.mxu0 0.0
        %4401 = vmatpush1.msra.mxu0 %v3518
        %4402 = vmatprep.subr.mxu0 0.0
        %4403 = vmatpush1.msra.mxu0 %v3519
        %4404 = vmatprep.subr.mxu0 0.0
        %4405 = vmatpush1.msra.mxu0 %v3520
        %4406 = vmatprep.subr.mxu0 0.0
        %4407 = vmatpush1.msra.mxu0 %v3521
        %4408 = vmatprep.subr.mxu0 0.0
        %4409 = vmatpush1.msra.mxu0 %v3522
        %4410 = vmatprep.subr.mxu0 0.0
        %4411 = vmatpush1.msra.mxu0 %v3523
        %4412 = vmatprep.subr.mxu0 0.0
        %4413 = vmatpush1.msra.mxu0 %v3524
        %4414 = vmatprep.subr.mxu0 0.0
        %4415 = vmatpush1.msra.mxu0 %v3525
        %4416 = vmatprep.subr.mxu0 0.0
        %4417 = vmatpush1.msra.mxu0 %v3526
        %4418 = vmatprep.subr.mxu0 0.0
        %4419 = vmatpush1.msra.mxu0 %v3527
        %4420 = vmatprep.subr.mxu0 0.0
        %4421 = vmatpush1.msra.mxu0 %v3528
        %4422 = vmatprep.subr.mxu0 0.0
        %4423 = vmatpush1.msra.mxu0 %v3529
        %4424 = vmatprep.subr.mxu0 0.0
        %4425 = vmatpush1.msra.mxu0 %v3530
        %4426 = vmatprep.subr.mxu0 0.0
        %4427 = vmatpush1.msra.mxu0 %v3531
        %4428 = vmatprep.subr.mxu0 0.0
        %4429 = vmatpush1.msra.mxu0 %v3532
        %4430 = vmatprep.subr.mxu0 0.0
        %4431 = vmatpush1.msra.mxu0 %v3533
        %4432 = vmatprep.mubr.f32.mxu0 %v3280
        %4433 = vmatmul.mubr.f32.gmra.mrb[0].mxu0 %v3182
        %v4434 = vpop.f32.mrb[0].mxu0
        %v4435 = vadd.f32 %v4210, %v4434
        %v4436 = vpop.f32.mrb[0].mxu0
        %4437 = vmatprep.mubr.f32.mxu0 %v3282
        %4438 = vmatmul.mubr.f32.gmra.mrb[0].mxu0 %v3183
        %v4439 = vpop.f32.mrb[0].mxu0
        %v4440 = vadd.f32 %v4215, %v4439
        %v4441 = vpop.f32.mrb[0].mxu0
        %4442 = vmatprep.mubr.f32.mxu0 %v3285
        %4443 = vmatmul.mubr.f32.gmra.mrb[0].mxu0 %v3185
        %v4444 = vpop.f32.mrb[0].mxu0
        %v4445 = vadd.f32 %v4220, %v4444
        %v4446 = vpop.f32.mrb[0].mxu0
        %4447 = vmatprep.mubr.f32.mxu0 %v3287
        %4448 = vmatmul.mubr.f32.gmra.mrb[0].mxu0 %v3186
        %v4449 = vpop.f32.mrb[0].mxu0
        %v4450 = vadd.f32 %v4225, %v4449
        %v4451 = vpop.f32.mrb[0].mxu0
        %4452 = vmatprep.mubr.f32.mxu0 %v3290
        %4453 = vmatmul.mubr.f32.gmra.mrb[0].mxu0 %v3188
        %v4454 = vpop.f32.mrb[0].mxu0
        %v4455 = vadd.f32 %v4230, %v4454
        %v4456 = vpop.f32.mrb[0].mxu0
        %4457 = vmatprep.mubr.f32.mxu0 %v3292
        %4458 = vmatmul.mubr.f32.gmra.mrb[0].mxu0 %v3189
        %v4459 = vpop.f32.mrb[0].mxu0
        %v4460 = vadd.f32 %v4235, %v4459
        %v4461 = vpop.f32.mrb[0].mxu0
        %4462 = vmatprep.mubr.f32.mxu0 %v3295
        %4463 = vmatmul.mubr.f32.gmra.mrb[0].mxu0 %v3191
        %v4464 = vpop.f32.mrb[0].mxu0
        %v4465 = vadd.f32 %v4240, %v4464
        %v4466 = vpop.f32.mrb[0].mxu0
        %4467 = vmatprep.mubr.f32.mxu0 %v3297
        %4468 = vmatmul.mubr.f32.gmra.mrb[0].mxu0 %v3192
        %v4469 = vpop.f32.mrb[0].mxu0
        %v4470 = vadd.f32 %v4245, %v4469
        %v4471 = vpop.f32.mrb[0].mxu0
        %4472 = vmatprep.mubr.f32.mxu0 %v3300
        %4473 = vmatmul.mubr.f32.gmra.mrb[0].mxu0 %v3194
        %v4474 = vpop.f32.mrb[0].mxu0
        %v4475 = vadd.f32 %v4250, %v4474
        %v4476 = vpop.f32.mrb[0].mxu0
        %4477 = vmatprep.mubr.f32.mxu0 %v3302
        %4478 = vmatmul.mubr.f32.gmra.mrb[0].mxu0 %v3195
        %v4479 = vpop.f32.mrb[0].mxu0
        %v4480 = vadd.f32 %v4255, %v4479
        %v4481 = vpop.f32.mrb[0].mxu0
        %4482 = vmatprep.mubr.f32.mxu0 %v3305
        %4483 = vmatmul.mubr.f32.gmra.mrb[0].mxu0 %v3197
        %v4484 = vpop.f32.mrb[0].mxu0
        %v4485 = vadd.f32 %v4260, %v4484
        %v4486 = vpop.f32.mrb[0].mxu0
        %4487 = vmatprep.mubr.f32.mxu0 %v3307
        %4488 = vmatmul.mubr.f32.gmra.mrb[0].mxu0 %v3198
        %v4489 = vpop.f32.mrb[0].mxu0
        %v4490 = vadd.f32 %v4265, %v4489
        %v4491 = vpop.f32.mrb[0].mxu0
        %4492 = vmatprep.mubr.f32.mxu0 %v3310
        %4493 = vmatmul.mubr.f32.gmra.mrb[0].mxu0 %v3200
        %v4494 = vpop.f32.mrb[0].mxu0
        %v4495 = vadd.f32 %v4270, %v4494
        %v4496 = vpop.f32.mrb[0].mxu0
        %4497 = vmatprep.mubr.f32.mxu0 %v3312
        %4498 = vmatmul.mubr.f32.gmra.mrb[0].mxu0 %v3201
        %v4499 = vpop.f32.mrb[0].mxu0
        %v4500 = vadd.f32 %v4275, %v4499
        %v4501 = vpop.f32.mrb[0].mxu0
        %4502 = vmatprep.mubr.f32.mxu0 %v3315
        %4503 = vmatmul.mubr.f32.gmra.mrb[0].mxu0 %v3203
        %v4504 = vpop.f32.mrb[0].mxu0
        %v4505 = vadd.f32 %v4280, %v4504
        %v4506 = vpop.f32.mrb[0].mxu0
        %4507 = vmatprep.mubr.f32.mxu0 %v3317
        %4508 = vmatmul.mubr.f32.gmra.mrb[0].mxu0 %v3204
        %v4509 = vpop.f32.mrb[0].mxu0
        %v4510 = vadd.f32 %v4285, %v4509
        %v4511 = vpop.f32.mrb[0].mxu0
        %4512 = vmatprep.mubr.f32.mxu0 %v3320
        %4513 = vmatmul.mubr.f32.gmra.mrb[0].mxu0 %v3206
        %v4514 = vpop.f32.mrb[0].mxu0
        %v4515 = vadd.f32 %v4290, %v4514
        %v4516 = vpop.f32.mrb[0].mxu0
        %4517 = vmatprep.mubr.f32.mxu0 %v3322
        %4518 = vmatmul.mubr.f32.gmra.mrb[0].mxu0 %v3207
        %v4519 = vpop.f32.mrb[0].mxu0
        %v4520 = vadd.f32 %v4295, %v4519
        %v4521 = vpop.f32.mrb[0].mxu0
        %4522 = vmatprep.mubr.f32.mxu0 %v3325
        %4523 = vmatmul.mubr.f32.gmra.mrb[0].mxu0 %v3209
        %v4524 = vpop.f32.mrb[0].mxu0
        %v4525 = vadd.f32 %v4300, %v4524
        %v4526 = vpop.f32.mrb[0].mxu0
        %4527 = vmatprep.mubr.f32.mxu0 %v3327
        %4528 = vmatmul.mubr.f32.gmra.mrb[0].mxu0 %v3210
        %v4529 = vpop.f32.mrb[0].mxu0
        %v4530 = vadd.f32 %v4305, %v4529
        %v4531 = vpop.f32.mrb[0].mxu0
        %4532 = vmatprep.mubr.f32.mxu0 %v3330
        %4533 = vmatmul.mubr.f32.gmra.mrb[0].mxu0 %v3212
        %v4534 = vpop.f32.mrb[0].mxu0
        %v4535 = vadd.f32 %v4310, %v4534
        %v4536 = vpop.f32.mrb[0].mxu0
        %4537 = vmatprep.mubr.f32.mxu0 %v3332
        %4538 = vmatmul.mubr.f32.gmra.mrb[0].mxu0 %v3213
        %v4539 = vpop.f32.mrb[0].mxu0
        %v4540 = vadd.f32 %v4315, %v4539
        %v4541 = vpop.f32.mrb[0].mxu0
        %4542 = vmatprep.mubr.f32.mxu0 %v3335
        %4543 = vmatmul.mubr.f32.gmra.mrb[0].mxu0 %v3215
        %v4544 = vpop.f32.mrb[0].mxu0
        %v4545 = vadd.f32 %v4320, %v4544
        %v4546 = vpop.f32.mrb[0].mxu0
        %4547 = vmatprep.mubr.f32.mxu0 %v3337
        %4548 = vmatmul.mubr.f32.gmra.mrb[0].mxu0 %v3216
        %v4549 = vpop.f32.mrb[0].mxu0
        %v4550 = vadd.f32 %v4325, %v4549
        %v4551 = vpop.f32.mrb[0].mxu0
        %4552 = vmatprep.mubr.f32.mxu0 %v3340
        %4553 = vmatmul.mubr.f32.gmra.mrb[0].mxu0 %v3218
        %v4554 = vpop.f32.mrb[0].mxu0
        %v4555 = vadd.f32 %v4330, %v4554
        %v4556 = vpop.f32.mrb[0].mxu0
        %4557 = vmatprep.mubr.f32.mxu0 %v3342
        %4558 = vmatmul.mubr.f32.gmra.mrb[0].mxu0 %v3219
        %v4559 = vpop.f32.mrb[0].mxu0
        %v4560 = vadd.f32 %v4335, %v4559
        %v4561 = vpop.f32.mrb[0].mxu0
        %4562 = vmatprep.mubr.f32.mxu0 %v3345
        %4563 = vmatmul.mubr.f32.gmra.mrb[0].mxu0 %v3221
        %v4564 = vpop.f32.mrb[0].mxu0
        %v4565 = vadd.f32 %v4340, %v4564
        %v4566 = vpop.f32.mrb[0].mxu0
        %4567 = vmatprep.mubr.f32.mxu0 %v3347
        %4568 = vmatmul.mubr.f32.gmra.mrb[0].mxu0 %v3222
        %v4569 = vpop.f32.mrb[0].mxu0
        %v4570 = vadd.f32 %v4345, %v4569
        %v4571 = vpop.f32.mrb[0].mxu0
        %4572 = vmatprep.mubr.f32.mxu0 %v3350
        %4573 = vmatmul.mubr.f32.gmra.mrb[0].mxu0 %v3224
        %v4574 = vpop.f32.mrb[0].mxu0
        %v4575 = vadd.f32 %v4350, %v4574
        %v4576 = vpop.f32.mrb[0].mxu0
        %4577 = vmatprep.mubr.f32.mxu0 %v3352
        %4578 = vmatmul.mubr.f32.gmra.mrb[0].mxu0 %v3225
        %v4579 = vpop.f32.mrb[0].mxu0
        %v4580 = vadd.f32 %v4355, %v4579
        %v4581 = vpop.f32.mrb[0].mxu0
        %4582 = vmatprep.mubr.f32.mxu0 %v3355
        %4583 = vmatmul.mubr.f32.gmra.mrb[0].mxu0 %v3227
        %v4584 = vpop.f32.mrb[0].mxu0
        %v4585 = vadd.f32 %v4360, %v4584
        %v4586 = vpop.f32.mrb[0].mxu0
        %4587 = vmatprep.mubr.f32.mxu0 %v3357
        %4588 = vmatmul.mubr.f32.gmra.mrb[0].mxu0 %v3228
        %v4589 = vpop.f32.mrb[0].mxu0
        %v4590 = vadd.f32 %v4365, %v4589
        %v4591 = vpop.f32.mrb[0].mxu0
        %4592 = vdwg.mxu0
        %4593 = vmatprep.subr.mxu0 0.0
        %4594 = vmatpush1.msra.mxu0 %v3534
        %4595 = vmatprep.subr.mxu0 0.0
        %4596 = vmatpush1.msra.mxu0 %v3535
        %4597 = vmatprep.subr.mxu0 0.0
        %4598 = vmatpush1.msra.mxu0 %v3536
        %4599 = vmatprep.subr.mxu0 0.0
        %4600 = vmatpush1.msra.mxu0 %v3537
        %4601 = vmatprep.subr.mxu0 0.0
        %4602 = vmatpush1.msra.mxu0 %v3538
        %4603 = vmatprep.subr.mxu0 0.0
        %4604 = vmatpush1.msra.mxu0 %v3539
        %4605 = vmatprep.subr.mxu0 0.0
        %4606 = vmatpush1.msra.mxu0 %v3540
        %4607 = vmatprep.subr.mxu0 0.0
        %4608 = vmatpush1.msra.mxu0 %v3541
        %4609 = vmatprep.subr.mxu0 0.0
        %4610 = vmatpush1.msra.mxu0 %v3542
        %4611 = vmatprep.subr.mxu0 0.0
        %4612 = vmatpush1.msra.mxu0 %v3543
        %4613 = vmatprep.subr.mxu0 0.0
        %4614 = vmatpush1.msra.mxu0 %v3544
        %4615 = vmatprep.subr.mxu0 0.0
        %4616 = vmatpush1.msra.mxu0 %v3545
        %4617 = vmatprep.subr.mxu0 0.0
        %4618 = vmatpush1.msra.mxu0 %v3546
        %4619 = vmatprep.subr.mxu0 0.0
        %4620 = vmatpush1.msra.mxu0 %v3547
        %4621 = vmatprep.subr.mxu0 0.0
        %4622 = vmatpush1.msra.mxu0 %v3548
        %4623 = vmatprep.subr.mxu0 0.0
        %4624 = vmatpush1.msra.mxu0 %v3549
        %4625 = vmatprep.subr.mxu0 0.0
        %4626 = vmatpush1.msra.mxu0 0.0
        %4627 = vmatprep.subr.mxu0 0.0
        %4628 = vmatpush1.msra.mxu0 0.0
        %4629 = vmatprep.subr.mxu0 0.0
        %4630 = vmatpush1.msra.mxu0 0.0
        %4631 = vmatprep.subr.mxu0 0.0
        %4632 = vmatpush1.msra.mxu0 0.0
        %4633 = vmatprep.subr.mxu0 0.0
        %4634 = vmatpush1.msra.mxu0 0.0
        %4635 = vmatprep.subr.mxu0 0.0
        %4636 = vmatpush1.msra.mxu0 0.0
        %4637 = vmatprep.subr.mxu0 0.0
        %4638 = vmatpush1.msra.mxu0 0.0
        %4639 = vmatprep.subr.mxu0 0.0
        %4640 = vmatpush1.msra.mxu0 0.0
        %4641 = vmatprep.subr.mxu0 0.0
        %4642 = vmatpush1.msra.mxu0 0.0
        %4643 = vmatprep.subr.mxu0 0.0
        %4644 = vmatpush1.msra.mxu0 0.0
        %4645 = vmatprep.subr.mxu0 0.0
        %4646 = vmatpush1.msra.mxu0 0.0
        %4647 = vmatprep.subr.mxu0 0.0
        %4648 = vmatpush1.msra.mxu0 0.0
        %4649 = vmatprep.subr.mxu0 0.0
        %4650 = vmatpush1.msra.mxu0 0.0
        %4651 = vmatprep.subr.mxu0 0.0
        %4652 = vmatpush1.msra.mxu0 0.0
        %4653 = vmatprep.subr.mxu0 0.0
        %4654 = vmatpush1.msra.mxu0 0.0
        %4655 = vmatprep.subr.mxu0 0.0
        %4656 = vmatpush1.msra.mxu0 0.0
        %4657 = vmatprep.mubr.f32.mxu0 0.0
        %4658 = vmatmul.mubr.f32.gmra.mrb[0].mxu0 %v3392
        %v4659 = vpop.f32.mrb[0].mxu0
        %v4660 = vadd.f32 %v4435, %v4659
        %v4661 = vpop.f32.mrb[0].mxu0
        %4662 = vmatprep.mubr.f32.mxu0 0.0
        %4663 = vmatmul.mubr.f32.gmra.mrb[0].mxu0 %v3394
        %v4664 = vpop.f32.mrb[0].mxu0
        %v4665 = vadd.f32 %v4440, %v4664
        %v4666 = vpop.f32.mrb[0].mxu0
        %4667 = vmatprep.mubr.f32.mxu0 0.0
        %4668 = vmatmul.mubr.f32.gmra.mrb[0].mxu0 %v3397
        %v4669 = vpop.f32.mrb[0].mxu0
        %v4670 = vadd.f32 %v4445, %v4669
        %v4671 = vpop.f32.mrb[0].mxu0
        %4672 = vmatprep.mubr.f32.mxu0 0.0
        %4673 = vmatmul.mubr.f32.gmra.mrb[0].mxu0 %v3399
        %v4674 = vpop.f32.mrb[0].mxu0
        %v4675 = vadd.f32 %v4450, %v4674
        %v4676 = vpop.f32.mrb[0].mxu0
        %4677 = vmatprep.mubr.f32.mxu0 0.0
        %4678 = vmatmul.mubr.f32.gmra.mrb[0].mxu0 %v3402
        %v4679 = vpop.f32.mrb[0].mxu0
        %v4680 = vadd.f32 %v4455, %v4679
        %v4681 = vpop.f32.mrb[0].mxu0
        %4682 = vmatprep.mubr.f32.mxu0 0.0
        %4683 = vmatmul.mubr.f32.gmra.mrb[0].mxu0 %v3404
        %v4684 = vpop.f32.mrb[0].mxu0
        %v4685 = vadd.f32 %v4460, %v4684
        %v4686 = vpop.f32.mrb[0].mxu0
        %4687 = vmatprep.mubr.f32.mxu0 0.0
        %4688 = vmatmul.mubr.f32.gmra.mrb[0].mxu0 %v3407
        %v4689 = vpop.f32.mrb[0].mxu0
        %v4690 = vadd.f32 %v4465, %v4689
        %v4691 = vpop.f32.mrb[0].mxu0
        %4692 = vmatprep.mubr.f32.mxu0 0.0
        %4693 = vmatmul.mubr.f32.gmra.mrb[0].mxu0 %v3409
        %v4694 = vpop.f32.mrb[0].mxu0
        %v4695 = vadd.f32 %v4470, %v4694
        %v4696 = vpop.f32.mrb[0].mxu0
        %4697 = vmatprep.mubr.f32.mxu0 0.0
        %4698 = vmatmul.mubr.f32.gmra.mrb[0].mxu0 %v3412
        %v4699 = vpop.f32.mrb[0].mxu0
        %v4700 = vadd.f32 %v4475, %v4699
        %v4701 = vpop.f32.mrb[0].mxu0
        %4702 = vmatprep.mubr.f32.mxu0 0.0
        %4703 = vmatmul.mubr.f32.gmra.mrb[0].mxu0 %v3414
        %v4704 = vpop.f32.mrb[0].mxu0
        %v4705 = vadd.f32 %v4480, %v4704
        %v4706 = vpop.f32.mrb[0].mxu0
        %4707 = vmatprep.mubr.f32.mxu0 0.0
        %4708 = vmatmul.mubr.f32.gmra.mrb[0].mxu0 %v3417
        %v4709 = vpop.f32.mrb[0].mxu0
        %v4710 = vadd.f32 %v4485, %v4709
        %v4711 = vpop.f32.mrb[0].mxu0
        %4712 = vmatprep.mubr.f32.mxu0 0.0
        %4713 = vmatmul.mubr.f32.gmra.mrb[0].mxu0 %v3419
        %v4714 = vpop.f32.mrb[0].mxu0
        %v4715 = vadd.f32 %v4490, %v4714
        %v4716 = vpop.f32.mrb[0].mxu0
        %4717 = vmatprep.mubr.f32.mxu0 0.0
        %4718 = vmatmul.mubr.f32.gmra.mrb[0].mxu0 %v3422
        %v4719 = vpop.f32.mrb[0].mxu0
        %v4720 = vadd.f32 %v4495, %v4719
        %v4721 = vpop.f32.mrb[0].mxu0
        %4722 = vmatprep.mubr.f32.mxu0 0.0
        %4723 = vmatmul.mubr.f32.gmra.mrb[0].mxu0 %v3424
        %v4724 = vpop.f32.mrb[0].mxu0
        %v4725 = vadd.f32 %v4500, %v4724
        %v4726 = vpop.f32.mrb[0].mxu0
        %4727 = vmatprep.mubr.f32.mxu0 0.0
        %4728 = vmatmul.mubr.f32.gmra.mrb[0].mxu0 %v3427
        %v4729 = vpop.f32.mrb[0].mxu0
        %v4730 = vadd.f32 %v4505, %v4729
        %v4731 = vpop.f32.mrb[0].mxu0
        %4732 = vmatprep.mubr.f32.mxu0 0.0
        %4733 = vmatmul.mubr.f32.gmra.mrb[0].mxu0 %v3429
        %v4734 = vpop.f32.mrb[0].mxu0
        %v4735 = vadd.f32 %v4510, %v4734
        %v4736 = vpop.f32.mrb[0].mxu0
        %4737 = vmatprep.mubr.f32.mxu0 0.0
        %4738 = vmatmul.mubr.f32.gmra.mrb[0].mxu0 %v3432
        %v4739 = vpop.f32.mrb[0].mxu0
        %v4740 = vadd.f32 %v4515, %v4739
        %v4741 = vpop.f32.mrb[0].mxu0
        %4742 = vmatprep.mubr.f32.mxu0 0.0
        %4743 = vmatmul.mubr.f32.gmra.mrb[0].mxu0 %v3434
        %v4744 = vpop.f32.mrb[0].mxu0
        %v4745 = vadd.f32 %v4520, %v4744
        %v4746 = vpop.f32.mrb[0].mxu0
        %4747 = vmatprep.mubr.f32.mxu0 0.0
        %4748 = vmatmul.mubr.f32.gmra.mrb[0].mxu0 %v3437
        %v4749 = vpop.f32.mrb[0].mxu0
        %v4750 = vadd.f32 %v4525, %v4749
        %v4751 = vpop.f32.mrb[0].mxu0
        %4752 = vmatprep.mubr.f32.mxu0 0.0
        %4753 = vmatmul.mubr.f32.gmra.mrb[0].mxu0 %v3439
        %v4754 = vpop.f32.mrb[0].mxu0
        %v4755 = vadd.f32 %v4530, %v4754
        %v4756 = vpop.f32.mrb[0].mxu0
        %4757 = vmatprep.mubr.f32.mxu0 0.0
        %4758 = vmatmul.mubr.f32.gmra.mrb[0].mxu0 %v3442
        %v4759 = vpop.f32.mrb[0].mxu0
        %v4760 = vadd.f32 %v4535, %v4759
        %v4761 = vpop.f32.mrb[0].mxu0
        %4762 = vmatprep.mubr.f32.mxu0 0.0
        %4763 = vmatmul.mubr.f32.gmra.mrb[0].mxu0 %v3444
        %v4764 = vpop.f32.mrb[0].mxu0
        %v4765 = vadd.f32 %v4540, %v4764
        %v4766 = vpop.f32.mrb[0].mxu0
        %4767 = vmatprep.mubr.f32.mxu0 0.0
        %4768 = vmatmul.mubr.f32.gmra.mrb[0].mxu0 %v3447
        %v4769 = vpop.f32.mrb[0].mxu0
        %v4770 = vadd.f32 %v4545, %v4769
        %v4771 = vpop.f32.mrb[0].mxu0
        %4772 = vmatprep.mubr.f32.mxu0 0.0
        %4773 = vmatmul.mubr.f32.gmra.mrb[0].mxu0 %v3449
        %v4774 = vpop.f32.mrb[0].mxu0
        %v4775 = vadd.f32 %v4550, %v4774
        %v4776 = vpop.f32.mrb[0].mxu0
        %4777 = vmatprep.mubr.f32.mxu0 0.0
        %4778 = vmatmul.mubr.f32.gmra.mrb[0].mxu0 %v3452
        %v4779 = vpop.f32.mrb[0].mxu0
        %v4780 = vadd.f32 %v4555, %v4779
        %v4781 = vpop.f32.mrb[0].mxu0
        %4782 = vmatprep.mubr.f32.mxu0 0.0
        %4783 = vmatmul.mubr.f32.gmra.mrb[0].mxu0 %v3454
        %v4784 = vpop.f32.mrb[0].mxu0
        %v4785 = vadd.f32 %v4560, %v4784
        %v4786 = vpop.f32.mrb[0].mxu0
        %4787 = vmatprep.mubr.f32.mxu0 0.0
        %4788 = vmatmul.mubr.f32.gmra.mrb[0].mxu0 %v3457
        %v4789 = vpop.f32.mrb[0].mxu0
        %v4790 = vadd.f32 %v4565, %v4789
        %v4791 = vpop.f32.mrb[0].mxu0
        %4792 = vmatprep.mubr.f32.mxu0 0.0
        %4793 = vmatmul.mubr.f32.gmra.mrb[0].mxu0 %v3459
        %v4794 = vpop.f32.mrb[0].mxu0
        %v4795 = vadd.f32 %v4570, %v4794
        %v4796 = vpop.f32.mrb[0].mxu0
        %4797 = vmatprep.mubr.f32.mxu0 0.0
        %4798 = vmatmul.mubr.f32.gmra.mrb[0].mxu0 %v3462
        %v4799 = vpop.f32.mrb[0].mxu0
        %v4800 = vadd.f32 %v4575, %v4799
        %v4801 = vpop.f32.mrb[0].mxu0
        %4802 = vmatprep.mubr.f32.mxu0 0.0
        %4803 = vmatmul.mubr.f32.gmra.mrb[0].mxu0 %v3464
        %v4804 = vpop.f32.mrb[0].mxu0
        %v4805 = vadd.f32 %v4580, %v4804
        %v4806 = vpop.f32.mrb[0].mxu0
        %4807 = vmatprep.mubr.f32.mxu0 0.0
        %4808 = vmatmul.mubr.f32.gmra.mrb[0].mxu0 %v3467
        %v4809 = vpop.f32.mrb[0].mxu0
        %v4810 = vadd.f32 %v4585, %v4809
        %v4811 = vpop.f32.mrb[0].mxu0
        %4812 = vmatprep.mubr.f32.mxu0 0.0
        %4813 = vmatmul.mubr.f32.gmra.mrb[0].mxu0 %v3469
        %v4814 = vpop.f32.mrb[0].mxu0
        %v4815 = vadd.f32 %v4590, %v4814
        %v4816 = vpop.f32.mrb[0].mxu0
        %4817 = vdwg.mxu0
        %s4818 = scalar_lea.vmem [#allocation3], 48
        %v4819 = vld [vmem:[%s4818] sm:$0xff]
        %v4820 = vld [vmem:[%s4818 + $0x8] sm:$0xff]
        %v4821 = vld [vmem:[%s4818 + $0x10] sm:$0x3]
        %v4822 = vld [vmem:[%s4818 + $0x18] sm:$0xff]
        %v4823 = vld [vmem:[%s4818 + $0x20] sm:$0xff]
        %v4824 = vld [vmem:[%s4818 + $0x28] sm:$0x3]
        %v4825 = vld [vmem:[%s4818 + $0x30] sm:$0xff]
        %v4826 = vld [vmem:[%s4818 + $0x38] sm:$0xff]
        %v4827 = vld [vmem:[%s4818 + $0x40] sm:$0x3]
        %v4828 = vld [vmem:[%s4818 + $0x48] sm:$0xff]
        %v4829 = vld [vmem:[%s4818 + $0x50] sm:$0xff]
        %v4830 = vld [vmem:[%s4818 + $0x58] sm:$0x3]
        %v4831 = vld [vmem:[%s4818 + $0x60] sm:$0xff]
        %v4832 = vld [vmem:[%s4818 + $0x68] sm:$0xff]
        %v4833 = vld [vmem:[%s4818 + $0x70] sm:$0x3]
        %v4834 = vld [vmem:[%s4818 + $0x78] sm:$0xff]
        %v4835 = vld [vmem:[%s4818 + $0x80] sm:$0xff]
        %v4836 = vld [vmem:[%s4818 + $0x88] sm:$0x3]
        %v4837 = vld [vmem:[%s4818 + $0x90] sm:$0xff]
        %v4838 = vld [vmem:[%s4818 + $0x98] sm:$0xff]
        %v4839 = vld [vmem:[%s4818 + $0xa0] sm:$0x3]
        %v4840 = vld [vmem:[%s4818 + $0xa8] sm:$0xff]
        %v4841 = vld [vmem:[%s4818 + $0xb0] sm:$0xff]
        %v4842 = vld [vmem:[%s4818 + $0xb8] sm:$0x3]
        %v4843 = vld [vmem:[%s4818 + $0xc0] sm:$0xff]
        %v4844 = vld [vmem:[%s4818 + $0xc8] sm:$0xff]
        %v4845 = vld [vmem:[%s4818 + $0xd0] sm:$0x3]
        %v4846 = vld [vmem:[%s4818 + $0xd8] sm:$0xff]
        %v4847 = vld [vmem:[%s4818 + $0xe0] sm:$0xff]
        %v4848 = vld [vmem:[%s4818 + $0xe8] sm:$0x3]
        %v4849 = vld [vmem:[%s4818 + $0xf0] sm:$0xff]
        %v4850 = vld [vmem:[%s4818 + $0xf8] sm:$0xff]
        %v4851 = vld [vmem:[%s4818 + $0x100] sm:$0x3]
        %v4852 = vld [vmem:[%s4818 + $0x108] sm:$0xff]
        %v4853 = vld [vmem:[%s4818 + $0x110] sm:$0xff]
        %v4854 = vld [vmem:[%s4818 + $0x118] sm:$0x3]
        %v4855 = vld [vmem:[%s4818 + $0x120] sm:$0xff]
        %v4856 = vld [vmem:[%s4818 + $0x128] sm:$0xff]
        %v4857 = vld [vmem:[%s4818 + $0x130] sm:$0x3]
        %v4858 = vld [vmem:[%s4818 + $0x138] sm:$0xff]
        %v4859 = vld [vmem:[%s4818 + $0x140] sm:$0xff]
        %v4860 = vld [vmem:[%s4818 + $0x148] sm:$0x3]
        %v4861 = vld [vmem:[%s4818 + $0x150] sm:$0xff]
        %v4862 = vld [vmem:[%s4818 + $0x158] sm:$0xff]
        %v4863 = vld [vmem:[%s4818 + $0x160] sm:$0x3]
        %v4864 = vld [vmem:[%s4818 + $0x168] sm:$0xff]
        %v4865 = vld [vmem:[%s4818 + $0x170] sm:$0xff]
        %v4866 = vld [vmem:[%s4818 + $0x178] sm:$0x3]
        %v4915 = vrot.slane %v4819, 1
        %v4916 = vrot.slane %v4820, 1
        %v4917 = vsel %vm535, %v4915, %v4916
        %v4918 = vrot.slane %v4821, 1
        %v4919 = vsel %vm535, %v4916, %v4918
        %v4920 = vrot.slane %v4822, 1
        %v4921 = vrot.slane %v4823, 1
        %v4922 = vsel %vm535, %v4920, %v4921
        %v4923 = vrot.slane %v4824, 1
        %v4924 = vsel %vm535, %v4921, %v4923
        %v4925 = vrot.slane %v4825, 1
        %v4926 = vrot.slane %v4826, 1
        %v4927 = vsel %vm535, %v4925, %v4926
        %v4928 = vrot.slane %v4827, 1
        %v4929 = vsel %vm535, %v4926, %v4928
        %v4930 = vrot.slane %v4828, 1
        %v4931 = vrot.slane %v4829, 1
        %v4932 = vsel %vm535, %v4930, %v4931
        %v4933 = vrot.slane %v4830, 1
        %v4934 = vsel %vm535, %v4931, %v4933
        %v4935 = vrot.slane %v4831, 1
        %v4936 = vrot.slane %v4832, 1
        %v4937 = vsel %vm535, %v4935, %v4936
        %v4938 = vrot.slane %v4833, 1
        %v4939 = vsel %vm535, %v4936, %v4938
        %v4940 = vrot.slane %v4834, 1
        %v4941 = vrot.slane %v4835, 1
        %v4942 = vsel %vm535, %v4940, %v4941
        %v4943 = vrot.slane %v4836, 1
        %v4944 = vsel %vm535, %v4941, %v4943
        %v4945 = vrot.slane %v4837, 1
        %v4946 = vrot.slane %v4838, 1
        %v4947 = vsel %vm535, %v4945, %v4946
        %v4948 = vrot.slane %v4839, 1
        %v4949 = vsel %vm535, %v4946, %v4948
        %v4950 = vrot.slane %v4840, 1
        %v4951 = vrot.slane %v4841, 1
        %v4952 = vsel %vm535, %v4950, %v4951
        %v4953 = vrot.slane %v4842, 1
        %v4954 = vsel %vm535, %v4951, %v4953
        %v4955 = vrot.slane %v4843, 1
        %v4956 = vrot.slane %v4844, 1
        %v4957 = vsel %vm535, %v4955, %v4956
        %v4958 = vrot.slane %v4845, 1
        %v4959 = vsel %vm535, %v4956, %v4958
        %v4960 = vrot.slane %v4846, 1
        %v4961 = vrot.slane %v4847, 1
        %v4962 = vsel %vm535, %v4960, %v4961
        %v4963 = vrot.slane %v4848, 1
        %v4964 = vsel %vm535, %v4961, %v4963
        %v4965 = vrot.slane %v4849, 1
        %v4966 = vrot.slane %v4850, 1
        %v4967 = vsel %vm535, %v4965, %v4966
        %v4968 = vrot.slane %v4851, 1
        %v4969 = vsel %vm535, %v4966, %v4968
        %v4970 = vrot.slane %v4852, 1
        %v4971 = vrot.slane %v4853, 1
        %v4972 = vsel %vm535, %v4970, %v4971
        %v4973 = vrot.slane %v4854, 1
        %v4974 = vsel %vm535, %v4971, %v4973
        %v4975 = vrot.slane %v4855, 1
        %v4976 = vrot.slane %v4856, 1
        %v4977 = vsel %vm535, %v4975, %v4976
        %v4978 = vrot.slane %v4857, 1
        %v4979 = vsel %vm535, %v4976, %v4978
        %v4980 = vrot.slane %v4858, 1
        %v4981 = vrot.slane %v4859, 1
        %v4982 = vsel %vm535, %v4980, %v4981
        %v4983 = vrot.slane %v4860, 1
        %v4984 = vsel %vm535, %v4981, %v4983
        %v4985 = vrot.slane %v4861, 1
        %v4986 = vrot.slane %v4862, 1
        %v4987 = vsel %vm535, %v4985, %v4986
        %v4988 = vrot.slane %v4863, 1
        %v4989 = vsel %vm535, %v4986, %v4988
        %v4990 = vrot.slane %v4864, 1
        %v4991 = vrot.slane %v4865, 1
        %v4992 = vsel %vm535, %v4990, %v4991
        %v4993 = vrot.slane %v4866, 1
        %v4994 = vsel %vm535, %v4991, %v4993
        %v5027 = vrot.slane %v4819, 2
        %v5028 = vrot.slane %v4820, 2
        %v5029 = vsel %vm648, %v5027, %v5028
        %v5030 = vrot.slane %v4821, 2
        %v5031 = vsel %vm648, %v5028, %v5030
        %v5032 = vrot.slane %v4822, 2
        %v5033 = vrot.slane %v4823, 2
        %v5034 = vsel %vm648, %v5032, %v5033
        %v5035 = vrot.slane %v4824, 2
        %v5036 = vsel %vm648, %v5033, %v5035
        %v5037 = vrot.slane %v4825, 2
        %v5038 = vrot.slane %v4826, 2
        %v5039 = vsel %vm648, %v5037, %v5038
        %v5040 = vrot.slane %v4827, 2
        %v5041 = vsel %vm648, %v5038, %v5040
        %v5042 = vrot.slane %v4828, 2
        %v5043 = vrot.slane %v4829, 2
        %v5044 = vsel %vm648, %v5042, %v5043
        %v5045 = vrot.slane %v4830, 2
        %v5046 = vsel %vm648, %v5043, %v5045
        %v5047 = vrot.slane %v4831, 2
        %v5048 = vrot.slane %v4832, 2
        %v5049 = vsel %vm648, %v5047, %v5048
        %v5050 = vrot.slane %v4833, 2
        %v5051 = vsel %vm648, %v5048, %v5050
        %v5052 = vrot.slane %v4834, 2
        %v5053 = vrot.slane %v4835, 2
        %v5054 = vsel %vm648, %v5052, %v5053
        %v5055 = vrot.slane %v4836, 2
        %v5056 = vsel %vm648, %v5053, %v5055
        %v5057 = vrot.slane %v4837, 2
        %v5058 = vrot.slane %v4838, 2
        %v5059 = vsel %vm648, %v5057, %v5058
        %v5060 = vrot.slane %v4839, 2
        %v5061 = vsel %vm648, %v5058, %v5060
        %v5062 = vrot.slane %v4840, 2
        %v5063 = vrot.slane %v4841, 2
        %v5064 = vsel %vm648, %v5062, %v5063
        %v5065 = vrot.slane %v4842, 2
        %v5066 = vsel %vm648, %v5063, %v5065
        %v5067 = vrot.slane %v4843, 2
        %v5068 = vrot.slane %v4844, 2
        %v5069 = vsel %vm648, %v5067, %v5068
        %v5070 = vrot.slane %v4845, 2
        %v5071 = vsel %vm648, %v5068, %v5070
        %v5072 = vrot.slane %v4846, 2
        %v5073 = vrot.slane %v4847, 2
        %v5074 = vsel %vm648, %v5072, %v5073
        %v5075 = vrot.slane %v4848, 2
        %v5076 = vsel %vm648, %v5073, %v5075
        %v5077 = vrot.slane %v4849, 2
        %v5078 = vrot.slane %v4850, 2
        %v5079 = vsel %vm648, %v5077, %v5078
        %v5080 = vrot.slane %v4851, 2
        %v5081 = vsel %vm648, %v5078, %v5080
        %v5082 = vrot.slane %v4852, 2
        %v5083 = vrot.slane %v4853, 2
        %v5084 = vsel %vm648, %v5082, %v5083
        %v5085 = vrot.slane %v4854, 2
        %v5086 = vsel %vm648, %v5083, %v5085
        %v5087 = vrot.slane %v4855, 2
        %v5088 = vrot.slane %v4856, 2
        %v5089 = vsel %vm648, %v5087, %v5088
        %v5090 = vrot.slane %v4857, 2
        %v5091 = vsel %vm648, %v5088, %v5090
        %v5092 = vrot.slane %v4858, 2
        %v5093 = vrot.slane %v4859, 2
        %v5094 = vsel %vm648, %v5092, %v5093
        %v5095 = vrot.slane %v4860, 2
        %v5096 = vsel %vm648, %v5093, %v5095
        %v5097 = vrot.slane %v4861, 2
        %v5098 = vrot.slane %v4862, 2
        %v5099 = vsel %vm648, %v5097, %v5098
        %v5100 = vrot.slane %v4863, 2
        %v5101 = vsel %vm648, %v5098, %v5100
        %v5102 = vrot.slane %v4864, 2
        %v5103 = vrot.slane %v4865, 2
        %v5104 = vsel %vm648, %v5102, %v5103
        %v5105 = vrot.slane %v4866, 2
        %v5106 = vsel %vm648, %v5103, %v5105
        %v5139 = vld [vmem:[#allocation9 + $0x300] sm:$0xff]
        %v5140 = vld [vmem:[#allocation9 + $0x308] sm:$0xff]
        %v5141 = vld [vmem:[#allocation9 + $0x310] sm:$0xff]
        %v5142 = vld [vmem:[#allocation9 + $0x318] sm:$0xff]
        %v5143 = vld [vmem:[#allocation9 + $0x320] sm:$0xff]
        %v5144 = vld [vmem:[#allocation9 + $0x328] sm:$0xff]
        %v5145 = vld [vmem:[#allocation9 + $0x330] sm:$0xff]
        %v5146 = vld [vmem:[#allocation9 + $0x338] sm:$0xff]
        %v5147 = vld [vmem:[#allocation9 + $0x340] sm:$0xff]
        %v5148 = vld [vmem:[#allocation9 + $0x348] sm:$0xff]
        %v5149 = vld [vmem:[#allocation9 + $0x350] sm:$0xff]
        %v5150 = vld [vmem:[#allocation9 + $0x358] sm:$0xff]
        %v5151 = vld [vmem:[#allocation9 + $0x360] sm:$0xff]
        %v5152 = vld [vmem:[#allocation9 + $0x368] sm:$0xff]
        %v5153 = vld [vmem:[#allocation9 + $0x370] sm:$0xff]
        %v5154 = vld [vmem:[#allocation9 + $0x378] sm:$0xff]
        %v5155 = vld [vmem:[#allocation9 + $0x380] sm:$0xff]
        %v5156 = vld [vmem:[#allocation9 + $0x388] sm:$0xff]
        %v5157 = vld [vmem:[#allocation9 + $0x390] sm:$0xff]
        %v5158 = vld [vmem:[#allocation9 + $0x398] sm:$0xff]
        %v5159 = vld [vmem:[#allocation9 + $0x3a0] sm:$0xff]
        %v5160 = vld [vmem:[#allocation9 + $0x3a8] sm:$0xff]
        %v5161 = vld [vmem:[#allocation9 + $0x3b0] sm:$0xff]
        %v5162 = vld [vmem:[#allocation9 + $0x3b8] sm:$0xff]
        %v5163 = vld [vmem:[#allocation9 + $0x3c0] sm:$0xff]
        %v5164 = vld [vmem:[#allocation9 + $0x3c8] sm:$0xff]
        %v5165 = vld [vmem:[#allocation9 + $0x3d0] sm:$0xff]
        %v5166 = vld [vmem:[#allocation9 + $0x3d8] sm:$0xff]
        %v5167 = vld [vmem:[#allocation9 + $0x3e0] sm:$0xff]
        %v5168 = vld [vmem:[#allocation9 + $0x3e8] sm:$0xff]
        %v5169 = vld [vmem:[#allocation9 + $0x3f0] sm:$0xff]
        %v5170 = vld [vmem:[#allocation9 + $0x3f8] sm:$0xff]
        %v5171 = vld [vmem:[#allocation9 + $0x400] sm:$0xff]
        %v5172 = vld [vmem:[#allocation9 + $0x408] sm:$0xff]
        %v5173 = vld [vmem:[#allocation9 + $0x410] sm:$0xff]
        %v5174 = vld [vmem:[#allocation9 + $0x418] sm:$0xff]
        %v5175 = vld [vmem:[#allocation9 + $0x420] sm:$0xff]
        %v5176 = vld [vmem:[#allocation9 + $0x428] sm:$0xff]
        %v5177 = vld [vmem:[#allocation9 + $0x430] sm:$0xff]
        %v5178 = vld [vmem:[#allocation9 + $0x438] sm:$0xff]
        %v5179 = vld [vmem:[#allocation9 + $0x440] sm:$0xff]
        %v5180 = vld [vmem:[#allocation9 + $0x448] sm:$0xff]
        %v5181 = vld [vmem:[#allocation9 + $0x450] sm:$0xff]
        %v5182 = vld [vmem:[#allocation9 + $0x458] sm:$0xff]
        %v5183 = vld [vmem:[#allocation9 + $0x460] sm:$0xff]
        %v5184 = vld [vmem:[#allocation9 + $0x468] sm:$0xff]
        %v5185 = vld [vmem:[#allocation9 + $0x470] sm:$0xff]
        %v5186 = vld [vmem:[#allocation9 + $0x478] sm:$0xff]
        %5187 = vmatprep.subr.mxu0 0.0
        %5188 = vmatpush1.msra.mxu0 %v5139
        %5189 = vmatprep.subr.mxu0 0.0
        %5190 = vmatpush1.msra.mxu0 %v5140
        %5191 = vmatprep.subr.mxu0 0.0
        %5192 = vmatpush1.msra.mxu0 %v5141
        %5193 = vmatprep.subr.mxu0 0.0
        %5194 = vmatpush1.msra.mxu0 %v5142
        %5195 = vmatprep.subr.mxu0 0.0
        %5196 = vmatpush1.msra.mxu0 %v5143
        %5197 = vmatprep.subr.mxu0 0.0
        %5198 = vmatpush1.msra.mxu0 %v5144
        %5199 = vmatprep.subr.mxu0 0.0
        %5200 = vmatpush1.msra.mxu0 %v5145
        %5201 = vmatprep.subr.mxu0 0.0
        %5202 = vmatpush1.msra.mxu0 %v5146
        %5203 = vmatprep.subr.mxu0 0.0
        %5204 = vmatpush1.msra.mxu0 %v5147
        %5205 = vmatprep.subr.mxu0 0.0
        %5206 = vmatpush1.msra.mxu0 %v5148
        %5207 = vmatprep.subr.mxu0 0.0
        %5208 = vmatpush1.msra.mxu0 %v5149
        %5209 = vmatprep.subr.mxu0 0.0
        %5210 = vmatpush1.msra.mxu0 %v5150
        %5211 = vmatprep.subr.mxu0 0.0
        %5212 = vmatpush1.msra.mxu0 %v5151
        %5213 = vmatprep.subr.mxu0 0.0
        %5214 = vmatpush1.msra.mxu0 %v5152
        %5215 = vmatprep.subr.mxu0 0.0
        %5216 = vmatpush1.msra.mxu0 %v5153
        %5217 = vmatprep.subr.mxu0 0.0
        %5218 = vmatpush1.msra.mxu0 %v5154
        %5219 = vmatprep.subr.mxu0 0.0
        %5220 = vmatpush1.msra.mxu0 %v5155
        %5221 = vmatprep.subr.mxu0 0.0
        %5222 = vmatpush1.msra.mxu0 %v5156
        %5223 = vmatprep.subr.mxu0 0.0
        %5224 = vmatpush1.msra.mxu0 %v5157
        %5225 = vmatprep.subr.mxu0 0.0
        %5226 = vmatpush1.msra.mxu0 %v5158
        %5227 = vmatprep.subr.mxu0 0.0
        %5228 = vmatpush1.msra.mxu0 %v5159
        %5229 = vmatprep.subr.mxu0 0.0
        %5230 = vmatpush1.msra.mxu0 %v5160
        %5231 = vmatprep.subr.mxu0 0.0
        %5232 = vmatpush1.msra.mxu0 %v5161
        %5233 = vmatprep.subr.mxu0 0.0
        %5234 = vmatpush1.msra.mxu0 %v5162
        %5235 = vmatprep.subr.mxu0 0.0
        %5236 = vmatpush1.msra.mxu0 %v5163
        %5237 = vmatprep.subr.mxu0 0.0
        %5238 = vmatpush1.msra.mxu0 %v5164
        %5239 = vmatprep.subr.mxu0 0.0
        %5240 = vmatpush1.msra.mxu0 %v5165
        %5241 = vmatprep.subr.mxu0 0.0
        %5242 = vmatpush1.msra.mxu0 %v5166
        %5243 = vmatprep.subr.mxu0 0.0
        %5244 = vmatpush1.msra.mxu0 %v5167
        %5245 = vmatprep.subr.mxu0 0.0
        %5246 = vmatpush1.msra.mxu0 %v5168
        %5247 = vmatprep.subr.mxu0 0.0
        %5248 = vmatpush1.msra.mxu0 %v5169
        %5249 = vmatprep.subr.mxu0 0.0
        %5250 = vmatpush1.msra.mxu0 %v5170
        %5251 = vmatprep.mubr.f32.mxu0 %v4917
        %5252 = vmatmul.mubr.f32.gmra.mrb[0].mxu0 %v4819
        %v5253 = vpop.f32.mrb[0].mxu0
        %v5254 = vadd.f32 0.0, %v5253
        %v5255 = vpop.f32.mrb[0].mxu0
        %5256 = vmatprep.mubr.f32.mxu0 %v4919
        %5257 = vmatmul.mubr.f32.gmra.mrb[0].mxu0 %v4820
        %v5258 = vpop.f32.mrb[0].mxu0
        %v5259 = vadd.f32 0.0, %v5258
        %v5260 = vpop.f32.mrb[0].mxu0
        %5261 = vmatprep.mubr.f32.mxu0 %v4922
        %5262 = vmatmul.mubr.f32.gmra.mrb[0].mxu0 %v4822
        %v5263 = vpop.f32.mrb[0].mxu0
        %v5264 = vadd.f32 0.0, %v5263
        %v5265 = vpop.f32.mrb[0].mxu0
        %5266 = vmatprep.mubr.f32.mxu0 %v4924
        %5267 = vmatmul.mubr.f32.gmra.mrb[0].mxu0 %v4823
        %v5268 = vpop.f32.mrb[0].mxu0
        %v5269 = vadd.f32 0.0, %v5268
        %v5270 = vpop.f32.mrb[0].mxu0
        %5271 = vmatprep.mubr.f32.mxu0 %v4927
        %5272 = vmatmul.mubr.f32.gmra.mrb[0].mxu0 %v4825
        %v5273 = vpop.f32.mrb[0].mxu0
        %v5274 = vadd.f32 0.0, %v5273
        %v5275 = vpop.f32.mrb[0].mxu0
        %5276 = vmatprep.mubr.f32.mxu0 %v4929
        %5277 = vmatmul.mubr.f32.gmra.mrb[0].mxu0 %v4826
        %v5278 = vpop.f32.mrb[0].mxu0
        %v5279 = vadd.f32 0.0, %v5278
        %v5280 = vpop.f32.mrb[0].mxu0
        %5281 = vmatprep.mubr.f32.mxu0 %v4932
        %5282 = vmatmul.mubr.f32.gmra.mrb[0].mxu0 %v4828
        %v5283 = vpop.f32.mrb[0].mxu0
        %v5284 = vadd.f32 0.0, %v5283
        %v5285 = vpop.f32.mrb[0].mxu0
        %5286 = vmatprep.mubr.f32.mxu0 %v4934
        %5287 = vmatmul.mubr.f32.gmra.mrb[0].mxu0 %v4829
        %v5288 = vpop.f32.mrb[0].mxu0
        %v5289 = vadd.f32 0.0, %v5288
        %v5290 = vpop.f32.mrb[0].mxu0
        %5291 = vmatprep.mubr.f32.mxu0 %v4937
        %5292 = vmatmul.mubr.f32.gmra.mrb[0].mxu0 %v4831
        %v5293 = vpop.f32.mrb[0].mxu0
        %v5294 = vadd.f32 0.0, %v5293
        %v5295 = vpop.f32.mrb[0].mxu0
        %5296 = vmatprep.mubr.f32.mxu0 %v4939
        %5297 = vmatmul.mubr.f32.gmra.mrb[0].mxu0 %v4832
        %v5298 = vpop.f32.mrb[0].mxu0
        %v5299 = vadd.f32 0.0, %v5298
        %v5300 = vpop.f32.mrb[0].mxu0
        %5301 = vmatprep.mubr.f32.mxu0 %v4942
        %5302 = vmatmul.mubr.f32.gmra.mrb[0].mxu0 %v4834
        %v5303 = vpop.f32.mrb[0].mxu0
        %v5304 = vadd.f32 0.0, %v5303
        %v5305 = vpop.f32.mrb[0].mxu0
        %5306 = vmatprep.mubr.f32.mxu0 %v4944
        %5307 = vmatmul.mubr.f32.gmra.mrb[0].mxu0 %v4835
        %v5308 = vpop.f32.mrb[0].mxu0
        %v5309 = vadd.f32 0.0, %v5308
        %v5310 = vpop.f32.mrb[0].mxu0
        %5311 = vmatprep.mubr.f32.mxu0 %v4947
        %5312 = vmatmul.mubr.f32.gmra.mrb[0].mxu0 %v4837
        %v5313 = vpop.f32.mrb[0].mxu0
        %v5314 = vadd.f32 0.0, %v5313
        %v5315 = vpop.f32.mrb[0].mxu0
        %5316 = vmatprep.mubr.f32.mxu0 %v4949
        %5317 = vmatmul.mubr.f32.gmra.mrb[0].mxu0 %v4838
        %v5318 = vpop.f32.mrb[0].mxu0
        %v5319 = vadd.f32 0.0, %v5318
        %v5320 = vpop.f32.mrb[0].mxu0
        %5321 = vmatprep.mubr.f32.mxu0 %v4952
        %5322 = vmatmul.mubr.f32.gmra.mrb[0].mxu0 %v4840
        %v5323 = vpop.f32.mrb[0].mxu0
        %v5324 = vadd.f32 0.0, %v5323
        %v5325 = vpop.f32.mrb[0].mxu0
        %5326 = vmatprep.mubr.f32.mxu0 %v4954
        %5327 = vmatmul.mubr.f32.gmra.mrb[0].mxu0 %v4841
        %v5328 = vpop.f32.mrb[0].mxu0
        %v5329 = vadd.f32 0.0, %v5328
        %v5330 = vpop.f32.mrb[0].mxu0
        %5331 = vmatprep.mubr.f32.mxu0 %v4957
        %5332 = vmatmul.mubr.f32.gmra.mrb[0].mxu0 %v4843
        %v5333 = vpop.f32.mrb[0].mxu0
        %v5334 = vadd.f32 0.0, %v5333
        %v5335 = vpop.f32.mrb[0].mxu0
        %5336 = vmatprep.mubr.f32.mxu0 %v4959
        %5337 = vmatmul.mubr.f32.gmra.mrb[0].mxu0 %v4844
        %v5338 = vpop.f32.mrb[0].mxu0
        %v5339 = vadd.f32 0.0, %v5338
        %v5340 = vpop.f32.mrb[0].mxu0
        %5341 = vmatprep.mubr.f32.mxu0 %v4962
        %5342 = vmatmul.mubr.f32.gmra.mrb[0].mxu0 %v4846
        %v5343 = vpop.f32.mrb[0].mxu0
        %v5344 = vadd.f32 0.0, %v5343
        %v5345 = vpop.f32.mrb[0].mxu0
        %5346 = vmatprep.mubr.f32.mxu0 %v4964
        %5347 = vmatmul.mubr.f32.gmra.mrb[0].mxu0 %v4847
        %v5348 = vpop.f32.mrb[0].mxu0
        %v5349 = vadd.f32 0.0, %v5348
        %v5350 = vpop.f32.mrb[0].mxu0
        %5351 = vmatprep.mubr.f32.mxu0 %v4967
        %5352 = vmatmul.mubr.f32.gmra.mrb[0].mxu0 %v4849
        %v5353 = vpop.f32.mrb[0].mxu0
        %v5354 = vadd.f32 0.0, %v5353
        %v5355 = vpop.f32.mrb[0].mxu0
        %5356 = vmatprep.mubr.f32.mxu0 %v4969
        %5357 = vmatmul.mubr.f32.gmra.mrb[0].mxu0 %v4850
        %v5358 = vpop.f32.mrb[0].mxu0
        %v5359 = vadd.f32 0.0, %v5358
        %v5360 = vpop.f32.mrb[0].mxu0
        %5361 = vmatprep.mubr.f32.mxu0 %v4972
        %5362 = vmatmul.mubr.f32.gmra.mrb[0].mxu0 %v4852
        %v5363 = vpop.f32.mrb[0].mxu0
        %v5364 = vadd.f32 0.0, %v5363
        %v5365 = vpop.f32.mrb[0].mxu0
        %5366 = vmatprep.mubr.f32.mxu0 %v4974
        %5367 = vmatmul.mubr.f32.gmra.mrb[0].mxu0 %v4853
        %v5368 = vpop.f32.mrb[0].mxu0
        %v5369 = vadd.f32 0.0, %v5368
        %v5370 = vpop.f32.mrb[0].mxu0
        %5371 = vmatprep.mubr.f32.mxu0 %v4977
        %5372 = vmatmul.mubr.f32.gmra.mrb[0].mxu0 %v4855
        %v5373 = vpop.f32.mrb[0].mxu0
        %v5374 = vadd.f32 0.0, %v5373
        %v5375 = vpop.f32.mrb[0].mxu0
        %5376 = vmatprep.mubr.f32.mxu0 %v4979
        %5377 = vmatmul.mubr.f32.gmra.mrb[0].mxu0 %v4856
        %v5378 = vpop.f32.mrb[0].mxu0
        %v5379 = vadd.f32 0.0, %v5378
        %v5380 = vpop.f32.mrb[0].mxu0
        %5381 = vmatprep.mubr.f32.mxu0 %v4982
        %5382 = vmatmul.mubr.f32.gmra.mrb[0].mxu0 %v4858
        %v5383 = vpop.f32.mrb[0].mxu0
        %v5384 = vadd.f32 0.0, %v5383
        %v5385 = vpop.f32.mrb[0].mxu0
        %5386 = vmatprep.mubr.f32.mxu0 %v4984
        %5387 = vmatmul.mubr.f32.gmra.mrb[0].mxu0 %v4859
        %v5388 = vpop.f32.mrb[0].mxu0
        %v5389 = vadd.f32 0.0, %v5388
        %v5390 = vpop.f32.mrb[0].mxu0
        %5391 = vmatprep.mubr.f32.mxu0 %v4987
        %5392 = vmatmul.mubr.f32.gmra.mrb[0].mxu0 %v4861
        %v5393 = vpop.f32.mrb[0].mxu0
        %v5394 = vadd.f32 0.0, %v5393
        %v5395 = vpop.f32.mrb[0].mxu0
        %5396 = vmatprep.mubr.f32.mxu0 %v4989
        %5397 = vmatmul.mubr.f32.gmra.mrb[0].mxu0 %v4862
        %v5398 = vpop.f32.mrb[0].mxu0
        %v5399 = vadd.f32 0.0, %v5398
        %v5400 = vpop.f32.mrb[0].mxu0
        %5401 = vmatprep.mubr.f32.mxu0 %v4992
        %5402 = vmatmul.mubr.f32.gmra.mrb[0].mxu0 %v4864
        %v5403 = vpop.f32.mrb[0].mxu0
        %v5404 = vadd.f32 0.0, %v5403
        %v5405 = vpop.f32.mrb[0].mxu0
        %5406 = vmatprep.mubr.f32.mxu0 %v4994
        %5407 = vmatmul.mubr.f32.gmra.mrb[0].mxu0 %v4865
        %v5408 = vpop.f32.mrb[0].mxu0
        %v5409 = vadd.f32 0.0, %v5408
        %v5410 = vpop.f32.mrb[0].mxu0
        %5411 = vdwg.mxu0
        %5412 = vmatprep.subr.mxu0 0.0
        %5413 = vmatpush1.msra.mxu0 %v5171
        %5414 = vmatprep.subr.mxu0 0.0
        %5415 = vmatpush1.msra.mxu0 %v5172
        %5416 = vmatprep.subr.mxu0 0.0
        %5417 = vmatpush1.msra.mxu0 %v5173
        %5418 = vmatprep.subr.mxu0 0.0
        %5419 = vmatpush1.msra.mxu0 %v5174
        %5420 = vmatprep.subr.mxu0 0.0
        %5421 = vmatpush1.msra.mxu0 %v5175
        %5422 = vmatprep.subr.mxu0 0.0
        %5423 = vmatpush1.msra.mxu0 %v5176
        %5424 = vmatprep.subr.mxu0 0.0
        %5425 = vmatpush1.msra.mxu0 %v5177
        %5426 = vmatprep.subr.mxu0 0.0
        %5427 = vmatpush1.msra.mxu0 %v5178
        %5428 = vmatprep.subr.mxu0 0.0
        %5429 = vmatpush1.msra.mxu0 %v5179
        %5430 = vmatprep.subr.mxu0 0.0
        %5431 = vmatpush1.msra.mxu0 %v5180
        %5432 = vmatprep.subr.mxu0 0.0
        %5433 = vmatpush1.msra.mxu0 %v5181
        %5434 = vmatprep.subr.mxu0 0.0
        %5435 = vmatpush1.msra.mxu0 %v5182
        %5436 = vmatprep.subr.mxu0 0.0
        %5437 = vmatpush1.msra.mxu0 %v5183
        %5438 = vmatprep.subr.mxu0 0.0
        %5439 = vmatpush1.msra.mxu0 %v5184
        %5440 = vmatprep.subr.mxu0 0.0
        %5441 = vmatpush1.msra.mxu0 %v5185
        %5442 = vmatprep.subr.mxu0 0.0
        %5443 = vmatpush1.msra.mxu0 %v5186
        %5444 = vmatprep.subr.mxu0 0.0
        %5445 = vmatpush1.msra.mxu0 0.0
        %5446 = vmatprep.subr.mxu0 0.0
        %5447 = vmatpush1.msra.mxu0 0.0
        %5448 = vmatprep.subr.mxu0 0.0
        %5449 = vmatpush1.msra.mxu0 0.0
        %5450 = vmatprep.subr.mxu0 0.0
        %5451 = vmatpush1.msra.mxu0 0.0
        %5452 = vmatprep.subr.mxu0 0.0
        %5453 = vmatpush1.msra.mxu0 0.0
        %5454 = vmatprep.subr.mxu0 0.0
        %5455 = vmatpush1.msra.mxu0 0.0
        %5456 = vmatprep.subr.mxu0 0.0
        %5457 = vmatpush1.msra.mxu0 0.0
        %5458 = vmatprep.subr.mxu0 0.0
        %5459 = vmatpush1.msra.mxu0 0.0
        %5460 = vmatprep.subr.mxu0 0.0
        %5461 = vmatpush1.msra.mxu0 0.0
        %5462 = vmatprep.subr.mxu0 0.0
        %5463 = vmatpush1.msra.mxu0 0.0
        %5464 = vmatprep.subr.mxu0 0.0
        %5465 = vmatpush1.msra.mxu0 0.0
        %5466 = vmatprep.subr.mxu0 0.0
        %5467 = vmatpush1.msra.mxu0 0.0
        %5468 = vmatprep.subr.mxu0 0.0
        %5469 = vmatpush1.msra.mxu0 0.0
        %5470 = vmatprep.subr.mxu0 0.0
        %5471 = vmatpush1.msra.mxu0 0.0
        %5472 = vmatprep.subr.mxu0 0.0
        %5473 = vmatpush1.msra.mxu0 0.0
        %5474 = vmatprep.subr.mxu0 0.0
        %5475 = vmatpush1.msra.mxu0 0.0
        %5476 = vmatprep.mubr.f32.mxu0 0.0
        %5477 = vmatmul.mubr.f32.gmra.mrb[0].mxu0 %v5029
        %v5478 = vpop.f32.mrb[0].mxu0
        %v5479 = vadd.f32 %v5254, %v5478
        %v5480 = vpop.f32.mrb[0].mxu0
        %5481 = vmatprep.mubr.f32.mxu0 0.0
        %5482 = vmatmul.mubr.f32.gmra.mrb[0].mxu0 %v5031
        %v5483 = vpop.f32.mrb[0].mxu0
        %v5484 = vadd.f32 %v5259, %v5483
        %v5485 = vpop.f32.mrb[0].mxu0
        %5486 = vmatprep.mubr.f32.mxu0 0.0
        %5487 = vmatmul.mubr.f32.gmra.mrb[0].mxu0 %v5034
        %v5488 = vpop.f32.mrb[0].mxu0
        %v5489 = vadd.f32 %v5264, %v5488
        %v5490 = vpop.f32.mrb[0].mxu0
        %5491 = vmatprep.mubr.f32.mxu0 0.0
        %5492 = vmatmul.mubr.f32.gmra.mrb[0].mxu0 %v5036
        %v5493 = vpop.f32.mrb[0].mxu0
        %v5494 = vadd.f32 %v5269, %v5493
        %v5495 = vpop.f32.mrb[0].mxu0
        %5496 = vmatprep.mubr.f32.mxu0 0.0
        %5497 = vmatmul.mubr.f32.gmra.mrb[0].mxu0 %v5039
        %v5498 = vpop.f32.mrb[0].mxu0
        %v5499 = vadd.f32 %v5274, %v5498
        %v5500 = vpop.f32.mrb[0].mxu0
        %5501 = vmatprep.mubr.f32.mxu0 0.0
        %5502 = vmatmul.mubr.f32.gmra.mrb[0].mxu0 %v5041
        %v5503 = vpop.f32.mrb[0].mxu0
        %v5504 = vadd.f32 %v5279, %v5503
        %v5505 = vpop.f32.mrb[0].mxu0
        %5506 = vmatprep.mubr.f32.mxu0 0.0
        %5507 = vmatmul.mubr.f32.gmra.mrb[0].mxu0 %v5044
        %v5508 = vpop.f32.mrb[0].mxu0
        %v5509 = vadd.f32 %v5284, %v5508
        %v5510 = vpop.f32.mrb[0].mxu0
        %5511 = vmatprep.mubr.f32.mxu0 0.0
        %5512 = vmatmul.mubr.f32.gmra.mrb[0].mxu0 %v5046
        %v5513 = vpop.f32.mrb[0].mxu0
        %v5514 = vadd.f32 %v5289, %v5513
        %v5515 = vpop.f32.mrb[0].mxu0
        %5516 = vmatprep.mubr.f32.mxu0 0.0
        %5517 = vmatmul.mubr.f32.gmra.mrb[0].mxu0 %v5049
        %v5518 = vpop.f32.mrb[0].mxu0
        %v5519 = vadd.f32 %v5294, %v5518
        %v5520 = vpop.f32.mrb[0].mxu0
        %5521 = vmatprep.mubr.f32.mxu0 0.0
        %5522 = vmatmul.mubr.f32.gmra.mrb[0].mxu0 %v5051
        %v5523 = vpop.f32.mrb[0].mxu0
        %v5524 = vadd.f32 %v5299, %v5523
        %v5525 = vpop.f32.mrb[0].mxu0
        %5526 = vmatprep.mubr.f32.mxu0 0.0
        %5527 = vmatmul.mubr.f32.gmra.mrb[0].mxu0 %v5054
        %v5528 = vpop.f32.mrb[0].mxu0
        %v5529 = vadd.f32 %v5304, %v5528
        %v5530 = vpop.f32.mrb[0].mxu0
        %5531 = vmatprep.mubr.f32.mxu0 0.0
        %5532 = vmatmul.mubr.f32.gmra.mrb[0].mxu0 %v5056
        %v5533 = vpop.f32.mrb[0].mxu0
        %v5534 = vadd.f32 %v5309, %v5533
        %v5535 = vpop.f32.mrb[0].mxu0
        %5536 = vmatprep.mubr.f32.mxu0 0.0
        %5537 = vmatmul.mubr.f32.gmra.mrb[0].mxu0 %v5059
        %v5538 = vpop.f32.mrb[0].mxu0
        %v5539 = vadd.f32 %v5314, %v5538
        %v5540 = vpop.f32.mrb[0].mxu0
        %5541 = vmatprep.mubr.f32.mxu0 0.0
        %5542 = vmatmul.mubr.f32.gmra.mrb[0].mxu0 %v5061
        %v5543 = vpop.f32.mrb[0].mxu0
        %v5544 = vadd.f32 %v5319, %v5543
        %v5545 = vpop.f32.mrb[0].mxu0
        %5546 = vmatprep.mubr.f32.mxu0 0.0
        %5547 = vmatmul.mubr.f32.gmra.mrb[0].mxu0 %v5064
        %v5548 = vpop.f32.mrb[0].mxu0
        %v5549 = vadd.f32 %v5324, %v5548
        %v5550 = vpop.f32.mrb[0].mxu0
        %5551 = vmatprep.mubr.f32.mxu0 0.0
        %5552 = vmatmul.mubr.f32.gmra.mrb[0].mxu0 %v5066
        %v5553 = vpop.f32.mrb[0].mxu0
        %v5554 = vadd.f32 %v5329, %v5553
        %v5555 = vpop.f32.mrb[0].mxu0
        %5556 = vmatprep.mubr.f32.mxu0 0.0
        %5557 = vmatmul.mubr.f32.gmra.mrb[0].mxu0 %v5069
        %v5558 = vpop.f32.mrb[0].mxu0
        %v5559 = vadd.f32 %v5334, %v5558
        %v5560 = vpop.f32.mrb[0].mxu0
        %5561 = vmatprep.mubr.f32.mxu0 0.0
        %5562 = vmatmul.mubr.f32.gmra.mrb[0].mxu0 %v5071
        %v5563 = vpop.f32.mrb[0].mxu0
        %v5564 = vadd.f32 %v5339, %v5563
        %v5565 = vpop.f32.mrb[0].mxu0
        %5566 = vmatprep.mubr.f32.mxu0 0.0
        %5567 = vmatmul.mubr.f32.gmra.mrb[0].mxu0 %v5074
        %v5568 = vpop.f32.mrb[0].mxu0
        %v5569 = vadd.f32 %v5344, %v5568
        %v5570 = vpop.f32.mrb[0].mxu0
        %5571 = vmatprep.mubr.f32.mxu0 0.0
        %5572 = vmatmul.mubr.f32.gmra.mrb[0].mxu0 %v5076
        %v5573 = vpop.f32.mrb[0].mxu0
        %v5574 = vadd.f32 %v5349, %v5573
        %v5575 = vpop.f32.mrb[0].mxu0
        %5576 = vmatprep.mubr.f32.mxu0 0.0
        %5577 = vmatmul.mubr.f32.gmra.mrb[0].mxu0 %v5079
        %v5578 = vpop.f32.mrb[0].mxu0
        %v5579 = vadd.f32 %v5354, %v5578
        %v5580 = vpop.f32.mrb[0].mxu0
        %5581 = vmatprep.mubr.f32.mxu0 0.0
        %5582 = vmatmul.mubr.f32.gmra.mrb[0].mxu0 %v5081
        %v5583 = vpop.f32.mrb[0].mxu0
        %v5584 = vadd.f32 %v5359, %v5583
        %v5585 = vpop.f32.mrb[0].mxu0
        %5586 = vmatprep.mubr.f32.mxu0 0.0
        %5587 = vmatmul.mubr.f32.gmra.mrb[0].mxu0 %v5084
        %v5588 = vpop.f32.mrb[0].mxu0
        %v5589 = vadd.f32 %v5364, %v5588
        %v5590 = vpop.f32.mrb[0].mxu0
        %5591 = vmatprep.mubr.f32.mxu0 0.0
        %5592 = vmatmul.mubr.f32.gmra.mrb[0].mxu0 %v5086
        %v5593 = vpop.f32.mrb[0].mxu0
        %v5594 = vadd.f32 %v5369, %v5593
        %v5595 = vpop.f32.mrb[0].mxu0
        %5596 = vmatprep.mubr.f32.mxu0 0.0
        %5597 = vmatmul.mubr.f32.gmra.mrb[0].mxu0 %v5089
        %v5598 = vpop.f32.mrb[0].mxu0
        %v5599 = vadd.f32 %v5374, %v5598
        %v5600 = vpop.f32.mrb[0].mxu0
        %5601 = vmatprep.mubr.f32.mxu0 0.0
        %5602 = vmatmul.mubr.f32.gmra.mrb[0].mxu0 %v5091
        %v5603 = vpop.f32.mrb[0].mxu0
        %v5604 = vadd.f32 %v5379, %v5603
        %v5605 = vpop.f32.mrb[0].mxu0
        %5606 = vmatprep.mubr.f32.mxu0 0.0
        %5607 = vmatmul.mubr.f32.gmra.mrb[0].mxu0 %v5094
        %v5608 = vpop.f32.mrb[0].mxu0
        %v5609 = vadd.f32 %v5384, %v5608
        %v5610 = vpop.f32.mrb[0].mxu0
        %5611 = vmatprep.mubr.f32.mxu0 0.0
        %5612 = vmatmul.mubr.f32.gmra.mrb[0].mxu0 %v5096
        %v5613 = vpop.f32.mrb[0].mxu0
        %v5614 = vadd.f32 %v5389, %v5613
        %v5615 = vpop.f32.mrb[0].mxu0
        %5616 = vmatprep.mubr.f32.mxu0 0.0
        %5617 = vmatmul.mubr.f32.gmra.mrb[0].mxu0 %v5099
        %v5618 = vpop.f32.mrb[0].mxu0
        %v5619 = vadd.f32 %v5394, %v5618
        %v5620 = vpop.f32.mrb[0].mxu0
        %5621 = vmatprep.mubr.f32.mxu0 0.0
        %5622 = vmatmul.mubr.f32.gmra.mrb[0].mxu0 %v5101
        %v5623 = vpop.f32.mrb[0].mxu0
        %v5624 = vadd.f32 %v5399, %v5623
        %v5625 = vpop.f32.mrb[0].mxu0
        %5626 = vmatprep.mubr.f32.mxu0 0.0
        %5627 = vmatmul.mubr.f32.gmra.mrb[0].mxu0 %v5104
        %v5628 = vpop.f32.mrb[0].mxu0
        %v5629 = vadd.f32 %v5404, %v5628
        %v5630 = vpop.f32.mrb[0].mxu0
        %5631 = vmatprep.mubr.f32.mxu0 0.0
        %5632 = vmatmul.mubr.f32.gmra.mrb[0].mxu0 %v5106
        %v5633 = vpop.f32.mrb[0].mxu0
        %v5634 = vadd.f32 %v5409, %v5633
        %v5635 = vpop.f32.mrb[0].mxu0
        %5636 = vdwg.mxu0
        %v5637 = vadd.f32 %v4660, %v5479
        %v5638 = vadd.f32 %v4665, %v5484
        %v5639 = vadd.f32 %v4670, %v5489
        %v5640 = vadd.f32 %v4675, %v5494
        %v5641 = vadd.f32 %v4680, %v5499
        %v5642 = vadd.f32 %v4685, %v5504
        %v5643 = vadd.f32 %v4690, %v5509
        %v5644 = vadd.f32 %v4695, %v5514
        %v5645 = vadd.f32 %v4700, %v5519
        %v5646 = vadd.f32 %v4705, %v5524
        %v5647 = vadd.f32 %v4710, %v5529
        %v5648 = vadd.f32 %v4715, %v5534
        %v5649 = vadd.f32 %v4720, %v5539
        %v5650 = vadd.f32 %v4725, %v5544
        %v5651 = vadd.f32 %v4730, %v5549
        %v5652 = vadd.f32 %v4735, %v5554
        %v5653 = vadd.f32 %v4740, %v5559
        %v5654 = vadd.f32 %v4745, %v5564
        %v5655 = vadd.f32 %v4750, %v5569
        %v5656 = vadd.f32 %v4755, %v5574
        %v5657 = vadd.f32 %v4760, %v5579
        %v5658 = vadd.f32 %v4765, %v5584
        %v5659 = vadd.f32 %v4770, %v5589
        %v5660 = vadd.f32 %v4775, %v5594
        %v5661 = vadd.f32 %v4780, %v5599
        %v5662 = vadd.f32 %v4785, %v5604
        %v5663 = vadd.f32 %v4790, %v5609
        %v5664 = vadd.f32 %v4795, %v5614
        %v5665 = vadd.f32 %v4800, %v5619
        %v5666 = vadd.f32 %v4805, %v5624
        %v5667 = vadd.f32 %v4810, %v5629
        %v5668 = vadd.f32 %v4815, %v5634
        %v5669 = vld [vmem:[%s4] sm:$0x1]
        %v5671 = vlaneseq
        %v5672 = vshrl.u32 %v5671, 7
        %v5673 = vsub.s32 0, %v5672
        %v5674 = vrot.slane %v5669, %v5673
        %v5676 = vadd.f32 %v5637, %v5674
        %v5677 = vadd.f32 %v5638, %v5674
        %v5678 = vadd.f32 %v5639, %v5674
        %v5679 = vadd.f32 %v5640, %v5674
        %v5680 = vadd.f32 %v5641, %v5674
        %v5681 = vadd.f32 %v5642, %v5674
        %v5682 = vadd.f32 %v5643, %v5674
        %v5683 = vadd.f32 %v5644, %v5674
        %v5684 = vadd.f32 %v5645, %v5674
        %v5685 = vadd.f32 %v5646, %v5674
        %v5686 = vadd.f32 %v5647, %v5674
        %v5687 = vadd.f32 %v5648, %v5674
        %v5688 = vadd.f32 %v5649, %v5674
        %v5689 = vadd.f32 %v5650, %v5674
        %v5690 = vadd.f32 %v5651, %v5674
        %v5691 = vadd.f32 %v5652, %v5674
        %v5692 = vadd.f32 %v5653, %v5674
        %v5693 = vadd.f32 %v5654, %v5674
        %v5694 = vadd.f32 %v5655, %v5674
        %v5695 = vadd.f32 %v5656, %v5674
        %v5696 = vadd.f32 %v5657, %v5674
        %v5697 = vadd.f32 %v5658, %v5674
        %v5698 = vadd.f32 %v5659, %v5674
        %v5699 = vadd.f32 %v5660, %v5674
        %v5700 = vadd.f32 %v5661, %v5674
        %v5701 = vadd.f32 %v5662, %v5674
        %v5702 = vadd.f32 %v5663, %v5674
        %v5703 = vadd.f32 %v5664, %v5674
        %v5704 = vadd.f32 %v5665, %v5674
        %v5705 = vadd.f32 %v5666, %v5674
        %v5706 = vadd.f32 %v5667, %v5674
        %v5707 = vadd.f32 %v5668, %v5674
        %v5708 = vld [vmem:[%s358 + $0x1] sm:$0xff]
        %v5709 = vld [vmem:[%s358 + $0x9] sm:$0xff]
        %v5710 = vld [vmem:[%s358 + $0x19] sm:$0xff]
        %v5711 = vld [vmem:[%s358 + $0x21] sm:$0xff]
        %v5712 = vld [vmem:[%s358 + $0x31] sm:$0xff]
        %v5713 = vld [vmem:[%s358 + $0x39] sm:$0xff]
        %v5714 = vld [vmem:[%s358 + $0x49] sm:$0xff]
        %v5715 = vld [vmem:[%s358 + $0x51] sm:$0xff]
        %v5716 = vld [vmem:[%s358 + $0x61] sm:$0xff]
        %v5717 = vld [vmem:[%s358 + $0x69] sm:$0xff]
        %v5718 = vld [vmem:[%s358 + $0x79] sm:$0xff]
        %v5719 = vld [vmem:[%s358 + $0x81] sm:$0xff]
        %v5720 = vld [vmem:[%s358 + $0x91] sm:$0xff]
        %v5721 = vld [vmem:[%s358 + $0x99] sm:$0xff]
        %v5722 = vld [vmem:[%s358 + $0xa9] sm:$0xff]
        %v5723 = vld [vmem:[%s358 + $0xb1] sm:$0xff]
        %v5724 = vld [vmem:[%s358 + $0xc1] sm:$0xff]
        %v5725 = vld [vmem:[%s358 + $0xc9] sm:$0xff]
        %v5726 = vld [vmem:[%s358 + $0xd9] sm:$0xff]
        %v5727 = vld [vmem:[%s358 + $0xe1] sm:$0xff]
        %v5728 = vld [vmem:[%s358 + $0xf1] sm:$0xff]
        %v5729 = vld [vmem:[%s358 + $0xf9] sm:$0xff]
        %v5730 = vld [vmem:[%s358 + $0x109] sm:$0xff]
        %v5731 = vld [vmem:[%s358 + $0x111] sm:$0xff]
        %v5732 = vld [vmem:[%s358 + $0x121] sm:$0xff]
        %v5733 = vld [vmem:[%s358 + $0x129] sm:$0xff]
        %v5734 = vld [vmem:[%s358 + $0x139] sm:$0xff]
        %v5735 = vld [vmem:[%s358 + $0x141] sm:$0xff]
        %v5736 = vld [vmem:[%s358 + $0x151] sm:$0xff]
        %v5737 = vld [vmem:[%s358 + $0x159] sm:$0xff]
        %v5738 = vld [vmem:[%s358 + $0x169] sm:$0xff]
        %v5739 = vld [vmem:[%s358 + $0x171] sm:$0xff]
        %v5740 = vadd.f32 %v5708, %v5676
        %v5741 = vadd.f32 %v5709, %v5677
        %v5742 = vadd.f32 %v5710, %v5678
        %v5743 = vadd.f32 %v5711, %v5679
        %v5744 = vadd.f32 %v5712, %v5680
        %v5745 = vadd.f32 %v5713, %v5681
        %v5746 = vadd.f32 %v5714, %v5682
        %v5747 = vadd.f32 %v5715, %v5683
        %v5748 = vadd.f32 %v5716, %v5684
        %v5749 = vadd.f32 %v5717, %v5685
        %v5750 = vadd.f32 %v5718, %v5686
        %v5751 = vadd.f32 %v5719, %v5687
        %v5752 = vadd.f32 %v5720, %v5688
        %v5753 = vadd.f32 %v5721, %v5689
        %v5754 = vadd.f32 %v5722, %v5690
        %v5755 = vadd.f32 %v5723, %v5691
        %v5756 = vadd.f32 %v5724, %v5692
        %v5757 = vadd.f32 %v5725, %v5693
        %v5758 = vadd.f32 %v5726, %v5694
        %v5759 = vadd.f32 %v5727, %v5695
        %v5760 = vadd.f32 %v5728, %v5696
        %v5761 = vadd.f32 %v5729, %v5697
        %v5762 = vadd.f32 %v5730, %v5698
        %v5763 = vadd.f32 %v5731, %v5699
        %v5764 = vadd.f32 %v5732, %v5700
        %v5765 = vadd.f32 %v5733, %v5701
        %v5766 = vadd.f32 %v5734, %v5702
        %v5767 = vadd.f32 %v5735, %v5703
        %v5768 = vadd.f32 %v5736, %v5704
        %v5769 = vadd.f32 %v5737, %v5705
        %v5770 = vadd.f32 %v5738, %v5706
        %v5771 = vadd.f32 %v5739, %v5707
        %5772 = vst [vmem:[%s271] sm:$0xff] %v5740
        %5773 = vst [vmem:[%s271 + $0x8] sm:$0xff] %v5741
        %5774 = vst [vmem:[%s271 + $0x10] sm:$0xff] %v5742
        %5775 = vst [vmem:[%s271 + $0x18] sm:$0xff] %v5743
        %5776 = vst [vmem:[%s271 + $0x20] sm:$0xff] %v5744
        %5777 = vst [vmem:[%s271 + $0x28] sm:$0xff] %v5745
        %5778 = vst [vmem:[%s271 + $0x30] sm:$0xff] %v5746
        %5779 = vst [vmem:[%s271 + $0x38] sm:$0xff] %v5747
        %5780 = vst [vmem:[%s271 + $0x40] sm:$0xff] %v5748
        %5781 = vst [vmem:[%s271 + $0x48] sm:$0xff] %v5749
        %5782 = vst [vmem:[%s271 + $0x50] sm:$0xff] %v5750
        %5783 = vst [vmem:[%s271 + $0x58] sm:$0xff] %v5751
        %5784 = vst [vmem:[%s271 + $0x60] sm:$0xff] %v5752
        %5785 = vst [vmem:[%s271 + $0x68] sm:$0xff] %v5753
        %5786 = vst [vmem:[%s271 + $0x70] sm:$0xff] %v5754
        %5787 = vst [vmem:[%s271 + $0x78] sm:$0xff] %v5755
        %5788 = vst [vmem:[%s271 + $0x80] sm:$0xff] %v5756
        %5789 = vst [vmem:[%s271 + $0x88] sm:$0xff] %v5757
        %5790 = vst [vmem:[%s271 + $0x90] sm:$0xff] %v5758
        %5791 = vst [vmem:[%s271 + $0x98] sm:$0xff] %v5759
        %5792 = vst [vmem:[%s271 + $0xa0] sm:$0xff] %v5760
        %5793 = vst [vmem:[%s271 + $0xa8] sm:$0xff] %v5761
        %5794 = vst [vmem:[%s271 + $0xb0] sm:$0xff] %v5762
        %5795 = vst [vmem:[%s271 + $0xb8] sm:$0xff] %v5763
        %5796 = vst [vmem:[%s271 + $0xc0] sm:$0xff] %v5764
        %5797 = vst [vmem:[%s271 + $0xc8] sm:$0xff] %v5765
        %5798 = vst [vmem:[%s271 + $0xd0] sm:$0xff] %v5766
        %5799 = vst [vmem:[%s271 + $0xd8] sm:$0xff] %v5767
        %5800 = vst [vmem:[%s271 + $0xe0] sm:$0xff] %v5768
        %5801 = vst [vmem:[%s271 + $0xe8] sm:$0xff] %v5769
        %5802 = vst [vmem:[%s271 + $0xf0] sm:$0xff] %v5770
        %5803 = vst [vmem:[%s271 + $0xf8] sm:$0xff] %v5771
        %s5804 = sand.u32 %s141, 1
        %s5805 = scalar_lea.sflag [#allocation6], %s5804
        %s5806 = sand.u32 %s141, 1
        %s5807 = smul.addr %s5806, 256
        %s5808 = scalar_lea.vmem [#allocation10], %s5807
        // Predicated region
        $region53: #{tpu_custom_call.1} parent=39 // pred_check
          %p5809 = pneg %p151
        $region54: #{tpu_custom_call.1} parent=39 // pred_check_branch
          %5811 = sbr.rel (%p5809) target = $region56
        $region55: #{tpu_custom_call.1} parent=39 // pred_region
          %s5813 = ssub.s32 4096, 4096
          %5814 = vsyncadd %s5805, %s5813
          %s5815 = smul.addr %s23, 32
          %s5816 = smul.addr %s5815, 128
          %s5817 = scalar_lea.hbm %s5, %s5816
          %s5818 = sshll.u32 %s5808, 4
          %s5819 = int_to_ptr.vmem [resolvable:$true] %s5818
          %5824 = dma.vmem_to_hbm [thread:$0]  %s5819, 4096, %s5817, %s5805, 128, 128, 8
        $region56: #{tpu_custom_call.1} parent=39 // pred_fallthru
          _
      $region40: #{tpu_custom_call.1} parent=5 // pred_fallthru
        _
      %p5825 = scmp.le.s32.totalorder 2, %s18
      // Predicated region
      $region57: #{tpu_custom_call.1} parent=5 // pred_check
        %p5826 = pneg %p5825
      $region58: #{tpu_custom_call.1} parent=5 // pred_check_branch
        %5828 = sbr.rel (%p5826) target = $region60
      $region59: #{tpu_custom_call.1} parent=5 // pred_region
        %s5829 = ssub.s32 %s18, 2
        // Predicated region
        $region61: #{tpu_custom_call.1} parent=59 // pred_check
          %p5830 = pneg %p157
        $region62: #{tpu_custom_call.1} parent=59 // pred_check_branch
          %5832 = sbr.rel (%p5830) target = $region64
        $region63: #{tpu_custom_call.1} parent=59 // pred_region
          %s5833 = sand.u32 %s142, 1
          %s5834 = scalar_lea.sflag [#allocation6], %s5833
          %s5835 = sand.u32 %s142, 1
          %s5836 = smul.addr %s5835, 256
          %s5837 = scalar_lea.vmem [#allocation10], %s5836
          %5838 = dma.done %s5834, 4096
        $region64: #{tpu_custom_call.1} parent=59 // pred_fallthru
          _
      $region60: #{tpu_custom_call.1} parent=5 // pred_fallthru
        _
    $region6: #{tpu_custom_call.1} parent=1 // loop_footer
      %s22 = sadd.s32 1, %s18
    $region7: #{tpu_custom_call.1} parent=1 // loop_footer_branch
      %17 = sbr.rel target = $region3
    $region8: #{tpu_custom_call.1} parent=1 // loop_exit
      _
    %5839 = vsyncpa [#allocation5], 1
    %s5840 = scalar_lea.sflag [#allocation5], 1
    %5841 = vsyncpa %s5840, 1
    %5842 = vsyncpa [#allocation8], 1
    %5843 = vsyncpa [#allocation6], 1
    %s5844 = scalar_lea.sflag [#allocation6], 1
    %5845 = vsyncpa %s5844, 1

</llo_original>
